<compile_context>
chip_gen: v7x
topology: tpu7x:2x2x1
jax: 0.10.0
libtpu: 0.0.40
codegen_flags: <defaults>
</compile_context>

<pallas_src>
import functools
import math

import jax
import jax.numpy as jnp
from jax import lax
from jax.experimental import pallas as pl
from jax.experimental.pallas import tpu as pltpu


# ---------------------------------------------------------------------------
# config & shared in-kernel helpers
# ---------------------------------------------------------------------------

# Keep f32 for exact parity with the PyTorch module (and v5e's f32-only VPU/EUP).
# On v6e/v7x set to jnp.bfloat16 to feed the MXU at full rate once D/d_ff grow.
MXU_DTYPE = jnp.float32


def _layernorm(x, g, b, eps=1e-5):
    mu = jnp.mean(x, axis=-1, keepdims=True)
    xc = x - mu
    var = jnp.mean(xc * xc, axis=-1, keepdims=True)
    return xc * lax.rsqrt(var + eps) * g + b


def _mm(a, b):
    """A @ B on the MXU, f32 accumulate."""
    return jnp.dot(a.astype(MXU_DTYPE), b.astype(MXU_DTYPE),
                   preferred_element_type=jnp.float32)


def _mm_nt(a, b):
    """A @ B^T on the MXU (no explicit transpose), f32 accumulate."""
    return lax.dot_general(a.astype(MXU_DTYPE), b.astype(MXU_DTYPE),
                           (((1,), (1,)), ((), ())),
                           preferred_element_type=jnp.float32)


# ---------------------------------------------------------------------------
# Fused DecoderLayer kernel
#   stage 1: layernorm -> LSTM (hoisted input proj, serial h@Whh loop) -> residual
#   stage 2: layernorm -> Q / fused K|V proj -> multi-head src attention
#            (per-head accumulate through wo) -> residual
#   stage 3: layernorm -> Linear/ReLU/Linear -> residual
# ---------------------------------------------------------------------------

def decoder_layer_kernel(
        # inputs
        x_ref, ctx_ref, m_ref,
        g1_ref, b1_ref, wih_ref, whh_ref, blstm_ref,
        g2_ref, b2_ref, wq_ref, bq_ref, wkv_ref, bkv_ref, wo_ref, bo_ref,
        g3_ref, b3_ref, w1_ref, bf1_ref, w2_ref, bf2_ref,
        # outputs
        y_ref, hN_ref, cN_ref, cov_ref,
        # scratch
        x2_sc,
        *, n_heads, scale):
    Tq, B, D = x_ref.shape
    Ts = ctx_ref.shape[0]
    dh = D // n_heads

    # ---------------- stage 1: RNN block ---------------------------------
    x_all = x_ref[...].astype(jnp.float32)                     # (Tq, B, D)
    x_flat = x_all.reshape(Tq * B, D)                          # time-major rows
    ln1 = _layernorm(x_flat, g1_ref[...], b1_ref[...])
    # hoisted input projection: one MXU matmul for all timesteps
    gx = _mm(ln1, wih_ref[...]) + blstm_ref[...]               # (Tq*B, 4D), gates i|f|o|g
    gx = gx.reshape(Tq, B, 4 * D)

    whh = whh_ref[...]
    h = jnp.zeros((B, D), jnp.float32)
    c = jnp.zeros((B, D), jnp.float32)
    x1_rows = []
    for t in range(Tq):                                        # serial recurrence (static T)
        gates = gx[t] + _mm(h, whh)                            # (B, 4D)
        sig = jax.nn.sigmoid(gates[:, :3 * D])                 # i | f | o in one slab
        i_g = sig[:, :D]
        f_g = sig[:, D:2 * D]
        o_g = sig[:, 2 * D:]
        g_g = jnp.tanh(gates[:, 3 * D:])
        c = f_g * c + i_g * g_g
        h = o_g * jnp.tanh(c)
        x1_rows.append(x_all[t] + h)                           # residual (dropout == id)
    hN_ref[0] = h.astype(hN_ref.dtype)
    cN_ref[0] = c.astype(cN_ref.dtype)
    x1 = jnp.concatenate(x1_rows, axis=0)                      # (Tq*B, D) time-major

    # ---------------- stage 2: source attention block --------------------
    ln2 = _layernorm(x1, g2_ref[...], b2_ref[...])             # (Tq*B, D)
    q = _mm(ln2, wq_ref[...]) + bq_ref[...]                    # (Tq*B, D)
    ctx_flat = ctx_ref[...].astype(jnp.float32).reshape(Ts * B, D)
    kv = _mm(ctx_flat, wkv_ref[...]) + bkv_ref[...]            # (Ts*B, 2D)

    q3 = q.reshape(Tq, B, D)
    kv3 = kv.reshape(Ts, B, 2 * D)
    wo = wo_ref[...]
    for bb in range(B):                                        # per-batch attention core
        q_b = q3[:, bb, :]                                     # (Tq, D)
        kv_b = kv3[:, bb, :]                                   # (Ts, 2D)
        k_b = kv_b[:, :D]
        v_b = kv_b[:, D:]
        # additive pad mask, built once per batch (1 == padded source position)
        neg = jnp.where(m_ref[bb] > 0, -1e9, 0.0).astype(jnp.float32)   # (1, Ts)
        acc = jnp.zeros((Tq, D), jnp.float32)
        cov_parts = []
        for hh in range(n_heads):
            qh = q_b[:, hh * dh:(hh + 1) * dh]                 # (Tq, dh)
            kh = k_b[:, hh * dh:(hh + 1) * dh]                 # (Ts, dh)
            vh = v_b[:, hh * dh:(hh + 1) * dh]                 # (Ts, dh)
            s = _mm_nt(qh, kh) * scale + neg                   # (Tq, Ts)
            mx = jnp.max(s, axis=-1, keepdims=True)
            e = jnp.exp(s - mx)
            p = e / jnp.sum(e, axis=-1, keepdims=True)         # exact: coverage sums to 1
            cov_parts.append(p)
            ao = _mm(p, vh)                                    # (Tq, dh)
            # accumulate straight through the matching wo row-slice (no lane concat)
            acc = acc + _mm(ao, wo[hh * dh:(hh + 1) * dh, :])  # (Tq, D)
        # one packed coverage store per batch: (Tq, n_heads*Ts)
        cov_ref[bb] = jnp.concatenate(cov_parts, axis=-1).astype(cov_ref.dtype)
        x2_sc[:, bb, :] = acc
    x2 = x2_sc[...].reshape(Tq * B, D) + bo_ref[...] + x1      # out-proj bias + residual

    # ---------------- stage 3: feed-forward block -------------------------
    ln3 = _layernorm(x2, g3_ref[...], b3_ref[...])
    hid = jnp.maximum(_mm(ln3, w1_ref[...]) + bf1_ref[...], 0.0)
    ffn = _mm(hid, w2_ref[...]) + bf2_ref[...]
    y_ref[...] = (ffn + x2).reshape(Tq, B, D).astype(y_ref.dtype)


# ---------------------------------------------------------------------------
# Wrapper: single pallas_call for the whole layer
# ---------------------------------------------------------------------------

def decoder_layer_forward(fused, x, context, mask_src, n_heads):
    """x: (Tq, B, D)  context: (Ts, B, D)  mask_src: (B, 1, Ts) int32."""
    Tq, B, D = x.shape
    Ts = context.shape[0]
    scale = 1.0 / math.sqrt(D // n_heads)
    kern = functools.partial(decoder_layer_kernel, n_heads=n_heads, scale=scale)
    # Whole problem (<1 MiB) stays resident in VMEM; no grid / BlockSpec tiling
    # needed at these sizes.  (At real model sizes add a d_ff-tiled grid with
    # dimension_semantics=("parallel", "arbitrary") and a vmem_limit_bytes
    # budget — see review notes for v7x's 64 MiB VMEM.)
    y, h_n, c_n, cov_packed = pl.pallas_call(
        kern,
        out_shape=(jax.ShapeDtypeStruct((Tq, B, D), x.dtype),
                   jax.ShapeDtypeStruct((1, B, D), jnp.float32),
                   jax.ShapeDtypeStruct((1, B, D), jnp.float32),
                   jax.ShapeDtypeStruct((B, Tq, n_heads * Ts), jnp.float32)),
        scratch_shapes=[pltpu.VMEM((Tq, B, D), jnp.float32)],
    )(x, context, mask_src,
      fused["ln_rnn_g"], fused["ln_rnn_b"],
      fused["lstm_wih"], fused["lstm_whh"], fused["lstm_b"],
      fused["ln_attn_g"], fused["ln_attn_b"],
      fused["wq"], fused["bq"], fused["wkv"], fused["bkv"],
      fused["wo"], fused["bo"],
      fused["ln_ffn_g"], fused["ln_ffn_b"],
      fused["w1"], fused["b1"], fused["w2"], fused["b2"])
    coverage = cov_packed.reshape(B, Tq, n_heads, Ts).transpose(0, 2, 1, 3)
    return y, (h_n, c_n), coverage


# ---------------------------------------------------------------------------
# Parameter init (PyTorch-style gate order i,f,g,o) and one-time fusion prep
# ---------------------------------------------------------------------------

def init_params(key, d_model, d_ff):
    ks = jax.random.split(key, 16)

    def nrm(k, shape, scale=0.05):
        return (scale * jax.random.normal(k, shape)).astype(jnp.float32)

    ones = jnp.ones((1, d_model), jnp.float32)
    zeros = jnp.zeros((1, d_model), jnp.float32)
    return {
        "ln_rnn_g": ones, "ln_rnn_b": zeros,
        "ln_attn_g": ones, "ln_attn_b": zeros,
        "ln_ffn_g": ones, "ln_ffn_b": zeros,
        # LSTM (combined b_ih + b_hh), PyTorch gate order i, f, g, o
        "lstm_wih": nrm(ks[0], (d_model, 4 * d_model)),
        "lstm_whh": nrm(ks[1], (d_model, 4 * d_model)),
        "lstm_b":   nrm(ks[2], (1, 4 * d_model)),
        # multi-head attention projections
        "wq": nrm(ks[3], (d_model, d_model)), "bq": nrm(ks[4], (1, d_model)),
        "wk": nrm(ks[5], (d_model, d_model)), "bk": nrm(ks[6], (1, d_model)),
        "wv": nrm(ks[7], (d_model, d_model)), "bv": nrm(ks[8], (1, d_model)),
        "wo": nrm(ks[9], (d_model, d_model)), "bo": nrm(ks[10], (1, d_model)),
        # feed-forward
        "w1": nrm(ks[11], (d_model, d_ff)), "b1": nrm(ks[12], (1, d_ff)),
        "w2": nrm(ks[13], (d_ff, d_model)), "b2": nrm(ks[14], (1, d_model)),
    }


def prepare_params(params):
    """One-time weight fusion (do NOT call per forward step):
       - reorder LSTM gate columns i,f,g,o -> i,f,o,g (contiguous sigmoid slab)
       - concatenate K and V projections into a single (D, 2D) weight."""
    def reorder(w):
        i, f, g, o = jnp.split(w, 4, axis=-1)
        return jnp.concatenate([i, f, o, g], axis=-1)

    fused = dict(params)
    fused["lstm_wih"] = reorder(params["lstm_wih"])
    fused["lstm_whh"] = reorder(params["lstm_whh"])
    fused["lstm_b"] = reorder(params["lstm_b"])
    fused["wkv"] = jnp.concatenate([params["wk"], params["wv"]], axis=1)
    fused["bkv"] = jnp.concatenate([params["bk"], params["bv"]], axis=1)
    return fused


# ---------------------------------------------------------------------------

if __name__ == "__main__":
    H_HEADS = 4
    D_MODEL = 32
    D_FF = 64
    T_Q = 8     # decoder length
    T_S = 10    # source / context length
    B = 2       # batch

    key = jax.random.PRNGKey(0)
    k_inp, k_ctx, k_par = jax.random.split(key, 3)

    x = jax.random.normal(k_inp, (T_Q, B, D_MODEL), jnp.float32)      # Time x Batch x Hidden
    context = jax.random.normal(k_ctx, (T_S, B, D_MODEL), jnp.float32)
    # source pad mask (B, 1, T_S): 1 == padded position
    src_lens = jnp.array([T_S, 7], jnp.int32)
    mask_src = (jnp.arange(T_S)[None, None, :] >= src_lens[:, None, None]).astype(jnp.int32)

    params = init_params(k_par, D_MODEL, D_FF)
    fused = prepare_params(params)          # one-time weight fusion

    out, (h_n, c_n), coverage = decoder_layer_forward(fused, x, context,
                                                      mask_src, H_HEADS)
    jax.block_until_ready((out, h_n, c_n, coverage))

    assert out.shape == (T_Q, B, D_MODEL)
    assert h_n.shape == (1, B, D_MODEL) and c_n.shape == (1, B, D_MODEL)
    assert coverage.shape == (B, H_HEADS, T_Q, T_S)
    assert bool(jnp.all(jnp.isfinite(out)))
    # softmax rows over non-padded positions must sum to 1 (exact reciprocal)
    assert bool(jnp.allclose(coverage.sum(-1), 1.0, atol=1e-5))
    print("KERNEL_OK")
</pallas_src>

<mosaic_0001>
module attributes {stable_mosaic.version = 11 : i64} {
  func.func @decoder_layer_kernel(%arg0: memref<8x2x32xf32, #tpu.memory_space<vmem>>, %arg1: memref<10x2x32xf32, #tpu.memory_space<vmem>>, %arg2: memref<2x1x10xi32, #tpu.memory_space<vmem>>, %arg3: memref<1x32xf32, #tpu.memory_space<vmem>>, %arg4: memref<1x32xf32, #tpu.memory_space<vmem>>, %arg5: memref<32x128xf32, #tpu.memory_space<vmem>>, %arg6: memref<32x128xf32, #tpu.memory_space<vmem>>, %arg7: memref<1x128xf32, #tpu.memory_space<vmem>>, %arg8: memref<1x32xf32, #tpu.memory_space<vmem>>, %arg9: memref<1x32xf32, #tpu.memory_space<vmem>>, %arg10: memref<32x32xf32, #tpu.memory_space<vmem>>, %arg11: memref<1x32xf32, #tpu.memory_space<vmem>>, %arg12: memref<32x64xf32, #tpu.memory_space<vmem>>, %arg13: memref<1x64xf32, #tpu.memory_space<vmem>>, %arg14: memref<32x32xf32, #tpu.memory_space<vmem>>, %arg15: memref<1x32xf32, #tpu.memory_space<vmem>>, %arg16: memref<1x32xf32, #tpu.memory_space<vmem>>, %arg17: memref<1x32xf32, #tpu.memory_space<vmem>>, %arg18: memref<32x64xf32, #tpu.memory_space<vmem>>, %arg19: memref<1x64xf32, #tpu.memory_space<vmem>>, %arg20: memref<64x32xf32, #tpu.memory_space<vmem>>, %arg21: memref<1x32xf32, #tpu.memory_space<vmem>>, %arg22: memref<8x2x32xf32, #tpu.memory_space<vmem>>, %arg23: memref<1x2x32xf32, #tpu.memory_space<vmem>>, %arg24: memref<1x2x32xf32, #tpu.memory_space<vmem>>, %arg25: memref<2x8x40xf32, #tpu.memory_space<vmem>>, %arg26: memref<8x2x32xf32, #tpu.memory_space<vmem>>) attributes {dimension_semantics = [], scalar_prefetch = 0 : i64, scratch_operands = 1 : i64, tpu.core_type = #tpu.core_type<tc>} {
    %c0 = arith.constant 0 : index
    %c0_0 = arith.constant 0 : index
    %c0_1 = arith.constant 0 : index
    %0 = vector.load %arg0[%c0, %c0_0, %c0_1] : memref<8x2x32xf32, #tpu.memory_space<vmem>>, vector<8x2x32xf32>
    %1 = vector.shape_cast %0 : vector<8x2x32xf32> to vector<16x32xf32>
    %c0_2 = arith.constant 0 : index
    %c0_3 = arith.constant 0 : index
    %2 = vector.load %arg3[%c0_2, %c0_3] : memref<1x32xf32, #tpu.memory_space<vmem>>, vector<1x32xf32>
    %c0_4 = arith.constant 0 : index
    %c0_5 = arith.constant 0 : index
    %3 = vector.load %arg4[%c0_4, %c0_5] : memref<1x32xf32, #tpu.memory_space<vmem>>, vector<1x32xf32>
    %cst = arith.constant dense<0.000000e+00> : vector<16xf32>
    %4 = vector.multi_reduction <add>, %1, %cst [1] : vector<16x32xf32> to vector<16xf32>
    %5 = vector.shape_cast %4 : vector<16xf32> to vector<16x1xf32>
    %cst_6 = arith.constant 3.200000e+01 : f32
    %6 = vector.broadcast %cst_6 : f32 to vector<16x1xf32>
    %7 = arith.divf %5, %6 : vector<16x1xf32>
    %8 = vector.broadcast %7 : vector<16x1xf32> to vector<16x32xf32>
    %9 = arith.subf %1, %8 : vector<16x32xf32>
    %10 = arith.mulf %9, %9 : vector<16x32xf32>
    %cst_7 = arith.constant dense<0.000000e+00> : vector<16xf32>
    %11 = vector.multi_reduction <add>, %10, %cst_7 [1] : vector<16x32xf32> to vector<16xf32>
    %12 = vector.shape_cast %11 : vector<16xf32> to vector<16x1xf32>
    %cst_8 = arith.constant 3.200000e+01 : f32
    %13 = vector.broadcast %cst_8 : f32 to vector<16x1xf32>
    %14 = arith.divf %12, %13 : vector<16x1xf32>
    %cst_9 = arith.constant 9.99999974E-6 : f32
    %15 = vector.broadcast %cst_9 : f32 to vector<16x1xf32>
    %16 = arith.addf %14, %15 : vector<16x1xf32>
    %17 = math.rsqrt %16 : vector<16x1xf32>
    %18 = vector.broadcast %17 : vector<16x1xf32> to vector<16x32xf32>
    %19 = arith.mulf %9, %18 : vector<16x32xf32>
    %20 = vector.broadcast %2 : vector<1x32xf32> to vector<16x32xf32>
    %21 = arith.mulf %19, %20 : vector<16x32xf32>
    %22 = vector.broadcast %3 : vector<1x32xf32> to vector<16x32xf32>
    %23 = arith.addf %21, %22 : vector<16x32xf32>
    %c0_10 = arith.constant 0 : index
    %c0_11 = arith.constant 0 : index
    %24 = vector.load %arg5[%c0_10, %c0_11] : memref<32x128xf32, #tpu.memory_space<vmem>>, vector<32x128xf32>
    %cst_12 = arith.constant dense<0.000000e+00> : vector<16x128xf32>
    %25 = tpu.matmul %23, %24, %cst_12 {dimension_numbers = #tpu.dot_dimension_numbers<[1], [0], [0], [1], [0, 0, 1, 1], [], []>} : vector<16x32xf32>, vector<32x128xf32>, vector<16x128xf32> -> vector<16x128xf32>
    %c0_13 = arith.constant 0 : index
    %c0_14 = arith.constant 0 : index
    %26 = vector.load %arg7[%c0_13, %c0_14] : memref<1x128xf32, #tpu.memory_space<vmem>>, vector<1x128xf32>
    %27 = vector.broadcast %26 : vector<1x128xf32> to vector<16x128xf32>
    %28 = arith.addf %25, %27 : vector<16x128xf32>
    %29 = vector.shape_cast %28 : vector<16x128xf32> to vector<8x2x128xf32>
    %c0_15 = arith.constant 0 : index
    %c0_16 = arith.constant 0 : index
    %30 = vector.load %arg6[%c0_15, %c0_16] : memref<32x128xf32, #tpu.memory_space<vmem>>, vector<32x128xf32>
    %cst_17 = arith.constant 0.000000e+00 : f32
    %31 = vector.broadcast %cst_17 : f32 to vector<2x32xf32>
    %cst_18 = arith.constant 0.000000e+00 : f32
    %32 = vector.broadcast %cst_18 : f32 to vector<2x32xf32>
    %33 = vector.extract_strided_slice %29 {offsets = [0, 0, 0], sizes = [1, 2, 128], strides = [1, 1, 1]} : vector<8x2x128xf32> to vector<1x2x128xf32>
    %34 = vector.shape_cast %33 : vector<1x2x128xf32> to vector<2x128xf32>
    %cst_19 = arith.constant dense<0.000000e+00> : vector<2x128xf32>
    %35 = tpu.matmul %31, %30, %cst_19 {dimension_numbers = #tpu.dot_dimension_numbers<[1], [0], [0], [1], [0, 0, 1, 1], [], []>} : vector<2x32xf32>, vector<32x128xf32>, vector<2x128xf32> -> vector<2x128xf32>
    %36 = arith.addf %34, %35 : vector<2x128xf32>
    %37 = vector.extract_strided_slice %36 {offsets = [0, 0], sizes = [2, 96], strides = [1, 1]} : vector<2x128xf32> to vector<2x96xf32>
    %38 = arith.negf %37 : vector<2x96xf32>
    %39 = math.exp %38 : vector<2x96xf32>
    %cst_20 = arith.constant 1.000000e+00 : f32
    %40 = vector.broadcast %cst_20 : f32 to vector<2x96xf32>
    %41 = arith.addf %40, %39 : vector<2x96xf32>
    %42 = arith.divf %40, %41 : vector<2x96xf32>
    %43 = vector.extract_strided_slice %42 {offsets = [0, 0], sizes = [2, 32], strides = [1, 1]} : vector<2x96xf32> to vector<2x32xf32>
    %44 = vector.extract_strided_slice %42 {offsets = [0, 32], sizes = [2, 32], strides = [1, 1]} : vector<2x96xf32> to vector<2x32xf32>
    %45 = vector.extract_strided_slice %42 {offsets = [0, 64], sizes = [2, 32], strides = [1, 1]} : vector<2x96xf32> to vector<2x32xf32>
    %46 = vector.extract_strided_slice %36 {offsets = [0, 96], sizes = [2, 32], strides = [1, 1]} : vector<2x128xf32> to vector<2x32xf32>
    %47 = math.tanh %46 : vector<2x32xf32>
    %48 = arith.mulf %44, %32 : vector<2x32xf32>
    %49 = arith.mulf %43, %47 : vector<2x32xf32>
    %50 = arith.addf %48, %49 : vector<2x32xf32>
    %51 = math.tanh %50 : vector<2x32xf32>
    %52 = arith.mulf %45, %51 : vector<2x32xf32>
    %53 = vector.extract_strided_slice %0 {offsets = [0, 0, 0], sizes = [1, 2, 32], strides = [1, 1, 1]} : vector<8x2x32xf32> to vector<1x2x32xf32>
    %54 = vector.shape_cast %53 : vector<1x2x32xf32> to vector<2x32xf32>
    %55 = arith.addf %54, %52 : vector<2x32xf32>
    %56 = vector.extract_strided_slice %29 {offsets = [1, 0, 0], sizes = [1, 2, 128], strides = [1, 1, 1]} : vector<8x2x128xf32> to vector<1x2x128xf32>
    %57 = vector.shape_cast %56 : vector<1x2x128xf32> to vector<2x128xf32>
    %cst_21 = arith.constant dense<0.000000e+00> : vector<2x128xf32>
    %58 = tpu.matmul %52, %30, %cst_21 {dimension_numbers = #tpu.dot_dimension_numbers<[1], [0], [0], [1], [0, 0, 1, 1], [], []>} : vector<2x32xf32>, vector<32x128xf32>, vector<2x128xf32> -> vector<2x128xf32>
    %59 = arith.addf %57, %58 : vector<2x128xf32>
    %60 = vector.extract_strided_slice %59 {offsets = [0, 0], sizes = [2, 96], strides = [1, 1]} : vector<2x128xf32> to vector<2x96xf32>
    %61 = arith.negf %60 : vector<2x96xf32>
    %62 = math.exp %61 : vector<2x96xf32>
    %cst_22 = arith.constant 1.000000e+00 : f32
    %63 = vector.broadcast %cst_22 : f32 to vector<2x96xf32>
    %64 = arith.addf %63, %62 : vector<2x96xf32>
    %65 = arith.divf %63, %64 : vector<2x96xf32>
    %66 = vector.extract_strided_slice %65 {offsets = [0, 0], sizes = [2, 32], strides = [1, 1]} : vector<2x96xf32> to vector<2x32xf32>
    %67 = vector.extract_strided_slice %65 {offsets = [0, 32], sizes = [2, 32], strides = [1, 1]} : vector<2x96xf32> to vector<2x32xf32>
    %68 = vector.extract_strided_slice %65 {offsets = [0, 64], sizes = [2, 32], strides = [1, 1]} : vector<2x96xf32> to vector<2x32xf32>
    %69 = vector.extract_strided_slice %59 {offsets = [0, 96], sizes = [2, 32], strides = [1, 1]} : vector<2x128xf32> to vector<2x32xf32>
    %70 = math.tanh %69 : vector<2x32xf32>
    %71 = arith.mulf %67, %50 : vector<2x32xf32>
    %72 = arith.mulf %66, %70 : vector<2x32xf32>
    %73 = arith.addf %71, %72 : vector<2x32xf32>
    %74 = math.tanh %73 : vector<2x32xf32>
    %75 = arith.mulf %68, %74 : vector<2x32xf32>
    %76 = vector.extract_strided_slice %0 {offsets = [1, 0, 0], sizes = [1, 2, 32], strides = [1, 1, 1]} : vector<8x2x32xf32> to vector<1x2x32xf32>
    %77 = vector.shape_cast %76 : vector<1x2x32xf32> to vector<2x32xf32>
    %78 = arith.addf %77, %75 : vector<2x32xf32>
    %79 = vector.extract_strided_slice %29 {offsets = [2, 0, 0], sizes = [1, 2, 128], strides = [1, 1, 1]} : vector<8x2x128xf32> to vector<1x2x128xf32>
    %80 = vector.shape_cast %79 : vector<1x2x128xf32> to vector<2x128xf32>
    %cst_23 = arith.constant dense<0.000000e+00> : vector<2x128xf32>
    %81 = tpu.matmul %75, %30, %cst_23 {dimension_numbers = #tpu.dot_dimension_numbers<[1], [0], [0], [1], [0, 0, 1, 1], [], []>} : vector<2x32xf32>, vector<32x128xf32>, vector<2x128xf32> -> vector<2x128xf32>
    %82 = arith.addf %80, %81 : vector<2x128xf32>
    %83 = vector.extract_strided_slice %82 {offsets = [0, 0], sizes = [2, 96], strides = [1, 1]} : vector<2x128xf32> to vector<2x96xf32>
    %84 = arith.negf %83 : vector<2x96xf32>
    %85 = math.exp %84 : vector<2x96xf32>
    %cst_24 = arith.constant 1.000000e+00 : f32
    %86 = vector.broadcast %cst_24 : f32 to vector<2x96xf32>
    %87 = arith.addf %86, %85 : vector<2x96xf32>
    %88 = arith.divf %86, %87 : vector<2x96xf32>
    %89 = vector.extract_strided_slice %88 {offsets = [0, 0], sizes = [2, 32], strides = [1, 1]} : vector<2x96xf32> to vector<2x32xf32>
    %90 = vector.extract_strided_slice %88 {offsets = [0, 32], sizes = [2, 32], strides = [1, 1]} : vector<2x96xf32> to vector<2x32xf32>
    %91 = vector.extract_strided_slice %88 {offsets = [0, 64], sizes = [2, 32], strides = [1, 1]} : vector<2x96xf32> to vector<2x32xf32>
    %92 = vector.extract_strided_slice %82 {offsets = [0, 96], sizes = [2, 32], strides = [1, 1]} : vector<2x128xf32> to vector<2x32xf32>
    %93 = math.tanh %92 : vector<2x32xf32>
    %94 = arith.mulf %90, %73 : vector<2x32xf32>
    %95 = arith.mulf %89, %93 : vector<2x32xf32>
    %96 = arith.addf %94, %95 : vector<2x32xf32>
    %97 = math.tanh %96 : vector<2x32xf32>
    %98 = arith.mulf %91, %97 : vector<2x32xf32>
    %99 = vector.extract_strided_slice %0 {offsets = [2, 0, 0], sizes = [1, 2, 32], strides = [1, 1, 1]} : vector<8x2x32xf32> to vector<1x2x32xf32>
    %100 = vector.shape_cast %99 : vector<1x2x32xf32> to vector<2x32xf32>
    %101 = arith.addf %100, %98 : vector<2x32xf32>
    %102 = vector.extract_strided_slice %29 {offsets = [3, 0, 0], sizes = [1, 2, 128], strides = [1, 1, 1]} : vector<8x2x128xf32> to vector<1x2x128xf32>
    %103 = vector.shape_cast %102 : vector<1x2x128xf32> to vector<2x128xf32>
    %cst_25 = arith.constant dense<0.000000e+00> : vector<2x128xf32>
    %104 = tpu.matmul %98, %30, %cst_25 {dimension_numbers = #tpu.dot_dimension_numbers<[1], [0], [0], [1], [0, 0, 1, 1], [], []>} : vector<2x32xf32>, vector<32x128xf32>, vector<2x128xf32> -> vector<2x128xf32>
    %105 = arith.addf %103, %104 : vector<2x128xf32>
    %106 = vector.extract_strided_slice %105 {offsets = [0, 0], sizes = [2, 96], strides = [1, 1]} : vector<2x128xf32> to vector<2x96xf32>
    %107 = arith.negf %106 : vector<2x96xf32>
    %108 = math.exp %107 : vector<2x96xf32>
    %cst_26 = arith.constant 1.000000e+00 : f32
    %109 = vector.broadcast %cst_26 : f32 to vector<2x96xf32>
    %110 = arith.addf %109, %108 : vector<2x96xf32>
    %111 = arith.divf %109, %110 : vector<2x96xf32>
    %112 = vector.extract_strided_slice %111 {offsets = [0, 0], sizes = [2, 32], strides = [1, 1]} : vector<2x96xf32> to vector<2x32xf32>
    %113 = vector.extract_strided_slice %111 {offsets = [0, 32], sizes = [2, 32], strides = [1, 1]} : vector<2x96xf32> to vector<2x32xf32>
    %114 = vector.extract_strided_slice %111 {offsets = [0, 64], sizes = [2, 32], strides = [1, 1]} : vector<2x96xf32> to vector<2x32xf32>
    %115 = vector.extract_strided_slice %105 {offsets = [0, 96], sizes = [2, 32], strides = [1, 1]} : vector<2x128xf32> to vector<2x32xf32>
    %116 = math.tanh %115 : vector<2x32xf32>
    %117 = arith.mulf %113, %96 : vector<2x32xf32>
    %118 = arith.mulf %112, %116 : vector<2x32xf32>
    %119 = arith.addf %117, %118 : vector<2x32xf32>
    %120 = math.tanh %119 : vector<2x32xf32>
    %121 = arith.mulf %114, %120 : vector<2x32xf32>
    %122 = vector.extract_strided_slice %0 {offsets = [3, 0, 0], sizes = [1, 2, 32], strides = [1, 1, 1]} : vector<8x2x32xf32> to vector<1x2x32xf32>
    %123 = vector.shape_cast %122 : vector<1x2x32xf32> to vector<2x32xf32>
    %124 = arith.addf %123, %121 : vector<2x32xf32>
    %125 = vector.extract_strided_slice %29 {offsets = [4, 0, 0], sizes = [1, 2, 128], strides = [1, 1, 1]} : vector<8x2x128xf32> to vector<1x2x128xf32>
    %126 = vector.shape_cast %125 : vector<1x2x128xf32> to vector<2x128xf32>
    %cst_27 = arith.constant dense<0.000000e+00> : vector<2x128xf32>
    %127 = tpu.matmul %121, %30, %cst_27 {dimension_numbers = #tpu.dot_dimension_numbers<[1], [0], [0], [1], [0, 0, 1, 1], [], []>} : vector<2x32xf32>, vector<32x128xf32>, vector<2x128xf32> -> vector<2x128xf32>
    %128 = arith.addf %126, %127 : vector<2x128xf32>
    %129 = vector.extract_strided_slice %128 {offsets = [0, 0], sizes = [2, 96], strides = [1, 1]} : vector<2x128xf32> to vector<2x96xf32>
    %130 = arith.negf %129 : vector<2x96xf32>
    %131 = math.exp %130 : vector<2x96xf32>
    %cst_28 = arith.constant 1.000000e+00 : f32
    %132 = vector.broadcast %cst_28 : f32 to vector<2x96xf32>
    %133 = arith.addf %132, %131 : vector<2x96xf32>
    %134 = arith.divf %132, %133 : vector<2x96xf32>
    %135 = vector.extract_strided_slice %134 {offsets = [0, 0], sizes = [2, 32], strides = [1, 1]} : vector<2x96xf32> to vector<2x32xf32>
    %136 = vector.extract_strided_slice %134 {offsets = [0, 32], sizes = [2, 32], strides = [1, 1]} : vector<2x96xf32> to vector<2x32xf32>
    %137 = vector.extract_strided_slice %134 {offsets = [0, 64], sizes = [2, 32], strides = [1, 1]} : vector<2x96xf32> to vector<2x32xf32>
    %138 = vector.extract_strided_slice %128 {offsets = [0, 96], sizes = [2, 32], strides = [1, 1]} : vector<2x128xf32> to vector<2x32xf32>
    %139 = math.tanh %138 : vector<2x32xf32>
    %140 = arith.mulf %136, %119 : vector<2x32xf32>
    %141 = arith.mulf %135, %139 : vector<2x32xf32>
    %142 = arith.addf %140, %141 : vector<2x32xf32>
    %143 = math.tanh %142 : vector<2x32xf32>
    %144 = arith.mulf %137, %143 : vector<2x32xf32>
    %145 = vector.extract_strided_slice %0 {offsets = [4, 0, 0], sizes = [1, 2, 32], strides = [1, 1, 1]} : vector<8x2x32xf32> to vector<1x2x32xf32>
    %146 = vector.shape_cast %145 : vector<1x2x32xf32> to vector<2x32xf32>
    %147 = arith.addf %146, %144 : vector<2x32xf32>
    %148 = vector.extract_strided_slice %29 {offsets = [5, 0, 0], sizes = [1, 2, 128], strides = [1, 1, 1]} : vector<8x2x128xf32> to vector<1x2x128xf32>
    %149 = vector.shape_cast %148 : vector<1x2x128xf32> to vector<2x128xf32>
    %cst_29 = arith.constant dense<0.000000e+00> : vector<2x128xf32>
    %150 = tpu.matmul %144, %30, %cst_29 {dimension_numbers = #tpu.dot_dimension_numbers<[1], [0], [0], [1], [0, 0, 1, 1], [], []>} : vector<2x32xf32>, vector<32x128xf32>, vector<2x128xf32> -> vector<2x128xf32>
    %151 = arith.addf %149, %150 : vector<2x128xf32>
    %152 = vector.extract_strided_slice %151 {offsets = [0, 0], sizes = [2, 96], strides = [1, 1]} : vector<2x128xf32> to vector<2x96xf32>
    %153 = arith.negf %152 : vector<2x96xf32>
    %154 = math.exp %153 : vector<2x96xf32>
    %cst_30 = arith.constant 1.000000e+00 : f32
    %155 = vector.broadcast %cst_30 : f32 to vector<2x96xf32>
    %156 = arith.addf %155, %154 : vector<2x96xf32>
    %157 = arith.divf %155, %156 : vector<2x96xf32>
    %158 = vector.extract_strided_slice %157 {offsets = [0, 0], sizes = [2, 32], strides = [1, 1]} : vector<2x96xf32> to vector<2x32xf32>
    %159 = vector.extract_strided_slice %157 {offsets = [0, 32], sizes = [2, 32], strides = [1, 1]} : vector<2x96xf32> to vector<2x32xf32>
    %160 = vector.extract_strided_slice %157 {offsets = [0, 64], sizes = [2, 32], strides = [1, 1]} : vector<2x96xf32> to vector<2x32xf32>
    %161 = vector.extract_strided_slice %151 {offsets = [0, 96], sizes = [2, 32], strides = [1, 1]} : vector<2x128xf32> to vector<2x32xf32>
    %162 = math.tanh %161 : vector<2x32xf32>
    %163 = arith.mulf %159, %142 : vector<2x32xf32>
    %164 = arith.mulf %158, %162 : vector<2x32xf32>
    %165 = arith.addf %163, %164 : vector<2x32xf32>
    %166 = math.tanh %165 : vector<2x32xf32>
    %167 = arith.mulf %160, %166 : vector<2x32xf32>
    %168 = vector.extract_strided_slice %0 {offsets = [5, 0, 0], sizes = [1, 2, 32], strides = [1, 1, 1]} : vector<8x2x32xf32> to vector<1x2x32xf32>
    %169 = vector.shape_cast %168 : vector<1x2x32xf32> to vector<2x32xf32>
    %170 = arith.addf %169, %167 : vector<2x32xf32>
    %171 = vector.extract_strided_slice %29 {offsets = [6, 0, 0], sizes = [1, 2, 128], strides = [1, 1, 1]} : vector<8x2x128xf32> to vector<1x2x128xf32>
    %172 = vector.shape_cast %171 : vector<1x2x128xf32> to vector<2x128xf32>
    %cst_31 = arith.constant dense<0.000000e+00> : vector<2x128xf32>
    %173 = tpu.matmul %167, %30, %cst_31 {dimension_numbers = #tpu.dot_dimension_numbers<[1], [0], [0], [1], [0, 0, 1, 1], [], []>} : vector<2x32xf32>, vector<32x128xf32>, vector<2x128xf32> -> vector<2x128xf32>
    %174 = arith.addf %172, %173 : vector<2x128xf32>
    %175 = vector.extract_strided_slice %174 {offsets = [0, 0], sizes = [2, 96], strides = [1, 1]} : vector<2x128xf32> to vector<2x96xf32>
    %176 = arith.negf %175 : vector<2x96xf32>
    %177 = math.exp %176 : vector<2x96xf32>
    %cst_32 = arith.constant 1.000000e+00 : f32
    %178 = vector.broadcast %cst_32 : f32 to vector<2x96xf32>
    %179 = arith.addf %178, %177 : vector<2x96xf32>
    %180 = arith.divf %178, %179 : vector<2x96xf32>
    %181 = vector.extract_strided_slice %180 {offsets = [0, 0], sizes = [2, 32], strides = [1, 1]} : vector<2x96xf32> to vector<2x32xf32>
    %182 = vector.extract_strided_slice %180 {offsets = [0, 32], sizes = [2, 32], strides = [1, 1]} : vector<2x96xf32> to vector<2x32xf32>
    %183 = vector.extract_strided_slice %180 {offsets = [0, 64], sizes = [2, 32], strides = [1, 1]} : vector<2x96xf32> to vector<2x32xf32>
    %184 = vector.extract_strided_slice %174 {offsets = [0, 96], sizes = [2, 32], strides = [1, 1]} : vector<2x128xf32> to vector<2x32xf32>
    %185 = math.tanh %184 : vector<2x32xf32>
    %186 = arith.mulf %182, %165 : vector<2x32xf32>
    %187 = arith.mulf %181, %185 : vector<2x32xf32>
    %188 = arith.addf %186, %187 : vector<2x32xf32>
    %189 = math.tanh %188 : vector<2x32xf32>
    %190 = arith.mulf %183, %189 : vector<2x32xf32>
    %191 = vector.extract_strided_slice %0 {offsets = [6, 0, 0], sizes = [1, 2, 32], strides = [1, 1, 1]} : vector<8x2x32xf32> to vector<1x2x32xf32>
    %192 = vector.shape_cast %191 : vector<1x2x32xf32> to vector<2x32xf32>
    %193 = arith.addf %192, %190 : vector<2x32xf32>
    %194 = vector.extract_strided_slice %29 {offsets = [7, 0, 0], sizes = [1, 2, 128], strides = [1, 1, 1]} : vector<8x2x128xf32> to vector<1x2x128xf32>
    %195 = vector.shape_cast %194 : vector<1x2x128xf32> to vector<2x128xf32>
    %cst_33 = arith.constant dense<0.000000e+00> : vector<2x128xf32>
    %196 = tpu.matmul %190, %30, %cst_33 {dimension_numbers = #tpu.dot_dimension_numbers<[1], [0], [0], [1], [0, 0, 1, 1], [], []>} : vector<2x32xf32>, vector<32x128xf32>, vector<2x128xf32> -> vector<2x128xf32>
    %197 = arith.addf %195, %196 : vector<2x128xf32>
    %198 = vector.extract_strided_slice %197 {offsets = [0, 0], sizes = [2, 96], strides = [1, 1]} : vector<2x128xf32> to vector<2x96xf32>
    %199 = arith.negf %198 : vector<2x96xf32>
    %200 = math.exp %199 : vector<2x96xf32>
    %cst_34 = arith.constant 1.000000e+00 : f32
    %201 = vector.broadcast %cst_34 : f32 to vector<2x96xf32>
    %202 = arith.addf %201, %200 : vector<2x96xf32>
    %203 = arith.divf %201, %202 : vector<2x96xf32>
    %204 = vector.extract_strided_slice %203 {offsets = [0, 0], sizes = [2, 32], strides = [1, 1]} : vector<2x96xf32> to vector<2x32xf32>
    %205 = vector.extract_strided_slice %203 {offsets = [0, 32], sizes = [2, 32], strides = [1, 1]} : vector<2x96xf32> to vector<2x32xf32>
    %206 = vector.extract_strided_slice %203 {offsets = [0, 64], sizes = [2, 32], strides = [1, 1]} : vector<2x96xf32> to vector<2x32xf32>
    %207 = vector.extract_strided_slice %197 {offsets = [0, 96], sizes = [2, 32], strides = [1, 1]} : vector<2x128xf32> to vector<2x32xf32>
    %208 = math.tanh %207 : vector<2x32xf32>
    %209 = arith.mulf %205, %188 : vector<2x32xf32>
    %210 = arith.mulf %204, %208 : vector<2x32xf32>
    %211 = arith.addf %209, %210 : vector<2x32xf32>
    %212 = math.tanh %211 : vector<2x32xf32>
    %213 = arith.mulf %206, %212 : vector<2x32xf32>
    %214 = vector.extract_strided_slice %0 {offsets = [7, 0, 0], sizes = [1, 2, 32], strides = [1, 1, 1]} : vector<8x2x32xf32> to vector<1x2x32xf32>
    %215 = vector.shape_cast %214 : vector<1x2x32xf32> to vector<2x32xf32>
    %216 = arith.addf %215, %213 : vector<2x32xf32>
    %c0_35 = arith.constant 0 : index
    %c0_36 = arith.constant 0 : index
    %c0_37 = arith.constant 0 : index
    %217 = vector.load %arg23[%c0_35, %c0_36, %c0_37] : memref<1x2x32xf32, #tpu.memory_space<vmem>>, vector<1x2x32xf32>
    %218 = vector.shape_cast %217 : vector<1x2x32xf32> to vector<2x32xf32>
    %219 = vector.shape_cast %213 : vector<2x32xf32> to vector<1x2x32xf32>
    tpu.vector_store %arg23[%c0_35, %c0_36, %c0_37], %219 {strides = array<i32>} : memref<1x2x32xf32, #tpu.memory_space<vmem>>, vector<1x2x32xf32>,
    %c0_38 = arith.constant 0 : index
    %c0_39 = arith.constant 0 : index
    %c0_40 = arith.constant 0 : index
    %220 = vector.load %arg24[%c0_38, %c0_39, %c0_40] : memref<1x2x32xf32, #tpu.memory_space<vmem>>, vector<1x2x32xf32>
    %221 = vector.shape_cast %220 : vector<1x2x32xf32> to vector<2x32xf32>
    %222 = vector.shape_cast %211 : vector<2x32xf32> to vector<1x2x32xf32>
    tpu.vector_store %arg24[%c0_38, %c0_39, %c0_40], %222 {strides = array<i32>} : memref<1x2x32xf32, #tpu.memory_space<vmem>>, vector<1x2x32xf32>,
    %223 = tpu.concatenate %55, %78, %101, %124, %147, %170, %193, %216 in 0 : vector<2x32xf32>, vector<2x32xf32>, vector<2x32xf32>, vector<2x32xf32>, vector<2x32xf32>, vector<2x32xf32>, vector<2x32xf32>, vector<2x32xf32> -> vector<16x32xf32>
    %c0_41 = arith.constant 0 : index
    %c0_42 = arith.constant 0 : index
    %224 = vector.load %arg8[%c0_41, %c0_42] : memref<1x32xf32, #tpu.memory_space<vmem>>, vector<1x32xf32>
    %c0_43 = arith.constant 0 : index
    %c0_44 = arith.constant 0 : index
    %225 = vector.load %arg9[%c0_43, %c0_44] : memref<1x32xf32, #tpu.memory_space<vmem>>, vector<1x32xf32>
    %cst_45 = arith.constant dense<0.000000e+00> : vector<16xf32>
    %226 = vector.multi_reduction <add>, %223, %cst_45 [1] : vector<16x32xf32> to vector<16xf32>
    %227 = vector.shape_cast %226 : vector<16xf32> to vector<16x1xf32>
    %cst_46 = arith.constant 3.200000e+01 : f32
    %228 = vector.broadcast %cst_46 : f32 to vector<16x1xf32>
    %229 = arith.divf %227, %228 : vector<16x1xf32>
    %230 = vector.broadcast %229 : vector<16x1xf32> to vector<16x32xf32>
    %231 = arith.subf %223, %230 : vector<16x32xf32>
    %232 = arith.mulf %231, %231 : vector<16x32xf32>
    %cst_47 = arith.constant dense<0.000000e+00> : vector<16xf32>
    %233 = vector.multi_reduction <add>, %232, %cst_47 [1] : vector<16x32xf32> to vector<16xf32>
    %234 = vector.shape_cast %233 : vector<16xf32> to vector<16x1xf32>
    %cst_48 = arith.constant 3.200000e+01 : f32
    %235 = vector.broadcast %cst_48 : f32 to vector<16x1xf32>
    %236 = arith.divf %234, %235 : vector<16x1xf32>
    %cst_49 = arith.constant 9.99999974E-6 : f32
    %237 = vector.broadcast %cst_49 : f32 to vector<16x1xf32>
    %238 = arith.addf %236, %237 : vector<16x1xf32>
    %239 = math.rsqrt %238 : vector<16x1xf32>
    %240 = vector.broadcast %239 : vector<16x1xf32> to vector<16x32xf32>
    %241 = arith.mulf %231, %240 : vector<16x32xf32>
    %242 = vector.broadcast %224 : vector<1x32xf32> to vector<16x32xf32>
    %243 = arith.mulf %241, %242 : vector<16x32xf32>
    %244 = vector.broadcast %225 : vector<1x32xf32> to vector<16x32xf32>
    %245 = arith.addf %243, %244 : vector<16x32xf32>
    %c0_50 = arith.constant 0 : index
    %c0_51 = arith.constant 0 : index
    %246 = vector.load %arg10[%c0_50, %c0_51] : memref<32x32xf32, #tpu.memory_space<vmem>>, vector<32x32xf32>
    %cst_52 = arith.constant dense<0.000000e+00> : vector<16x32xf32>
    %247 = tpu.matmul %245, %246, %cst_52 {dimension_numbers = #tpu.dot_dimension_numbers<[1], [0], [0], [1], [0, 0, 1, 1], [], []>} : vector<16x32xf32>, vector<32x32xf32>, vector<16x32xf32> -> vector<16x32xf32>
    %c0_53 = arith.constant 0 : index
    %c0_54 = arith.constant 0 : index
    %248 = vector.load %arg11[%c0_53, %c0_54] : memref<1x32xf32, #tpu.memory_space<vmem>>, vector<1x32xf32>
    %249 = vector.broadcast %248 : vector<1x32xf32> to vector<16x32xf32>
    %250 = arith.addf %247, %249 : vector<16x32xf32>
    %c0_55 = arith.constant 0 : index
    %c0_56 = arith.constant 0 : index
    %c0_57 = arith.constant 0 : index
    %251 = vector.load %arg1[%c0_55, %c0_56, %c0_57] : memref<10x2x32xf32, #tpu.memory_space<vmem>>, vector<10x2x32xf32>
    %252 = vector.shape_cast %251 : vector<10x2x32xf32> to vector<20x32xf32>
    %c0_58 = arith.constant 0 : index
    %c0_59 = arith.constant 0 : index
    %253 = vector.load %arg12[%c0_58, %c0_59] : memref<32x64xf32, #tpu.memory_space<vmem>>, vector<32x64xf32>
    %cst_60 = arith.constant dense<0.000000e+00> : vector<20x64xf32>
    %254 = tpu.matmul %252, %253, %cst_60 {dimension_numbers = #tpu.dot_dimension_numbers<[1], [0], [0], [1], [0, 0, 1, 1], [], []>} : vector<20x32xf32>, vector<32x64xf32>, vector<20x64xf32> -> vector<20x64xf32>
    %c0_61 = arith.constant 0 : index
    %c0_62 = arith.constant 0 : index
    %255 = vector.load %arg13[%c0_61, %c0_62] : memref<1x64xf32, #tpu.memory_space<vmem>>, vector<1x64xf32>
    %256 = vector.broadcast %255 : vector<1x64xf32> to vector<20x64xf32>
    %257 = arith.addf %254, %256 : vector<20x64xf32>
    %258 = vector.shape_cast %250 : vector<16x32xf32> to vector<8x2x32xf32>
    %259 = vector.shape_cast %257 : vector<20x64xf32> to vector<10x2x64xf32>
    %c0_63 = arith.constant 0 : index
    %c0_64 = arith.constant 0 : index
    %260 = vector.load %arg14[%c0_63, %c0_64] : memref<32x32xf32, #tpu.memory_space<vmem>>, vector<32x32xf32>
    %261 = vector.extract_strided_slice %258 {offsets = [0, 0, 0], sizes = [8, 1, 32], strides = [1, 1, 1]} : vector<8x2x32xf32> to vector<8x1x32xf32>
    %262 = vector.shape_cast %261 : vector<8x1x32xf32> to vector<8x32xf32>
    %263 = vector.extract_strided_slice %259 {offsets = [0, 0, 0], sizes = [10, 1, 64], strides = [1, 1, 1]} : vector<10x2x64xf32> to vector<10x1x64xf32>
    %264 = vector.shape_cast %263 : vector<10x1x64xf32> to vector<10x64xf32>
    %265 = vector.extract_strided_slice %264 {offsets = [0, 0], sizes = [10, 32], strides = [1, 1]} : vector<10x64xf32> to vector<10x32xf32>
    %266 = vector.extract_strided_slice %264 {offsets = [0, 32], sizes = [10, 32], strides = [1, 1]} : vector<10x64xf32> to vector<10x32xf32>
    %c0_65 = arith.constant 0 : index
    %c0_66 = arith.constant 0 : index
    %c0_67 = arith.constant 0 : index
    %267 = vector.load %arg2[%c0_65, %c0_66, %c0_67] : memref<2x1x10xi32, #tpu.memory_space<vmem>>, vector<1x1x10xi32>
    %268 = vector.shape_cast %267 : vector<1x1x10xi32> to vector<1x10xi32>
    %c0_i32 = arith.constant 0 : i32
    %269 = vector.broadcast %c0_i32 : i32 to vector<1x10xi32>
    %270 = arith.cmpi sgt, %268, %269 : vector<1x10xi32>
    %cst_68 = arith.constant -1.000000e+09 : f32
    %cst_69 = arith.constant 0.000000e+00 : f32
    %271 = vector.broadcast %cst_68 : f32 to vector<1x10xf32>
    %272 = vector.broadcast %cst_69 : f32 to vector<1x10xf32>
    %273 = arith.select %270, %271, %272 : vector<1x10xi1>, vector<1x10xf32>
    %cst_70 = arith.constant 0.000000e+00 : f32
    %274 = vector.broadcast %cst_70 : f32 to vector<8x32xf32>
    %275 = vector.extract_strided_slice %262 {offsets = [0, 0], sizes = [8, 8], strides = [1, 1]} : vector<8x32xf32> to vector<8x8xf32>
    %276 = vector.extract_strided_slice %265 {offsets = [0, 0], sizes = [10, 8], strides = [1, 1]} : vector<10x32xf32> to vector<10x8xf32>
    %277 = vector.extract_strided_slice %266 {offsets = [0, 0], sizes = [10, 8], strides = [1, 1]} : vector<10x32xf32> to vector<10x8xf32>
    %cst_71 = arith.constant dense<0.000000e+00> : vector<8x10xf32>
    %278 = tpu.matmul %275, %276, %cst_71 {dimension_numbers = #tpu.dot_dimension_numbers<[1], [1], [0], [0], [0, 0, 1, 0], [], []>} : vector<8x8xf32>, vector<10x8xf32>, vector<8x10xf32> -> vector<8x10xf32>
    %cst_72 = arith.constant 0.353553385 : f32
    %279 = vector.broadcast %cst_72 : f32 to vector<8x10xf32>
    %280 = arith.mulf %278, %279 : vector<8x10xf32>
    %281 = vector.broadcast %273 : vector<1x10xf32> to vector<8x10xf32>
    %282 = arith.addf %280, %281 : vector<8x10xf32>
    %cst_73 = arith.constant dense<0xFF800000> : vector<8xf32>
    %283 = vector.multi_reduction <maximumf>, %282, %cst_73 [1] : vector<8x10xf32> to vector<8xf32>
    %284 = vector.shape_cast %283 : vector<8xf32> to vector<8x1xf32>
    %285 = vector.broadcast %284 : vector<8x1xf32> to vector<8x10xf32>
    %286 = arith.subf %282, %285 : vector<8x10xf32>
    %287 = math.exp %286 : vector<8x10xf32>
    %cst_74 = arith.constant dense<0.000000e+00> : vector<8xf32>
    %288 = vector.multi_reduction <add>, %287, %cst_74 [1] : vector<8x10xf32> to vector<8xf32>
    %289 = vector.shape_cast %288 : vector<8xf32> to vector<8x1xf32>
    %290 = vector.broadcast %289 : vector<8x1xf32> to vector<8x10xf32>
    %291 = arith.divf %287, %290 : vector<8x10xf32>
    %cst_75 = arith.constant dense<0.000000e+00> : vector<8x8xf32>
    %292 = tpu.matmul %291, %277, %cst_75 {dimension_numbers = #tpu.dot_dimension_numbers<[1], [0], [0], [1], [0, 0, 1, 1], [], []>} : vector<8x10xf32>, vector<10x8xf32>, vector<8x8xf32> -> vector<8x8xf32>
    %293 = vector.extract_strided_slice %260 {offsets = [0, 0], sizes = [8, 32], strides = [1, 1]} : vector<32x32xf32> to vector<8x32xf32>
    %cst_76 = arith.constant dense<0.000000e+00> : vector<8x32xf32>
    %294 = tpu.matmul %292, %293, %cst_76 {dimension_numbers = #tpu.dot_dimension_numbers<[1], [0], [0], [1], [0, 0, 1, 1], [], []>} : vector<8x8xf32>, vector<8x32xf32>, vector<8x32xf32> -> vector<8x32xf32>
    %295 = arith.addf %274, %294 : vector<8x32xf32>
    %296 = vector.extract_strided_slice %262 {offsets = [0, 8], sizes = [8, 8], strides = [1, 1]} : vector<8x32xf32> to vector<8x8xf32>
    %297 = vector.extract_strided_slice %265 {offsets = [0, 8], sizes = [10, 8], strides = [1, 1]} : vector<10x32xf32> to vector<10x8xf32>
    %298 = vector.extract_strided_slice %266 {offsets = [0, 8], sizes = [10, 8], strides = [1, 1]} : vector<10x32xf32> to vector<10x8xf32>
    %cst_77 = arith.constant dense<0.000000e+00> : vector<8x10xf32>
    %299 = tpu.matmul %296, %297, %cst_77 {dimension_numbers = #tpu.dot_dimension_numbers<[1], [1], [0], [0], [0, 0, 1, 0], [], []>} : vector<8x8xf32>, vector<10x8xf32>, vector<8x10xf32> -> vector<8x10xf32>
    %cst_78 = arith.constant 0.353553385 : f32
    %300 = vector.broadcast %cst_78 : f32 to vector<8x10xf32>
    %301 = arith.mulf %299, %300 : vector<8x10xf32>
    %302 = vector.broadcast %273 : vector<1x10xf32> to vector<8x10xf32>
    %303 = arith.addf %301, %302 : vector<8x10xf32>
    %cst_79 = arith.constant dense<0xFF800000> : vector<8xf32>
    %304 = vector.multi_reduction <maximumf>, %303, %cst_79 [1] : vector<8x10xf32> to vector<8xf32>
    %305 = vector.shape_cast %304 : vector<8xf32> to vector<8x1xf32>
    %306 = vector.broadcast %305 : vector<8x1xf32> to vector<8x10xf32>
    %307 = arith.subf %303, %306 : vector<8x10xf32>
    %308 = math.exp %307 : vector<8x10xf32>
    %cst_80 = arith.constant dense<0.000000e+00> : vector<8xf32>
    %309 = vector.multi_reduction <add>, %308, %cst_80 [1] : vector<8x10xf32> to vector<8xf32>
    %310 = vector.shape_cast %309 : vector<8xf32> to vector<8x1xf32>
    %311 = vector.broadcast %310 : vector<8x1xf32> to vector<8x10xf32>
    %312 = arith.divf %308, %311 : vector<8x10xf32>
    %cst_81 = arith.constant dense<0.000000e+00> : vector<8x8xf32>
    %313 = tpu.matmul %312, %298, %cst_81 {dimension_numbers = #tpu.dot_dimension_numbers<[1], [0], [0], [1], [0, 0, 1, 1], [], []>} : vector<8x10xf32>, vector<10x8xf32>, vector<8x8xf32> -> vector<8x8xf32>
    %314 = vector.extract_strided_slice %260 {offsets = [8, 0], sizes = [8, 32], strides = [1, 1]} : vector<32x32xf32> to vector<8x32xf32>
    %cst_82 = arith.constant dense<0.000000e+00> : vector<8x32xf32>
    %315 = tpu.matmul %313, %314, %cst_82 {dimension_numbers = #tpu.dot_dimension_numbers<[1], [0], [0], [1], [0, 0, 1, 1], [], []>} : vector<8x8xf32>, vector<8x32xf32>, vector<8x32xf32> -> vector<8x32xf32>
    %316 = arith.addf %295, %315 : vector<8x32xf32>
    %317 = vector.extract_strided_slice %262 {offsets = [0, 16], sizes = [8, 8], strides = [1, 1]} : vector<8x32xf32> to vector<8x8xf32>
    %318 = vector.extract_strided_slice %265 {offsets = [0, 16], sizes = [10, 8], strides = [1, 1]} : vector<10x32xf32> to vector<10x8xf32>
    %319 = vector.extract_strided_slice %266 {offsets = [0, 16], sizes = [10, 8], strides = [1, 1]} : vector<10x32xf32> to vector<10x8xf32>
    %cst_83 = arith.constant dense<0.000000e+00> : vector<8x10xf32>
    %320 = tpu.matmul %317, %318, %cst_83 {dimension_numbers = #tpu.dot_dimension_numbers<[1], [1], [0], [0], [0, 0, 1, 0], [], []>} : vector<8x8xf32>, vector<10x8xf32>, vector<8x10xf32> -> vector<8x10xf32>
    %cst_84 = arith.constant 0.353553385 : f32
    %321 = vector.broadcast %cst_84 : f32 to vector<8x10xf32>
    %322 = arith.mulf %320, %321 : vector<8x10xf32>
    %323 = vector.broadcast %273 : vector<1x10xf32> to vector<8x10xf32>
    %324 = arith.addf %322, %323 : vector<8x10xf32>
    %cst_85 = arith.constant dense<0xFF800000> : vector<8xf32>
    %325 = vector.multi_reduction <maximumf>, %324, %cst_85 [1] : vector<8x10xf32> to vector<8xf32>
    %326 = vector.shape_cast %325 : vector<8xf32> to vector<8x1xf32>
    %327 = vector.broadcast %326 : vector<8x1xf32> to vector<8x10xf32>
    %328 = arith.subf %324, %327 : vector<8x10xf32>
    %329 = math.exp %328 : vector<8x10xf32>
    %cst_86 = arith.constant dense<0.000000e+00> : vector<8xf32>
    %330 = vector.multi_reduction <add>, %329, %cst_86 [1] : vector<8x10xf32> to vector<8xf32>
    %331 = vector.shape_cast %330 : vector<8xf32> to vector<8x1xf32>
    %332 = vector.broadcast %331 : vector<8x1xf32> to vector<8x10xf32>
    %333 = arith.divf %329, %332 : vector<8x10xf32>
    %cst_87 = arith.constant dense<0.000000e+00> : vector<8x8xf32>
    %334 = tpu.matmul %333, %319, %cst_87 {dimension_numbers = #tpu.dot_dimension_numbers<[1], [0], [0], [1], [0, 0, 1, 1], [], []>} : vector<8x10xf32>, vector<10x8xf32>, vector<8x8xf32> -> vector<8x8xf32>
    %335 = vector.extract_strided_slice %260 {offsets = [16, 0], sizes = [8, 32], strides = [1, 1]} : vector<32x32xf32> to vector<8x32xf32>
    %cst_88 = arith.constant dense<0.000000e+00> : vector<8x32xf32>
    %336 = tpu.matmul %334, %335, %cst_88 {dimension_numbers = #tpu.dot_dimension_numbers<[1], [0], [0], [1], [0, 0, 1, 1], [], []>} : vector<8x8xf32>, vector<8x32xf32>, vector<8x32xf32> -> vector<8x32xf32>
    %337 = arith.addf %316, %336 : vector<8x32xf32>
    %338 = vector.extract_strided_slice %262 {offsets = [0, 24], sizes = [8, 8], strides = [1, 1]} : vector<8x32xf32> to vector<8x8xf32>
    %339 = vector.extract_strided_slice %265 {offsets = [0, 24], sizes = [10, 8], strides = [1, 1]} : vector<10x32xf32> to vector<10x8xf32>
    %340 = vector.extract_strided_slice %266 {offsets = [0, 24], sizes = [10, 8], strides = [1, 1]} : vector<10x32xf32> to vector<10x8xf32>
    %cst_89 = arith.constant dense<0.000000e+00> : vector<8x10xf32>
    %341 = tpu.matmul %338, %339, %cst_89 {dimension_numbers = #tpu.dot_dimension_numbers<[1], [1], [0], [0], [0, 0, 1, 0], [], []>} : vector<8x8xf32>, vector<10x8xf32>, vector<8x10xf32> -> vector<8x10xf32>
    %cst_90 = arith.constant 0.353553385 : f32
    %342 = vector.broadcast %cst_90 : f32 to vector<8x10xf32>
    %343 = arith.mulf %341, %342 : vector<8x10xf32>
    %344 = vector.broadcast %273 : vector<1x10xf32> to vector<8x10xf32>
    %345 = arith.addf %343, %344 : vector<8x10xf32>
    %cst_91 = arith.constant dense<0xFF800000> : vector<8xf32>
    %346 = vector.multi_reduction <maximumf>, %345, %cst_91 [1] : vector<8x10xf32> to vector<8xf32>
    %347 = vector.shape_cast %346 : vector<8xf32> to vector<8x1xf32>
    %348 = vector.broadcast %347 : vector<8x1xf32> to vector<8x10xf32>
    %349 = arith.subf %345, %348 : vector<8x10xf32>
    %350 = math.exp %349 : vector<8x10xf32>
    %cst_92 = arith.constant dense<0.000000e+00> : vector<8xf32>
    %351 = vector.multi_reduction <add>, %350, %cst_92 [1] : vector<8x10xf32> to vector<8xf32>
    %352 = vector.shape_cast %351 : vector<8xf32> to vector<8x1xf32>
    %353 = vector.broadcast %352 : vector<8x1xf32> to vector<8x10xf32>
    %354 = arith.divf %350, %353 : vector<8x10xf32>
    %cst_93 = arith.constant dense<0.000000e+00> : vector<8x8xf32>
    %355 = tpu.matmul %354, %340, %cst_93 {dimension_numbers = #tpu.dot_dimension_numbers<[1], [0], [0], [1], [0, 0, 1, 1], [], []>} : vector<8x10xf32>, vector<10x8xf32>, vector<8x8xf32> -> vector<8x8xf32>
    %356 = vector.extract_strided_slice %260 {offsets = [24, 0], sizes = [8, 32], strides = [1, 1]} : vector<32x32xf32> to vector<8x32xf32>
    %cst_94 = arith.constant dense<0.000000e+00> : vector<8x32xf32>
    %357 = tpu.matmul %355, %356, %cst_94 {dimension_numbers = #tpu.dot_dimension_numbers<[1], [0], [0], [1], [0, 0, 1, 1], [], []>} : vector<8x8xf32>, vector<8x32xf32>, vector<8x32xf32> -> vector<8x32xf32>
    %358 = arith.addf %337, %357 : vector<8x32xf32>
    %359 = tpu.concatenate %291, %312, %333, %354 in 1 : vector<8x10xf32>, vector<8x10xf32>, vector<8x10xf32>, vector<8x10xf32> -> vector<8x40xf32>
    %c0_95 = arith.constant 0 : index
    %c0_96 = arith.constant 0 : index
    %c0_97 = arith.constant 0 : index
    %360 = vector.load %arg25[%c0_95, %c0_96, %c0_97] : memref<2x8x40xf32, #tpu.memory_space<vmem>>, vector<1x8x40xf32>
    %361 = vector.shape_cast %360 : vector<1x8x40xf32> to vector<8x40xf32>
    %362 = vector.shape_cast %359 : vector<8x40xf32> to vector<1x8x40xf32>
    tpu.vector_store %arg25[%c0_95, %c0_96, %c0_97], %362 {strides = array<i32>} : memref<2x8x40xf32, #tpu.memory_space<vmem>>, vector<1x8x40xf32>,
    %c0_98 = arith.constant 0 : index
    %c0_99 = arith.constant 0 : index
    %c0_100 = arith.constant 0 : index
    %363 = vector.load %arg26[%c0_98, %c0_99, %c0_100] : memref<8x2x32xf32, #tpu.memory_space<vmem>>, vector<8x1x32xf32>
    %364 = vector.shape_cast %363 : vector<8x1x32xf32> to vector<8x32xf32>
    %365 = vector.shape_cast %358 : vector<8x32xf32> to vector<8x1x32xf32>
    tpu.vector_store %arg26[%c0_98, %c0_99, %c0_100], %365 {strides = array<i32>} : memref<8x2x32xf32, #tpu.memory_space<vmem>>, vector<8x1x32xf32>,
    %366 = vector.extract_strided_slice %258 {offsets = [0, 1, 0], sizes = [8, 1, 32], strides = [1, 1, 1]} : vector<8x2x32xf32> to vector<8x1x32xf32>
    %367 = vector.shape_cast %366 : vector<8x1x32xf32> to vector<8x32xf32>
    %368 = vector.extract_strided_slice %259 {offsets = [0, 1, 0], sizes = [10, 1, 64], strides = [1, 1, 1]} : vector<10x2x64xf32> to vector<10x1x64xf32>
    %369 = vector.shape_cast %368 : vector<10x1x64xf32> to vector<10x64xf32>
    %370 = vector.extract_strided_slice %369 {offsets = [0, 0], sizes = [10, 32], strides = [1, 1]} : vector<10x64xf32> to vector<10x32xf32>
    %371 = vector.extract_strided_slice %369 {offsets = [0, 32], sizes = [10, 32], strides = [1, 1]} : vector<10x64xf32> to vector<10x32xf32>
    %c1 = arith.constant 1 : index
    %c0_101 = arith.constant 0 : index
    %c0_102 = arith.constant 0 : index
    %372 = vector.load %arg2[%c1, %c0_101, %c0_102] : memref<2x1x10xi32, #tpu.memory_space<vmem>>, vector<1x1x10xi32>
    %373 = vector.shape_cast %372 : vector<1x1x10xi32> to vector<1x10xi32>
    %c0_i32_103 = arith.constant 0 : i32
    %374 = vector.broadcast %c0_i32_103 : i32 to vector<1x10xi32>
    %375 = arith.cmpi sgt, %373, %374 : vector<1x10xi32>
    %cst_104 = arith.constant -1.000000e+09 : f32
    %cst_105 = arith.constant 0.000000e+00 : f32
    %376 = vector.broadcast %cst_104 : f32 to vector<1x10xf32>
    %377 = vector.broadcast %cst_105 : f32 to vector<1x10xf32>
    %378 = arith.select %375, %376, %377 : vector<1x10xi1>, vector<1x10xf32>
    %cst_106 = arith.constant 0.000000e+00 : f32
    %379 = vector.broadcast %cst_106 : f32 to vector<8x32xf32>
    %380 = vector.extract_strided_slice %367 {offsets = [0, 0], sizes = [8, 8], strides = [1, 1]} : vector<8x32xf32> to vector<8x8xf32>
    %381 = vector.extract_strided_slice %370 {offsets = [0, 0], sizes = [10, 8], strides = [1, 1]} : vector<10x32xf32> to vector<10x8xf32>
    %382 = vector.extract_strided_slice %371 {offsets = [0, 0], sizes = [10, 8], strides = [1, 1]} : vector<10x32xf32> to vector<10x8xf32>
    %cst_107 = arith.constant dense<0.000000e+00> : vector<8x10xf32>
    %383 = tpu.matmul %380, %381, %cst_107 {dimension_numbers = #tpu.dot_dimension_numbers<[1], [1], [0], [0], [0, 0, 1, 0], [], []>} : vector<8x8xf32>, vector<10x8xf32>, vector<8x10xf32> -> vector<8x10xf32>
    %cst_108 = arith.constant 0.353553385 : f32
    %384 = vector.broadcast %cst_108 : f32 to vector<8x10xf32>
    %385 = arith.mulf %383, %384 : vector<8x10xf32>
    %386 = vector.broadcast %378 : vector<1x10xf32> to vector<8x10xf32>
    %387 = arith.addf %385, %386 : vector<8x10xf32>
    %cst_109 = arith.constant dense<0xFF800000> : vector<8xf32>
    %388 = vector.multi_reduction <maximumf>, %387, %cst_109 [1] : vector<8x10xf32> to vector<8xf32>
    %389 = vector.shape_cast %388 : vector<8xf32> to vector<8x1xf32>
    %390 = vector.broadcast %389 : vector<8x1xf32> to vector<8x10xf32>
    %391 = arith.subf %387, %390 : vector<8x10xf32>
    %392 = math.exp %391 : vector<8x10xf32>
    %cst_110 = arith.constant dense<0.000000e+00> : vector<8xf32>
    %393 = vector.multi_reduction <add>, %392, %cst_110 [1] : vector<8x10xf32> to vector<8xf32>
    %394 = vector.shape_cast %393 : vector<8xf32> to vector<8x1xf32>
    %395 = vector.broadcast %394 : vector<8x1xf32> to vector<8x10xf32>
    %396 = arith.divf %392, %395 : vector<8x10xf32>
    %cst_111 = arith.constant dense<0.000000e+00> : vector<8x8xf32>
    %397 = tpu.matmul %396, %382, %cst_111 {dimension_numbers = #tpu.dot_dimension_numbers<[1], [0], [0], [1], [0, 0, 1, 1], [], []>} : vector<8x10xf32>, vector<10x8xf32>, vector<8x8xf32> -> vector<8x8xf32>
    %398 = vector.extract_strided_slice %260 {offsets = [0, 0], sizes = [8, 32], strides = [1, 1]} : vector<32x32xf32> to vector<8x32xf32>
    %cst_112 = arith.constant dense<0.000000e+00> : vector<8x32xf32>
    %399 = tpu.matmul %397, %398, %cst_112 {dimension_numbers = #tpu.dot_dimension_numbers<[1], [0], [0], [1], [0, 0, 1, 1], [], []>} : vector<8x8xf32>, vector<8x32xf32>, vector<8x32xf32> -> vector<8x32xf32>
    %400 = arith.addf %379, %399 : vector<8x32xf32>
    %401 = vector.extract_strided_slice %367 {offsets = [0, 8], sizes = [8, 8], strides = [1, 1]} : vector<8x32xf32> to vector<8x8xf32>
    %402 = vector.extract_strided_slice %370 {offsets = [0, 8], sizes = [10, 8], strides = [1, 1]} : vector<10x32xf32> to vector<10x8xf32>
    %403 = vector.extract_strided_slice %371 {offsets = [0, 8], sizes = [10, 8], strides = [1, 1]} : vector<10x32xf32> to vector<10x8xf32>
    %cst_113 = arith.constant dense<0.000000e+00> : vector<8x10xf32>
    %404 = tpu.matmul %401, %402, %cst_113 {dimension_numbers = #tpu.dot_dimension_numbers<[1], [1], [0], [0], [0, 0, 1, 0], [], []>} : vector<8x8xf32>, vector<10x8xf32>, vector<8x10xf32> -> vector<8x10xf32>
    %cst_114 = arith.constant 0.353553385 : f32
    %405 = vector.broadcast %cst_114 : f32 to vector<8x10xf32>
    %406 = arith.mulf %404, %405 : vector<8x10xf32>
    %407 = vector.broadcast %378 : vector<1x10xf32> to vector<8x10xf32>
    %408 = arith.addf %406, %407 : vector<8x10xf32>
    %cst_115 = arith.constant dense<0xFF800000> : vector<8xf32>
    %409 = vector.multi_reduction <maximumf>, %408, %cst_115 [1] : vector<8x10xf32> to vector<8xf32>
    %410 = vector.shape_cast %409 : vector<8xf32> to vector<8x1xf32>
    %411 = vector.broadcast %410 : vector<8x1xf32> to vector<8x10xf32>
    %412 = arith.subf %408, %411 : vector<8x10xf32>
    %413 = math.exp %412 : vector<8x10xf32>
    %cst_116 = arith.constant dense<0.000000e+00> : vector<8xf32>
    %414 = vector.multi_reduction <add>, %413, %cst_116 [1] : vector<8x10xf32> to vector<8xf32>
    %415 = vector.shape_cast %414 : vector<8xf32> to vector<8x1xf32>
    %416 = vector.broadcast %415 : vector<8x1xf32> to vector<8x10xf32>
    %417 = arith.divf %413, %416 : vector<8x10xf32>
    %cst_117 = arith.constant dense<0.000000e+00> : vector<8x8xf32>
    %418 = tpu.matmul %417, %403, %cst_117 {dimension_numbers = #tpu.dot_dimension_numbers<[1], [0], [0], [1], [0, 0, 1, 1], [], []>} : vector<8x10xf32>, vector<10x8xf32>, vector<8x8xf32> -> vector<8x8xf32>
    %419 = vector.extract_strided_slice %260 {offsets = [8, 0], sizes = [8, 32], strides = [1, 1]} : vector<32x32xf32> to vector<8x32xf32>
    %cst_118 = arith.constant dense<0.000000e+00> : vector<8x32xf32>
    %420 = tpu.matmul %418, %419, %cst_118 {dimension_numbers = #tpu.dot_dimension_numbers<[1], [0], [0], [1], [0, 0, 1, 1], [], []>} : vector<8x8xf32>, vector<8x32xf32>, vector<8x32xf32> -> vector<8x32xf32>
    %421 = arith.addf %400, %420 : vector<8x32xf32>
    %422 = vector.extract_strided_slice %367 {offsets = [0, 16], sizes = [8, 8], strides = [1, 1]} : vector<8x32xf32> to vector<8x8xf32>
    %423 = vector.extract_strided_slice %370 {offsets = [0, 16], sizes = [10, 8], strides = [1, 1]} : vector<10x32xf32> to vector<10x8xf32>
    %424 = vector.extract_strided_slice %371 {offsets = [0, 16], sizes = [10, 8], strides = [1, 1]} : vector<10x32xf32> to vector<10x8xf32>
    %cst_119 = arith.constant dense<0.000000e+00> : vector<8x10xf32>
    %425 = tpu.matmul %422, %423, %cst_119 {dimension_numbers = #tpu.dot_dimension_numbers<[1], [1], [0], [0], [0, 0, 1, 0], [], []>} : vector<8x8xf32>, vector<10x8xf32>, vector<8x10xf32> -> vector<8x10xf32>
    %cst_120 = arith.constant 0.353553385 : f32
    %426 = vector.broadcast %cst_120 : f32 to vector<8x10xf32>
    %427 = arith.mulf %425, %426 : vector<8x10xf32>
    %428 = vector.broadcast %378 : vector<1x10xf32> to vector<8x10xf32>
    %429 = arith.addf %427, %428 : vector<8x10xf32>
    %cst_121 = arith.constant dense<0xFF800000> : vector<8xf32>
    %430 = vector.multi_reduction <maximumf>, %429, %cst_121 [1] : vector<8x10xf32> to vector<8xf32>
    %431 = vector.shape_cast %430 : vector<8xf32> to vector<8x1xf32>
    %432 = vector.broadcast %431 : vector<8x1xf32> to vector<8x10xf32>
    %433 = arith.subf %429, %432 : vector<8x10xf32>
    %434 = math.exp %433 : vector<8x10xf32>
    %cst_122 = arith.constant dense<0.000000e+00> : vector<8xf32>
    %435 = vector.multi_reduction <add>, %434, %cst_122 [1] : vector<8x10xf32> to vector<8xf32>
    %436 = vector.shape_cast %435 : vector<8xf32> to vector<8x1xf32>
    %437 = vector.broadcast %436 : vector<8x1xf32> to vector<8x10xf32>
    %438 = arith.divf %434, %437 : vector<8x10xf32>
    %cst_123 = arith.constant dense<0.000000e+00> : vector<8x8xf32>
    %439 = tpu.matmul %438, %424, %cst_123 {dimension_numbers = #tpu.dot_dimension_numbers<[1], [0], [0], [1], [0, 0, 1, 1], [], []>} : vector<8x10xf32>, vector<10x8xf32>, vector<8x8xf32> -> vector<8x8xf32>
    %440 = vector.extract_strided_slice %260 {offsets = [16, 0], sizes = [8, 32], strides = [1, 1]} : vector<32x32xf32> to vector<8x32xf32>
    %cst_124 = arith.constant dense<0.000000e+00> : vector<8x32xf32>
    %441 = tpu.matmul %439, %440, %cst_124 {dimension_numbers = #tpu.dot_dimension_numbers<[1], [0], [0], [1], [0, 0, 1, 1], [], []>} : vector<8x8xf32>, vector<8x32xf32>, vector<8x32xf32> -> vector<8x32xf32>
    %442 = arith.addf %421, %441 : vector<8x32xf32>
    %443 = vector.extract_strided_slice %367 {offsets = [0, 24], sizes = [8, 8], strides = [1, 1]} : vector<8x32xf32> to vector<8x8xf32>
    %444 = vector.extract_strided_slice %370 {offsets = [0, 24], sizes = [10, 8], strides = [1, 1]} : vector<10x32xf32> to vector<10x8xf32>
    %445 = vector.extract_strided_slice %371 {offsets = [0, 24], sizes = [10, 8], strides = [1, 1]} : vector<10x32xf32> to vector<10x8xf32>
    %cst_125 = arith.constant dense<0.000000e+00> : vector<8x10xf32>
    %446 = tpu.matmul %443, %444, %cst_125 {dimension_numbers = #tpu.dot_dimension_numbers<[1], [1], [0], [0], [0, 0, 1, 0], [], []>} : vector<8x8xf32>, vector<10x8xf32>, vector<8x10xf32> -> vector<8x10xf32>
    %cst_126 = arith.constant 0.353553385 : f32
    %447 = vector.broadcast %cst_126 : f32 to vector<8x10xf32>
    %448 = arith.mulf %446, %447 : vector<8x10xf32>
    %449 = vector.broadcast %378 : vector<1x10xf32> to vector<8x10xf32>
    %450 = arith.addf %448, %449 : vector<8x10xf32>
    %cst_127 = arith.constant dense<0xFF800000> : vector<8xf32>
    %451 = vector.multi_reduction <maximumf>, %450, %cst_127 [1] : vector<8x10xf32> to vector<8xf32>
    %452 = vector.shape_cast %451 : vector<8xf32> to vector<8x1xf32>
    %453 = vector.broadcast %452 : vector<8x1xf32> to vector<8x10xf32>
    %454 = arith.subf %450, %453 : vector<8x10xf32>
    %455 = math.exp %454 : vector<8x10xf32>
    %cst_128 = arith.constant dense<0.000000e+00> : vector<8xf32>
    %456 = vector.multi_reduction <add>, %455, %cst_128 [1] : vector<8x10xf32> to vector<8xf32>
    %457 = vector.shape_cast %456 : vector<8xf32> to vector<8x1xf32>
    %458 = vector.broadcast %457 : vector<8x1xf32> to vector<8x10xf32>
    %459 = arith.divf %455, %458 : vector<8x10xf32>
    %cst_129 = arith.constant dense<0.000000e+00> : vector<8x8xf32>
    %460 = tpu.matmul %459, %445, %cst_129 {dimension_numbers = #tpu.dot_dimension_numbers<[1], [0], [0], [1], [0, 0, 1, 1], [], []>} : vector<8x10xf32>, vector<10x8xf32>, vector<8x8xf32> -> vector<8x8xf32>
    %461 = vector.extract_strided_slice %260 {offsets = [24, 0], sizes = [8, 32], strides = [1, 1]} : vector<32x32xf32> to vector<8x32xf32>
    %cst_130 = arith.constant dense<0.000000e+00> : vector<8x32xf32>
    %462 = tpu.matmul %460, %461, %cst_130 {dimension_numbers = #tpu.dot_dimension_numbers<[1], [0], [0], [1], [0, 0, 1, 1], [], []>} : vector<8x8xf32>, vector<8x32xf32>, vector<8x32xf32> -> vector<8x32xf32>
    %463 = arith.addf %442, %462 : vector<8x32xf32>
    %464 = tpu.concatenate %396, %417, %438, %459 in 1 : vector<8x10xf32>, vector<8x10xf32>, vector<8x10xf32>, vector<8x10xf32> -> vector<8x40xf32>
    %c1_131 = arith.constant 1 : index
    %c0_132 = arith.constant 0 : index
    %c0_133 = arith.constant 0 : index
    %465 = vector.load %arg25[%c1_131, %c0_132, %c0_133] : memref<2x8x40xf32, #tpu.memory_space<vmem>>, vector<1x8x40xf32>
    %466 = vector.shape_cast %465 : vector<1x8x40xf32> to vector<8x40xf32>
    %467 = vector.shape_cast %464 : vector<8x40xf32> to vector<1x8x40xf32>
    tpu.vector_store %arg25[%c1_131, %c0_132, %c0_133], %467 {strides = array<i32>} : memref<2x8x40xf32, #tpu.memory_space<vmem>>, vector<1x8x40xf32>,
    %c0_134 = arith.constant 0 : index
    %c1_135 = arith.constant 1 : index
    %c0_136 = arith.constant 0 : index
    %468 = vector.load %arg26[%c0_134, %c1_135, %c0_136] : memref<8x2x32xf32, #tpu.memory_space<vmem>>, vector<8x1x32xf32>
    %469 = vector.shape_cast %468 : vector<8x1x32xf32> to vector<8x32xf32>
    %470 = vector.shape_cast %463 : vector<8x32xf32> to vector<8x1x32xf32>
    tpu.vector_store %arg26[%c0_134, %c1_135, %c0_136], %470 {strides = array<i32>} : memref<8x2x32xf32, #tpu.memory_space<vmem>>, vector<8x1x32xf32>,
    %c0_137 = arith.constant 0 : index
    %c0_138 = arith.constant 0 : index
    %c0_139 = arith.constant 0 : index
    %471 = vector.load %arg26[%c0_137, %c0_138, %c0_139] : memref<8x2x32xf32, #tpu.memory_space<vmem>>, vector<8x2x32xf32>
    %472 = vector.shape_cast %471 : vector<8x2x32xf32> to vector<16x32xf32>
    %c0_140 = arith.constant 0 : index
    %c0_141 = arith.constant 0 : index
    %473 = vector.load %arg15[%c0_140, %c0_141] : memref<1x32xf32, #tpu.memory_space<vmem>>, vector<1x32xf32>
    %474 = vector.broadcast %473 : vector<1x32xf32> to vector<16x32xf32>
    %475 = arith.addf %472, %474 : vector<16x32xf32>
    %476 = arith.addf %475, %223 : vector<16x32xf32>
    %c0_142 = arith.constant 0 : index
    %c0_143 = arith.constant 0 : index
    %477 = vector.load %arg16[%c0_142, %c0_143] : memref<1x32xf32, #tpu.memory_space<vmem>>, vector<1x32xf32>
    %c0_144 = arith.constant 0 : index
    %c0_145 = arith.constant 0 : index
    %478 = vector.load %arg17[%c0_144, %c0_145] : memref<1x32xf32, #tpu.memory_space<vmem>>, vector<1x32xf32>
    %cst_146 = arith.constant dense<0.000000e+00> : vector<16xf32>
    %479 = vector.multi_reduction <add>, %476, %cst_146 [1] : vector<16x32xf32> to vector<16xf32>
    %480 = vector.shape_cast %479 : vector<16xf32> to vector<16x1xf32>
    %cst_147 = arith.constant 3.200000e+01 : f32
    %481 = vector.broadcast %cst_147 : f32 to vector<16x1xf32>
    %482 = arith.divf %480, %481 : vector<16x1xf32>
    %483 = vector.broadcast %482 : vector<16x1xf32> to vector<16x32xf32>
    %484 = arith.subf %476, %483 : vector<16x32xf32>
    %485 = arith.mulf %484, %484 : vector<16x32xf32>
    %cst_148 = arith.constant dense<0.000000e+00> : vector<16xf32>
    %486 = vector.multi_reduction <add>, %485, %cst_148 [1] : vector<16x32xf32> to vector<16xf32>
    %487 = vector.shape_cast %486 : vector<16xf32> to vector<16x1xf32>
    %cst_149 = arith.constant 3.200000e+01 : f32
    %488 = vector.broadcast %cst_149 : f32 to vector<16x1xf32>
    %489 = arith.divf %487, %488 : vector<16x1xf32>
    %cst_150 = arith.constant 9.99999974E-6 : f32
    %490 = vector.broadcast %cst_150 : f32 to vector<16x1xf32>
    %491 = arith.addf %489, %490 : vector<16x1xf32>
    %492 = math.rsqrt %491 : vector<16x1xf32>
    %493 = vector.broadcast %492 : vector<16x1xf32> to vector<16x32xf32>
    %494 = arith.mulf %484, %493 : vector<16x32xf32>
    %495 = vector.broadcast %477 : vector<1x32xf32> to vector<16x32xf32>
    %496 = arith.mulf %494, %495 : vector<16x32xf32>
    %497 = vector.broadcast %478 : vector<1x32xf32> to vector<16x32xf32>
    %498 = arith.addf %496, %497 : vector<16x32xf32>
    %c0_151 = arith.constant 0 : index
    %c0_152 = arith.constant 0 : index
    %499 = vector.load %arg18[%c0_151, %c0_152] : memref<32x64xf32, #tpu.memory_space<vmem>>, vector<32x64xf32>
    %cst_153 = arith.constant dense<0.000000e+00> : vector<16x64xf32>
    %500 = tpu.matmul %498, %499, %cst_153 {dimension_numbers = #tpu.dot_dimension_numbers<[1], [0], [0], [1], [0, 0, 1, 1], [], []>} : vector<16x32xf32>, vector<32x64xf32>, vector<16x64xf32> -> vector<16x64xf32>
    %c0_154 = arith.constant 0 : index
    %c0_155 = arith.constant 0 : index
    %501 = vector.load %arg19[%c0_154, %c0_155] : memref<1x64xf32, #tpu.memory_space<vmem>>, vector<1x64xf32>
    %502 = vector.broadcast %501 : vector<1x64xf32> to vector<16x64xf32>
    %503 = arith.addf %500, %502 : vector<16x64xf32>
    %cst_156 = arith.constant 0.000000e+00 : f32
    %504 = vector.broadcast %cst_156 : f32 to vector<16x64xf32>
    %505 = arith.maximumf %503, %504 : vector<16x64xf32>
    %c0_157 = arith.constant 0 : index
    %c0_158 = arith.constant 0 : index
    %506 = vector.load %arg20[%c0_157, %c0_158] : memref<64x32xf32, #tpu.memory_space<vmem>>, vector<64x32xf32>
    %cst_159 = arith.constant dense<0.000000e+00> : vector<16x32xf32>
    %507 = tpu.matmul %505, %506, %cst_159 {dimension_numbers = #tpu.dot_dimension_numbers<[1], [0], [0], [1], [0, 0, 1, 1], [], []>} : vector<16x64xf32>, vector<64x32xf32>, vector<16x32xf32> -> vector<16x32xf32>
    %c0_160 = arith.constant 0 : index
    %c0_161 = arith.constant 0 : index
    %508 = vector.load %arg21[%c0_160, %c0_161] : memref<1x32xf32, #tpu.memory_space<vmem>>, vector<1x32xf32>
    %509 = vector.broadcast %508 : vector<1x32xf32> to vector<16x32xf32>
    %510 = arith.addf %507, %509 : vector<16x32xf32>
    %511 = arith.addf %510, %476 : vector<16x32xf32>
    %512 = vector.shape_cast %511 : vector<16x32xf32> to vector<8x2x32xf32>
    %c0_162 = arith.constant 0 : index
    %c0_163 = arith.constant 0 : index
    %c0_164 = arith.constant 0 : index
    %513 = vector.load %arg22[%c0_162, %c0_163, %c0_164] : memref<8x2x32xf32, #tpu.memory_space<vmem>>, vector<8x2x32xf32>
    tpu.vector_store %arg22[%c0_162, %c0_163, %c0_164], %512 {strides = array<i32>} : memref<8x2x32xf32, #tpu.memory_space<vmem>>, vector<8x2x32xf32>,
    return
  }
}

</mosaic_0001>

<llo_original>
// kernel: tpu_custom_call.1
$region0: #{tpu_custom_call.1}
  #allocation0 [shape = 'u32[]', space=smem, size = 0x4, offset = 0x4, fixed_abs, tag = 'smem constant byte address 0x4 - core index']
  #allocation1 [shape = 'u32[144,128]{1,0:T(1,128)}', space=vmem, size = 0x12000, scoped, tag = 'internal scratch']
  #allocation2 [shape = 'f32[8,2,32]{2,1,0:T(2,128)}', space=vmem, size = 0x2000, scoped, tag = 'scratch operand']
  %s0 = inlined_call_operand.hbm [shape: f32[8,2,32], index: 0, kind: input, shape index: {}]
  %s1 = inlined_call_operand.hbm [shape: f32[10,2,32], index: 1, kind: input, shape index: {}]
  %s2 = inlined_call_operand.hbm [shape: s32[2,1,10], index: 2, kind: input, shape index: {}]
  %s3 = inlined_call_operand.hbm [shape: f32[1,32], index: 3, kind: input, shape index: {}]
  %s4 = inlined_call_operand.hbm [shape: f32[1,32], index: 4, kind: input, shape index: {}]
  %s5 = inlined_call_operand.vmem [shape: f32[32,128], index: 5, kind: input, shape index: {}]
  %s6 = inlined_call_operand.vmem [shape: f32[32,128], index: 6, kind: input, shape index: {}]
  %s7 = inlined_call_operand.hbm [shape: f32[1,128], index: 7, kind: input, shape index: {}]
  %s8 = inlined_call_operand.hbm [shape: f32[1,32], index: 8, kind: input, shape index: {}]
  %s9 = inlined_call_operand.hbm [shape: f32[1,32], index: 9, kind: input, shape index: {}]
  %s10 = inlined_call_operand.vmem [shape: f32[32,32], index: 10, kind: input, shape index: {}]
  %s11 = inlined_call_operand.hbm [shape: f32[1,32], index: 11, kind: input, shape index: {}]
  %s12 = inlined_call_operand.vmem [shape: f32[32,64], index: 12, kind: input, shape index: {}]
  %s13 = inlined_call_operand.hbm [shape: f32[1,64], index: 13, kind: input, shape index: {}]
  %s14 = inlined_call_operand.hbm [shape: f32[32,32], index: 14, kind: input, shape index: {}]
  %s15 = inlined_call_operand.hbm [shape: f32[1,32], index: 15, kind: input, shape index: {}]
  %s16 = inlined_call_operand.hbm [shape: f32[1,32], index: 16, kind: input, shape index: {}]
  %s17 = inlined_call_operand.hbm [shape: f32[1,32], index: 17, kind: input, shape index: {}]
  %s18 = inlined_call_operand.hbm [shape: f32[32,64], index: 18, kind: input, shape index: {}]
  %s19 = inlined_call_operand.vmem [shape: f32[1,64], index: 19, kind: input, shape index: {}]
  %s20 = inlined_call_operand.vmem [shape: f32[64,32], index: 20, kind: input, shape index: {}]
  %s21 = inlined_call_operand.vmem [shape: f32[1,32], index: 21, kind: input, shape index: {}]
  %s22 = inlined_call_operand.hbm [shape: f32[8,2,32], index: 22, kind: output, shape index: {0}]
  %s23 = inlined_call_operand.hbm [shape: f32[1,2,32], index: 23, kind: output, shape index: {1}]
  %s24 = inlined_call_operand.hbm [shape: f32[1,2,32], index: 24, kind: output, shape index: {2}]
  %s25 = inlined_call_operand.hbm [shape: f32[2,8,40], index: 25, kind: output, shape index: {3}]
  %26 = xla_tuple %s22, %s23, %s24, %s25
  %s27 = sld [smem:[#allocation0]]
  $region182: #{tpu_custom_call.1} parent=0
    _
  %s29 = ssub.s32 1, %s27
  %s30 = scalar_select 0, %s29, %s27
  $region1: #{tpu_custom_call.1} parent=0
    #allocation3 [shape = 'u8[8192]{0}', space=vmem, size = 0x2000, scoped, tag = 'input window, operand 0, single buffered']
    #allocation4 [shape = 's32[1]{0}', space=sflag, size = 0x4, scoped, tag = 'scoped memory for tpu_custom_call.1']
    #allocation5 [shape = 's32[1]{0}', space=sflag, size = 0x4, scoped, tag = 'scoped memory for tpu_custom_call.1']
    #allocation6 [shape = 'u8[10240]{0}', space=vmem, size = 0x2800, scoped, tag = 'input window, operand 1, single buffered']
    #allocation7 [shape = 's32[1]{0}', space=sflag, size = 0x4, scoped, tag = 'scoped memory for tpu_custom_call.1']
    #allocation8 [shape = 'u8[1024]{0}', space=vmem, size = 0x400, scoped, tag = 'input window, operand 2, single buffered']
    #allocation9 [shape = 'u8[512]{0}', space=vmem, size = 0x400, scoped, tag = 'input window, operand 3, single buffered']
    #allocation10 [shape = 's32[1]{0}', space=sflag, size = 0x4, scoped, tag = 'scoped memory for tpu_custom_call.1']
    #allocation11 [shape = 'u8[512]{0}', space=vmem, size = 0x400, scoped, tag = 'input window, operand 4, single buffered']
    #allocation12 [shape = 'u8[512]{0}', space=vmem, size = 0x400, scoped, tag = 'input window, operand 7, single buffered']
    #allocation13 [shape = 's32[1]{0}', space=sflag, size = 0x4, scoped, tag = 'scoped memory for tpu_custom_call.1']
    #allocation14 [shape = 'u8[512]{0}', space=vmem, size = 0x400, scoped, tag = 'input window, operand 8, single buffered']
    #allocation15 [shape = 'u8[512]{0}', space=vmem, size = 0x400, scoped, tag = 'input window, operand 9, single buffered']
    #allocation16 [shape = 's32[1]{0}', space=sflag, size = 0x4, scoped, tag = 'scoped memory for tpu_custom_call.1']
    #allocation17 [shape = 'u8[512]{0}', space=vmem, size = 0x400, scoped, tag = 'input window, operand 11, single buffered']
    #allocation18 [shape = 'u8[512]{0}', space=vmem, size = 0x400, scoped, tag = 'input window, operand 13, single buffered']
    #allocation19 [shape = 's32[1]{0}', space=sflag, size = 0x4, scoped, tag = 'scoped memory for tpu_custom_call.1']
    #allocation20 [shape = 'u8[16384]{0}', space=vmem, size = 0x4000, scoped, tag = 'input window, operand 14, single buffered']
    #allocation21 [shape = 'u8[512]{0}', space=vmem, size = 0x400, scoped, tag = 'input window, operand 15, single buffered']
    #allocation22 [shape = 's32[1]{0}', space=sflag, size = 0x4, scoped, tag = 'scoped memory for tpu_custom_call.1']
    #allocation23 [shape = 'u8[512]{0}', space=vmem, size = 0x400, scoped, tag = 'input window, operand 16, single buffered']
    #allocation24 [shape = 'u8[512]{0}', space=vmem, size = 0x400, scoped, tag = 'input window, operand 17, single buffered']
    #allocation25 [shape = 's32[1]{0}', space=sflag, size = 0x4, scoped, tag = 'scoped memory for tpu_custom_call.1']
    #allocation26 [shape = 'u8[16384]{0}', space=vmem, size = 0x4000, scoped, tag = 'input window, operand 18, single buffered']
    #allocation27 [shape = 'u8[8192]{0}', space=vmem, size = 0x2000, scoped, tag = 'output window, operand 0, single buffered']
    #allocation28 [shape = 'u8[1024]{0}', space=vmem, size = 0x400, scoped, tag = 'output window, operand 1, single buffered']
    #allocation29 [shape = 's32[1]{0}', space=sflag, size = 0x4, scoped, tag = 'scoped memory for tpu_custom_call.1']
    #allocation30 [shape = 'u8[1024]{0}', space=vmem, size = 0x400, scoped, tag = 'output window, operand 2, single buffered']
    #allocation31 [shape = 'u8[8192]{0}', space=vmem, size = 0x2000, scoped, tag = 'output window, operand 3, single buffered']
    #allocation32 [shape = 's32[1]{0}', space=sflag, size = 0x4, scoped, tag = 'scoped memory for tpu_custom_call.1']
    %31 = vsyncpa [#allocation4], 0
    %32 = vsyncpa [#allocation7], 0
    %33 = vsyncpa [#allocation10], 0
    %34 = vsyncpa [#allocation13], 0
    %35 = vsyncpa [#allocation16], 0
    %36 = vsyncpa [#allocation19], 0
    %37 = vsyncpa [#allocation22], 0
    %38 = vsyncpa [#allocation25], 0
    %39 = vsyncpa [#allocation5], 0
    %40 = vsyncpa [#allocation29], 0
    %41 = vsyncpa [#allocation32], 0
    // Predicated region
    $region2: #{tpu_custom_call.1} parent=1 // pred_check
      _
    $region3: #{tpu_custom_call.1} parent=1 // pred_check_branch
      %43 = sbr.rel (0) target = $region5
    $region4: #{tpu_custom_call.1} parent=1 // pred_region
      %s45 = ssub.s32 256, 256
      %46 = vsyncadd [#allocation4], %s45
      %s47 = sshll.u32 [#allocation3], 4
      %s48 = int_to_ptr.vmem [resolvable:$true] %s47
      %53 = dma.hbm_to_vmem [thread:$0]  %s0, 256, %s48, [#allocation4], 32, 32, 2
    $region5: #{tpu_custom_call.1} parent=1 // pred_fallthru
      _
    // Predicated region
    $region6: #{tpu_custom_call.1} parent=1 // pred_check
      _
    $region7: #{tpu_custom_call.1} parent=1 // pred_check_branch
      %55 = sbr.rel (0) target = $region9
    $region8: #{tpu_custom_call.1} parent=1 // pred_region
      %s57 = ssub.s32 320, 320
      %58 = vsyncadd [#allocation7], %s57
      %s59 = sshll.u32 [#allocation6], 4
      %s60 = int_to_ptr.vmem [resolvable:$true] %s59
      %65 = dma.hbm_to_vmem [thread:$0]  %s1, 320, %s60, [#allocation7], 32, 32, 2
    $region9: #{tpu_custom_call.1} parent=1 // pred_fallthru
      _
    // Predicated region
    $region10: #{tpu_custom_call.1} parent=1 // pred_check
      _
    $region11: #{tpu_custom_call.1} parent=1 // pred_check_branch
      %67 = sbr.rel (0) target = $region13
    $region12: #{tpu_custom_call.1} parent=1 // pred_region
      %s69 = ssub.s32 32, 32
      %70 = vsyncadd [#allocation7], %s69
      %s71 = sshll.u32 [#allocation8], 4
      %s72 = int_to_ptr.vmem [resolvable:$true] %s71
      %77 = dma.hbm_to_vmem [thread:$0]  %s2, 32, %s72, [#allocation7], 16, 16, 1
    $region13: #{tpu_custom_call.1} parent=1 // pred_fallthru
      _
    // Predicated region
    $region14: #{tpu_custom_call.1} parent=1 // pred_check
      _
    $region15: #{tpu_custom_call.1} parent=1 // pred_check_branch
      %79 = sbr.rel (0) target = $region17
    $region16: #{tpu_custom_call.1} parent=1 // pred_region
      %s81 = ssub.s32 16, 16
      %82 = vsyncadd [#allocation10], %s81
      %s84 = sshll.u32 [#allocation9], 4
      %s85 = int_to_ptr.vmem [resolvable:$true] %s84
      %87 = dma.hbm_to_vmem [thread:$0]  %s3, 16, %s85, [#allocation10]
    $region17: #{tpu_custom_call.1} parent=1 // pred_fallthru
      _
    // Predicated region
    $region18: #{tpu_custom_call.1} parent=1 // pred_check
      _
    $region19: #{tpu_custom_call.1} parent=1 // pred_check_branch
      %89 = sbr.rel (0) target = $region21
    $region20: #{tpu_custom_call.1} parent=1 // pred_region
      %s91 = ssub.s32 16, 16
      %92 = vsyncadd [#allocation10], %s91
      %s94 = sshll.u32 [#allocation11], 4
      %s95 = int_to_ptr.vmem [resolvable:$true] %s94
      %97 = dma.hbm_to_vmem [thread:$0]  %s4, 16, %s95, [#allocation10]
    $region21: #{tpu_custom_call.1} parent=1 // pred_fallthru
      _
    // Predicated region
    $region22: #{tpu_custom_call.1} parent=1 // pred_check
      _
    $region23: #{tpu_custom_call.1} parent=1 // pred_check_branch
      %99 = sbr.rel (0) target = $region25
    $region24: #{tpu_custom_call.1} parent=1 // pred_region
      _
    $region25: #{tpu_custom_call.1} parent=1 // pred_fallthru
      _
    // Predicated region
    $region26: #{tpu_custom_call.1} parent=1 // pred_check
      _
    $region27: #{tpu_custom_call.1} parent=1 // pred_check_branch
      %101 = sbr.rel (0) target = $region29
    $region28: #{tpu_custom_call.1} parent=1 // pred_region
      _
    $region29: #{tpu_custom_call.1} parent=1 // pred_fallthru
      _
    // Predicated region
    $region30: #{tpu_custom_call.1} parent=1 // pred_check
      _
    $region31: #{tpu_custom_call.1} parent=1 // pred_check_branch
      %103 = sbr.rel (0) target = $region33
    $region32: #{tpu_custom_call.1} parent=1 // pred_region
      %s105 = ssub.s32 16, 16
      %106 = vsyncadd [#allocation13], %s105
      %s108 = sshll.u32 [#allocation12], 4
      %s109 = int_to_ptr.vmem [resolvable:$true] %s108
      %111 = dma.hbm_to_vmem [thread:$0]  %s7, 16, %s109, [#allocation13]
    $region33: #{tpu_custom_call.1} parent=1 // pred_fallthru
      _
    // Predicated region
    $region34: #{tpu_custom_call.1} parent=1 // pred_check
      _
    $region35: #{tpu_custom_call.1} parent=1 // pred_check_branch
      %113 = sbr.rel (0) target = $region37
    $region36: #{tpu_custom_call.1} parent=1 // pred_region
      %s115 = ssub.s32 16, 16
      %116 = vsyncadd [#allocation13], %s115
      %s118 = sshll.u32 [#allocation14], 4
      %s119 = int_to_ptr.vmem [resolvable:$true] %s118
      %121 = dma.hbm_to_vmem [thread:$0]  %s8, 16, %s119, [#allocation13]
    $region37: #{tpu_custom_call.1} parent=1 // pred_fallthru
      _
    // Predicated region
    $region38: #{tpu_custom_call.1} parent=1 // pred_check
      _
    $region39: #{tpu_custom_call.1} parent=1 // pred_check_branch
      %123 = sbr.rel (0) target = $region41
    $region40: #{tpu_custom_call.1} parent=1 // pred_region
      %s125 = ssub.s32 16, 16
      %126 = vsyncadd [#allocation16], %s125
      %s128 = sshll.u32 [#allocation15], 4
      %s129 = int_to_ptr.vmem [resolvable:$true] %s128
      %131 = dma.hbm_to_vmem [thread:$0]  %s9, 16, %s129, [#allocation16]
    $region41: #{tpu_custom_call.1} parent=1 // pred_fallthru
      _
    // Predicated region
    $region42: #{tpu_custom_call.1} parent=1 // pred_check
      _
    $region43: #{tpu_custom_call.1} parent=1 // pred_check_branch
      %133 = sbr.rel (0) target = $region45
    $region44: #{tpu_custom_call.1} parent=1 // pred_region
      _
    $region45: #{tpu_custom_call.1} parent=1 // pred_fallthru
      _
    // Predicated region
    $region46: #{tpu_custom_call.1} parent=1 // pred_check
      _
    $region47: #{tpu_custom_call.1} parent=1 // pred_check_branch
      %135 = sbr.rel (0) target = $region49
    $region48: #{tpu_custom_call.1} parent=1 // pred_region
      %s137 = ssub.s32 16, 16
      %138 = vsyncadd [#allocation16], %s137
      %s140 = sshll.u32 [#allocation17], 4
      %s141 = int_to_ptr.vmem [resolvable:$true] %s140
      %143 = dma.hbm_to_vmem [thread:$0]  %s11, 16, %s141, [#allocation16]
    $region49: #{tpu_custom_call.1} parent=1 // pred_fallthru
      _
    // Predicated region
    $region50: #{tpu_custom_call.1} parent=1 // pred_check
      _
    $region51: #{tpu_custom_call.1} parent=1 // pred_check_branch
      %145 = sbr.rel (0) target = $region53
    $region52: #{tpu_custom_call.1} parent=1 // pred_region
      _
    $region53: #{tpu_custom_call.1} parent=1 // pred_fallthru
      _
    // Predicated region
    $region54: #{tpu_custom_call.1} parent=1 // pred_check
      _
    $region55: #{tpu_custom_call.1} parent=1 // pred_check_branch
      %147 = sbr.rel (0) target = $region57
    $region56: #{tpu_custom_call.1} parent=1 // pred_region
      %s149 = ssub.s32 16, 16
      %150 = vsyncadd [#allocation19], %s149
      %s152 = sshll.u32 [#allocation18], 4
      %s153 = int_to_ptr.vmem [resolvable:$true] %s152
      %155 = dma.hbm_to_vmem [thread:$0]  %s13, 16, %s153, [#allocation19]
    $region57: #{tpu_custom_call.1} parent=1 // pred_fallthru
      _
    // Predicated region
    $region58: #{tpu_custom_call.1} parent=1 // pred_check
      _
    $region59: #{tpu_custom_call.1} parent=1 // pred_check_branch
      %157 = sbr.rel (0) target = $region61
    $region60: #{tpu_custom_call.1} parent=1 // pred_region
      %s159 = ssub.s32 512, 512
      %160 = vsyncadd [#allocation19], %s159
      %s161 = sshll.u32 [#allocation20], 4
      %s162 = int_to_ptr.vmem [resolvable:$true] %s161
      %167 = dma.hbm_to_vmem [thread:$0]  %s14, 512, %s162, [#allocation19], 128, 128, 8
    $region61: #{tpu_custom_call.1} parent=1 // pred_fallthru
      _
    // Predicated region
    $region62: #{tpu_custom_call.1} parent=1 // pred_check
      _
    $region63: #{tpu_custom_call.1} parent=1 // pred_check_branch
      %169 = sbr.rel (0) target = $region65
    $region64: #{tpu_custom_call.1} parent=1 // pred_region
      %s171 = ssub.s32 16, 16
      %172 = vsyncadd [#allocation22], %s171
      %s174 = sshll.u32 [#allocation21], 4
      %s175 = int_to_ptr.vmem [resolvable:$true] %s174
      %177 = dma.hbm_to_vmem [thread:$0]  %s15, 16, %s175, [#allocation22]
    $region65: #{tpu_custom_call.1} parent=1 // pred_fallthru
      _
    // Predicated region
    $region66: #{tpu_custom_call.1} parent=1 // pred_check
      _
    $region67: #{tpu_custom_call.1} parent=1 // pred_check_branch
      %179 = sbr.rel (0) target = $region69
    $region68: #{tpu_custom_call.1} parent=1 // pred_region
      %s181 = ssub.s32 16, 16
      %182 = vsyncadd [#allocation22], %s181
      %s184 = sshll.u32 [#allocation23], 4
      %s185 = int_to_ptr.vmem [resolvable:$true] %s184
      %187 = dma.hbm_to_vmem [thread:$0]  %s16, 16, %s185, [#allocation22]
    $region69: #{tpu_custom_call.1} parent=1 // pred_fallthru
      _
    // Predicated region
    $region70: #{tpu_custom_call.1} parent=1 // pred_check
      _
    $region71: #{tpu_custom_call.1} parent=1 // pred_check_branch
      %189 = sbr.rel (0) target = $region73
    $region72: #{tpu_custom_call.1} parent=1 // pred_region
      %s191 = ssub.s32 16, 16
      %192 = vsyncadd [#allocation25], %s191
      %s194 = sshll.u32 [#allocation24], 4
      %s195 = int_to_ptr.vmem [resolvable:$true] %s194
      %197 = dma.hbm_to_vmem [thread:$0]  %s17, 16, %s195, [#allocation25]
    $region73: #{tpu_custom_call.1} parent=1 // pred_fallthru
      _
    // Predicated region
    $region74: #{tpu_custom_call.1} parent=1 // pred_check
      _
    $region75: #{tpu_custom_call.1} parent=1 // pred_check_branch
      %199 = sbr.rel (0) target = $region77
    $region76: #{tpu_custom_call.1} parent=1 // pred_region
      %s201 = ssub.s32 512, 512
      %202 = vsyncadd [#allocation25], %s201
      %s203 = sshll.u32 [#allocation26], 4
      %s204 = int_to_ptr.vmem [resolvable:$true] %s203
      %209 = dma.hbm_to_vmem [thread:$0]  %s18, 512, %s204, [#allocation25], 128, 128, 8
    $region77: #{tpu_custom_call.1} parent=1 // pred_fallthru
      _
    // Predicated region
    $region78: #{tpu_custom_call.1} parent=1 // pred_check
      _
    $region79: #{tpu_custom_call.1} parent=1 // pred_check_branch
      %211 = sbr.rel (0) target = $region81
    $region80: #{tpu_custom_call.1} parent=1 // pred_region
      _
    $region81: #{tpu_custom_call.1} parent=1 // pred_fallthru
      _
    // Predicated region
    $region82: #{tpu_custom_call.1} parent=1 // pred_check
      _
    $region83: #{tpu_custom_call.1} parent=1 // pred_check_branch
      %213 = sbr.rel (0) target = $region85
    $region84: #{tpu_custom_call.1} parent=1 // pred_region
      _
    $region85: #{tpu_custom_call.1} parent=1 // pred_fallthru
      _
    // Predicated region
    $region86: #{tpu_custom_call.1} parent=1 // pred_check
      _
    $region87: #{tpu_custom_call.1} parent=1 // pred_check_branch
      %215 = sbr.rel (0) target = $region89
    $region88: #{tpu_custom_call.1} parent=1 // pred_region
      _
    $region89: #{tpu_custom_call.1} parent=1 // pred_fallthru
      _
    // Predicated region
    $region90: #{tpu_custom_call.1} parent=1 // pred_check
      _
    $region91: #{tpu_custom_call.1} parent=1 // pred_check_branch
      %217 = sbr.rel (0) target = $region93
    $region92: #{tpu_custom_call.1} parent=1 // pred_region
      %218 = dma.done [#allocation4], 256
    $region93: #{tpu_custom_call.1} parent=1 // pred_fallthru
      _
    // Predicated region
    $region94: #{tpu_custom_call.1} parent=1 // pred_check
      _
    $region95: #{tpu_custom_call.1} parent=1 // pred_check_branch
      %220 = sbr.rel (0) target = $region97
    $region96: #{tpu_custom_call.1} parent=1 // pred_region
      %221 = dma.done [#allocation7], 320
    $region97: #{tpu_custom_call.1} parent=1 // pred_fallthru
      _
    // Predicated region
    $region98: #{tpu_custom_call.1} parent=1 // pred_check
      _
    $region99: #{tpu_custom_call.1} parent=1 // pred_check_branch
      %223 = sbr.rel (0) target = $region101
    $region100: #{tpu_custom_call.1} parent=1 // pred_region
      %224 = dma.done [#allocation7], 32
    $region101: #{tpu_custom_call.1} parent=1 // pred_fallthru
      _
    // Predicated region
    $region102: #{tpu_custom_call.1} parent=1 // pred_check
      _
    $region103: #{tpu_custom_call.1} parent=1 // pred_check_branch
      %226 = sbr.rel (0) target = $region105
    $region104: #{tpu_custom_call.1} parent=1 // pred_region
      %227 = dma.done [#allocation10], 16
    $region105: #{tpu_custom_call.1} parent=1 // pred_fallthru
      _
    // Predicated region
    $region106: #{tpu_custom_call.1} parent=1 // pred_check
      _
    $region107: #{tpu_custom_call.1} parent=1 // pred_check_branch
      %229 = sbr.rel (0) target = $region109
    $region108: #{tpu_custom_call.1} parent=1 // pred_region
      %230 = dma.done [#allocation10], 16
    $region109: #{tpu_custom_call.1} parent=1 // pred_fallthru
      _
    // Predicated region
    $region110: #{tpu_custom_call.1} parent=1 // pred_check
      _
    $region111: #{tpu_custom_call.1} parent=1 // pred_check_branch
      %232 = sbr.rel (0) target = $region113
    $region112: #{tpu_custom_call.1} parent=1 // pred_region
      %233 = dma.done [#allocation13], 16
    $region113: #{tpu_custom_call.1} parent=1 // pred_fallthru
      _
    // Predicated region
    $region114: #{tpu_custom_call.1} parent=1 // pred_check
      _
    $region115: #{tpu_custom_call.1} parent=1 // pred_check_branch
      %235 = sbr.rel (0) target = $region117
    $region116: #{tpu_custom_call.1} parent=1 // pred_region
      %236 = dma.done [#allocation13], 16
    $region117: #{tpu_custom_call.1} parent=1 // pred_fallthru
      _
    // Predicated region
    $region118: #{tpu_custom_call.1} parent=1 // pred_check
      _
    $region119: #{tpu_custom_call.1} parent=1 // pred_check_branch
      %238 = sbr.rel (0) target = $region121
    $region120: #{tpu_custom_call.1} parent=1 // pred_region
      %239 = dma.done [#allocation16], 16
    $region121: #{tpu_custom_call.1} parent=1 // pred_fallthru
      _
    // Predicated region
    $region122: #{tpu_custom_call.1} parent=1 // pred_check
      _
    $region123: #{tpu_custom_call.1} parent=1 // pred_check_branch
      %241 = sbr.rel (0) target = $region125
    $region124: #{tpu_custom_call.1} parent=1 // pred_region
      %242 = dma.done [#allocation16], 16
    $region125: #{tpu_custom_call.1} parent=1 // pred_fallthru
      _
    // Predicated region
    $region126: #{tpu_custom_call.1} parent=1 // pred_check
      _
    $region127: #{tpu_custom_call.1} parent=1 // pred_check_branch
      %244 = sbr.rel (0) target = $region129
    $region128: #{tpu_custom_call.1} parent=1 // pred_region
      %245 = dma.done [#allocation19], 16
    $region129: #{tpu_custom_call.1} parent=1 // pred_fallthru
      _
    // Predicated region
    $region130: #{tpu_custom_call.1} parent=1 // pred_check
      _
    $region131: #{tpu_custom_call.1} parent=1 // pred_check_branch
      %247 = sbr.rel (0) target = $region133
    $region132: #{tpu_custom_call.1} parent=1 // pred_region
      %248 = dma.done [#allocation19], 512
    $region133: #{tpu_custom_call.1} parent=1 // pred_fallthru
      _
    // Predicated region
    $region134: #{tpu_custom_call.1} parent=1 // pred_check
      _
    $region135: #{tpu_custom_call.1} parent=1 // pred_check_branch
      %250 = sbr.rel (0) target = $region137
    $region136: #{tpu_custom_call.1} parent=1 // pred_region
      %251 = dma.done [#allocation22], 16
    $region137: #{tpu_custom_call.1} parent=1 // pred_fallthru
      _
    // Predicated region
    $region138: #{tpu_custom_call.1} parent=1 // pred_check
      _
    $region139: #{tpu_custom_call.1} parent=1 // pred_check_branch
      %253 = sbr.rel (0) target = $region141
    $region140: #{tpu_custom_call.1} parent=1 // pred_region
      %254 = dma.done [#allocation22], 16
    $region141: #{tpu_custom_call.1} parent=1 // pred_fallthru
      _
    // Predicated region
    $region142: #{tpu_custom_call.1} parent=1 // pred_check
      _
    $region143: #{tpu_custom_call.1} parent=1 // pred_check_branch
      %256 = sbr.rel (0) target = $region145
    $region144: #{tpu_custom_call.1} parent=1 // pred_region
      %257 = dma.done [#allocation25], 16
    $region145: #{tpu_custom_call.1} parent=1 // pred_fallthru
      _
    // Predicated region
    $region146: #{tpu_custom_call.1} parent=1 // pred_check
      _
    $region147: #{tpu_custom_call.1} parent=1 // pred_check_branch
      %259 = sbr.rel (0) target = $region149
    $region148: #{tpu_custom_call.1} parent=1 // pred_region
      %260 = dma.done [#allocation25], 512
    $region149: #{tpu_custom_call.1} parent=1 // pred_fallthru
      _
    %v261 = vld [vmem:[#allocation3] sm:$0x3]
    %v262 = vld [vmem:[#allocation3 + $0x2] sm:$0x3]
    %v263 = vld [vmem:[#allocation3 + $0x4] sm:$0x3]
    %v264 = vld [vmem:[#allocation3 + $0x6] sm:$0x3]
    %v265 = vld [vmem:[#allocation3 + $0x8] sm:$0x3]
    %v266 = vld [vmem:[#allocation3 + $0xa] sm:$0x3]
    %v267 = vld [vmem:[#allocation3 + $0xc] sm:$0x3]
    %v268 = vld [vmem:[#allocation3 + $0xe] sm:$0x3]
    %v269 = vld [vmem:[#allocation9] sm:$0x1]
    %v270 = vld [vmem:[#allocation11] sm:$0x1]
    %v279 = vcombine.low %v261, %v262
    %v280 = vcombine.low %v263, %v264
    %v282 = vunpack.c.l.s4 1983009808
    %v283 = vunpack.c.0.s8 %v282
    %v284 = vlaneseq
    %v285 = vshrl.u32 %v284, 7
    %v286 = vsub.s32 %v283, %v285
    %v287 = vrot.slane %v279, %v286
    %v289 = vunpack.c.l.s4 1983009808
    %v290 = vunpack.c.0.s8 %v289
    %v291 = vlaneseq
    %v292 = vshrl.u32 %v291, 7
    %v293 = vsub.s32 %v290, %v292
    %v294 = vrot.slane %v280, %v293
    %v295 = vcombine.low %v287, %v294
    %v296 = vcombine.low %v265, %v266
    %v297 = vcombine.low %v267, %v268
    %v299 = vunpack.c.l.s4 1983009808
    %v300 = vunpack.c.0.s8 %v299
    %v301 = vlaneseq
    %v302 = vshrl.u32 %v301, 7
    %v303 = vsub.s32 %v300, %v302
    %v304 = vrot.slane %v296, %v303
    %v306 = vunpack.c.l.s4 1983009808
    %v307 = vunpack.c.0.s8 %v306
    %v308 = vlaneseq
    %v309 = vshrl.u32 %v308, 7
    %v310 = vsub.s32 %v307, %v309
    %v311 = vrot.slane %v297, %v310
    %v312 = vcombine.low %v304, %v311
    %vm315 = vcmask 261120
    %v316 = vsel %vm315, %v295, 0.0
    %317 = vadd.xlane.f32.xlu0 %v316
    %v318 = vpop.xlane.xlu0 %317
    %v319 = vsel %vm315, %v312, 0.0
    %320 = vadd.xlane.f32.xlu0 %v319
    %v321 = vpop.xlane.xlu0 %320
    %v322 = vrcp.pop 32.0
    %v323 = vmul.f32 %v318, %v322
    %v324 = vmul.f32 %v321, %v322
    %v328 = vunpack.c.l.s4 269488144
    %v329 = vunpack.c.0.s8 %v328
    %v330 = vlaneseq
    %v331 = vshrl.u32 %v330, 7
    %v332 = vsub.s32 %v329, %v331
    %v333 = vrot.slane %v323, %v332
    %v335 = vunpack.c.l.s4 842150450
    %v336 = vunpack.c.0.s8 %v335
    %v337 = vlaneseq
    %v338 = vshrl.u32 %v337, 7
    %v339 = vsub.s32 %v336, %v338
    %v340 = vrot.slane %v323, %v339
    %v342 = vunpack.c.l.s4 1414812756
    %v343 = vunpack.c.0.s8 %v342
    %v344 = vlaneseq
    %v345 = vshrl.u32 %v344, 7
    %v346 = vsub.s32 %v343, %v345
    %v347 = vrot.slane %v323, %v346
    %v349 = vunpack.c.l.s4 1987475062
    %v350 = vunpack.c.0.s8 %v349
    %v351 = vlaneseq
    %v352 = vshrl.u32 %v351, 7
    %v353 = vsub.s32 %v350, %v352
    %v354 = vrot.slane %v323, %v353
    %v356 = vunpack.c.l.s4 269488144
    %v357 = vunpack.c.0.s8 %v356
    %v358 = vlaneseq
    %v359 = vshrl.u32 %v358, 7
    %v360 = vsub.s32 %v357, %v359
    %v361 = vrot.slane %v324, %v360
    %v363 = vunpack.c.l.s4 842150450
    %v364 = vunpack.c.0.s8 %v363
    %v365 = vlaneseq
    %v366 = vshrl.u32 %v365, 7
    %v367 = vsub.s32 %v364, %v366
    %v368 = vrot.slane %v324, %v367
    %v370 = vunpack.c.l.s4 1414812756
    %v371 = vunpack.c.0.s8 %v370
    %v372 = vlaneseq
    %v373 = vshrl.u32 %v372, 7
    %v374 = vsub.s32 %v371, %v373
    %v375 = vrot.slane %v324, %v374
    %v377 = vunpack.c.l.s4 1987475062
    %v378 = vunpack.c.0.s8 %v377
    %v379 = vlaneseq
    %v380 = vshrl.u32 %v379, 7
    %v381 = vsub.s32 %v378, %v380
    %v382 = vrot.slane %v324, %v381
    %v391 = vsub.f32 %v261, %v333
    %v392 = vsub.f32 %v262, %v340
    %v393 = vsub.f32 %v263, %v347
    %v394 = vsub.f32 %v264, %v354
    %v395 = vsub.f32 %v265, %v361
    %v396 = vsub.f32 %v266, %v368
    %v397 = vsub.f32 %v267, %v375
    %v398 = vsub.f32 %v268, %v382
    %v399 = vmul.f32 %v391, %v391
    %v400 = vmul.f32 %v392, %v392
    %v401 = vmul.f32 %v393, %v393
    %v402 = vmul.f32 %v394, %v394
    %v403 = vmul.f32 %v395, %v395
    %v404 = vmul.f32 %v396, %v396
    %v405 = vmul.f32 %v397, %v397
    %v406 = vmul.f32 %v398, %v398
    %v415 = vcombine.low %v399, %v400
    %v416 = vcombine.low %v401, %v402
    %v418 = vunpack.c.l.s4 1983009808
    %v419 = vunpack.c.0.s8 %v418
    %v420 = vlaneseq
    %v421 = vshrl.u32 %v420, 7
    %v422 = vsub.s32 %v419, %v421
    %v423 = vrot.slane %v415, %v422
    %v425 = vunpack.c.l.s4 1983009808
    %v426 = vunpack.c.0.s8 %v425
    %v427 = vlaneseq
    %v428 = vshrl.u32 %v427, 7
    %v429 = vsub.s32 %v426, %v428
    %v430 = vrot.slane %v416, %v429
    %v431 = vcombine.low %v423, %v430
    %v432 = vcombine.low %v403, %v404
    %v433 = vcombine.low %v405, %v406
    %v435 = vunpack.c.l.s4 1983009808
    %v436 = vunpack.c.0.s8 %v435
    %v437 = vlaneseq
    %v438 = vshrl.u32 %v437, 7
    %v439 = vsub.s32 %v436, %v438
    %v440 = vrot.slane %v432, %v439
    %v442 = vunpack.c.l.s4 1983009808
    %v443 = vunpack.c.0.s8 %v442
    %v444 = vlaneseq
    %v445 = vshrl.u32 %v444, 7
    %v446 = vsub.s32 %v443, %v445
    %v447 = vrot.slane %v433, %v446
    %v448 = vcombine.low %v440, %v447
    %v451 = vsel %vm315, %v431, 0.0
    %452 = vadd.xlane.f32.xlu0 %v451
    %v453 = vpop.xlane.xlu0 %452
    %v454 = vsel %vm315, %v448, 0.0
    %455 = vadd.xlane.f32.xlu0 %v454
    %v456 = vpop.xlane.xlu0 %455
    %v457 = vmul.f32 %v453, %v322
    %v458 = vmul.f32 %v456, %v322
    %v459 = vadd.f32 %v457, 1e-05
    %v460 = vadd.f32 %v458, 1e-05
    %v461 = vrsqrt.pop %v459
    %v462 = vrsqrt.pop %v460
    %v466 = vunpack.c.l.s4 269488144
    %v467 = vunpack.c.0.s8 %v466
    %v468 = vlaneseq
    %v469 = vshrl.u32 %v468, 7
    %v470 = vsub.s32 %v467, %v469
    %v471 = vrot.slane %v461, %v470
    %v473 = vunpack.c.l.s4 842150450
    %v474 = vunpack.c.0.s8 %v473
    %v475 = vlaneseq
    %v476 = vshrl.u32 %v475, 7
    %v477 = vsub.s32 %v474, %v476
    %v478 = vrot.slane %v461, %v477
    %v480 = vunpack.c.l.s4 1414812756
    %v481 = vunpack.c.0.s8 %v480
    %v482 = vlaneseq
    %v483 = vshrl.u32 %v482, 7
    %v484 = vsub.s32 %v481, %v483
    %v485 = vrot.slane %v461, %v484
    %v487 = vunpack.c.l.s4 1987475062
    %v488 = vunpack.c.0.s8 %v487
    %v489 = vlaneseq
    %v490 = vshrl.u32 %v489, 7
    %v491 = vsub.s32 %v488, %v490
    %v492 = vrot.slane %v461, %v491
    %v494 = vunpack.c.l.s4 269488144
    %v495 = vunpack.c.0.s8 %v494
    %v496 = vlaneseq
    %v497 = vshrl.u32 %v496, 7
    %v498 = vsub.s32 %v495, %v497
    %v499 = vrot.slane %v462, %v498
    %v501 = vunpack.c.l.s4 842150450
    %v502 = vunpack.c.0.s8 %v501
    %v503 = vlaneseq
    %v504 = vshrl.u32 %v503, 7
    %v505 = vsub.s32 %v502, %v504
    %v506 = vrot.slane %v462, %v505
    %v508 = vunpack.c.l.s4 1414812756
    %v509 = vunpack.c.0.s8 %v508
    %v510 = vlaneseq
    %v511 = vshrl.u32 %v510, 7
    %v512 = vsub.s32 %v509, %v511
    %v513 = vrot.slane %v462, %v512
    %v515 = vunpack.c.l.s4 1987475062
    %v516 = vunpack.c.0.s8 %v515
    %v517 = vlaneseq
    %v518 = vshrl.u32 %v517, 7
    %v519 = vsub.s32 %v516, %v518
    %v520 = vrot.slane %v462, %v519
    %v529 = vmul.f32 %v391, %v471
    %v530 = vmul.f32 %v392, %v478
    %v531 = vmul.f32 %v393, %v485
    %v532 = vmul.f32 %v394, %v492
    %v533 = vmul.f32 %v395, %v499
    %v534 = vmul.f32 %v396, %v506
    %v535 = vmul.f32 %v397, %v513
    %v536 = vmul.f32 %v398, %v520
    %v538 = vlaneseq
    %v539 = vshrl.u32 %v538, 7
    %v540 = vsub.s32 0, %v539
    %v541 = vrot.slane %v269, %v540
    %v542 = vcombine.high %v541, %v541
    %v544 = vunpack.c.l.s4 1983009808
    %v545 = vunpack.c.0.s8 %v544
    %v546 = vlaneseq
    %v547 = vshrl.u32 %v546, 7
    %v548 = vsub.s32 %v545, %v547
    %v549 = vrot.slane %v541, %v548
    %v551 = vunpack.c.l.s4 1983009808
    %v552 = vunpack.c.0.s8 %v551
    %v553 = vlaneseq
    %v554 = vshrl.u32 %v553, 7
    %v555 = vsub.s32 %v552, %v554
    %v556 = vrot.slane %v542, %v555
    %v557 = vcombine.high %v549, %v549
    %v558 = vcombine.high %v556, %v556
    %v563 = vmul.f32 %v529, %v549
    %v564 = vmul.f32 %v530, %v557
    %v565 = vmul.f32 %v531, %v556
    %v566 = vmul.f32 %v532, %v558
    %v567 = vmul.f32 %v533, %v549
    %v568 = vmul.f32 %v534, %v557
    %v569 = vmul.f32 %v535, %v556
    %v570 = vmul.f32 %v536, %v558
    %v572 = vlaneseq
    %v573 = vshrl.u32 %v572, 7
    %v574 = vsub.s32 0, %v573
    %v575 = vrot.slane %v270, %v574
    %v576 = vcombine.high %v575, %v575
    %v578 = vunpack.c.l.s4 1983009808
    %v579 = vunpack.c.0.s8 %v578
    %v580 = vlaneseq
    %v581 = vshrl.u32 %v580, 7
    %v582 = vsub.s32 %v579, %v581
    %v583 = vrot.slane %v575, %v582
    %v585 = vunpack.c.l.s4 1983009808
    %v586 = vunpack.c.0.s8 %v585
    %v587 = vlaneseq
    %v588 = vshrl.u32 %v587, 7
    %v589 = vsub.s32 %v586, %v588
    %v590 = vrot.slane %v576, %v589
    %v591 = vcombine.high %v583, %v583
    %v592 = vcombine.high %v590, %v590
    %v597 = vadd.f32 %v563, %v583
    %v598 = vadd.f32 %v564, %v591
    %v599 = vadd.f32 %v565, %v590
    %v600 = vadd.f32 %v566, %v592
    %v601 = vadd.f32 %v567, %v583
    %v602 = vadd.f32 %v568, %v591
    %v603 = vadd.f32 %v569, %v590
    %v604 = vadd.f32 %v570, %v592
    %v605 = vld [vmem:[%s5] sm:$0xff]
    %v606 = vld [vmem:[%s5 + $0x8] sm:$0xff]
    %v607 = vld [vmem:[%s5 + $0x10] sm:$0xff]
    %v608 = vld [vmem:[%s5 + $0x18] sm:$0xff]
    %v609 = vld [vmem:[#allocation12] sm:$0x1]
    %v611 = vlaneseq
    %v612 = vshrl.u32 %v611, 7
    %v613 = vsub.s32 0, %v612
    %v614 = vrot.slane %v609, %v613
    %v624 = vcombine.low %v597, %v598
    %v625 = vcombine.low %v599, %v600
    %v627 = vunpack.c.l.s4 1983009808
    %v628 = vunpack.c.0.s8 %v627
    %v629 = vlaneseq
    %v630 = vshrl.u32 %v629, 7
    %v631 = vsub.s32 %v628, %v630
    %v632 = vrot.slane %v624, %v631
    %v634 = vunpack.c.l.s4 1983009808
    %v635 = vunpack.c.0.s8 %v634
    %v636 = vlaneseq
    %v637 = vshrl.u32 %v636, 7
    %v638 = vsub.s32 %v635, %v637
    %v639 = vrot.slane %v625, %v638
    %v640 = vcombine.low %v632, %v639
    %v641 = vcombine.low %v601, %v602
    %v642 = vcombine.low %v603, %v604
    %v644 = vunpack.c.l.s4 1983009808
    %v645 = vunpack.c.0.s8 %v644
    %v646 = vlaneseq
    %v647 = vshrl.u32 %v646, 7
    %v648 = vsub.s32 %v645, %v647
    %v649 = vrot.slane %v641, %v648
    %v651 = vunpack.c.l.s4 1983009808
    %v652 = vunpack.c.0.s8 %v651
    %v653 = vlaneseq
    %v654 = vshrl.u32 %v653, 7
    %v655 = vsub.s32 %v652, %v654
    %v656 = vrot.slane %v642, %v655
    %v657 = vcombine.low %v649, %v656
    %v658 = vsel %vm315, %v640, 0
    %v660 = vsel %vm315, %v657, 0
    %662 = vmatprep.subr.mxu0 0.0
    %663 = vmatpush1.msra.mxu0 %v605
    %664 = vmatprep.subr.mxu0 0.0
    %665 = vmatpush1.msra.mxu0 %v606
    %666 = vmatprep.subr.mxu0 0.0
    %667 = vmatpush1.msra.mxu0 %v607
    %668 = vmatprep.subr.mxu0 0.0
    %669 = vmatpush1.msra.mxu0 %v608
    %670 = vmatprep.subr.mxu0 0.0
    %671 = vmatpush1.msra.mxu0 0.0
    %672 = vmatprep.subr.mxu0 0.0
    %673 = vmatpush1.msra.mxu0 0.0
    %674 = vmatprep.subr.mxu0 0.0
    %675 = vmatpush1.msra.mxu0 0.0
    %676 = vmatprep.subr.mxu0 0.0
    %677 = vmatpush1.msra.mxu0 0.0
    %678 = vmatprep.subr.mxu0 0.0
    %679 = vmatpush1.msra.mxu0 0.0
    %680 = vmatprep.subr.mxu0 0.0
    %681 = vmatpush1.msra.mxu0 0.0
    %682 = vmatprep.subr.mxu0 0.0
    %683 = vmatpush1.msra.mxu0 0.0
    %684 = vmatprep.subr.mxu0 0.0
    %685 = vmatpush1.msra.mxu0 0.0
    %686 = vmatprep.subr.mxu0 0.0
    %687 = vmatpush1.msra.mxu0 0.0
    %688 = vmatprep.subr.mxu0 0.0
    %689 = vmatpush1.msra.mxu0 0.0
    %690 = vmatprep.subr.mxu0 0.0
    %691 = vmatpush1.msra.mxu0 0.0
    %692 = vmatprep.subr.mxu0 0.0
    %693 = vmatpush1.msra.mxu0 0.0
    %694 = vmatprep.subr.mxu0 0.0
    %695 = vmatpush1.msra.mxu0 0.0
    %696 = vmatprep.subr.mxu0 0.0
    %697 = vmatpush1.msra.mxu0 0.0
    %698 = vmatprep.subr.mxu0 0.0
    %699 = vmatpush1.msra.mxu0 0.0
    %700 = vmatprep.subr.mxu0 0.0
    %701 = vmatpush1.msra.mxu0 0.0
    %702 = vmatprep.subr.mxu0 0.0
    %703 = vmatpush1.msra.mxu0 0.0
    %704 = vmatprep.subr.mxu0 0.0
    %705 = vmatpush1.msra.mxu0 0.0
    %706 = vmatprep.subr.mxu0 0.0
    %707 = vmatpush1.msra.mxu0 0.0
    %708 = vmatprep.subr.mxu0 0.0
    %709 = vmatpush1.msra.mxu0 0.0
    %710 = vmatprep.subr.mxu0 0.0
    %711 = vmatpush1.msra.mxu0 0.0
    %712 = vmatprep.subr.mxu0 0.0
    %713 = vmatpush1.msra.mxu0 0.0
    %714 = vmatprep.subr.mxu0 0.0
    %715 = vmatpush1.msra.mxu0 0.0
    %716 = vmatprep.subr.mxu0 0.0
    %717 = vmatpush1.msra.mxu0 0.0
    %718 = vmatprep.subr.mxu0 0.0
    %719 = vmatpush1.msra.mxu0 0.0
    %720 = vmatprep.subr.mxu0 0.0
    %721 = vmatpush1.msra.mxu0 0.0
    %722 = vmatprep.subr.mxu0 0.0
    %723 = vmatpush1.msra.mxu0 0.0
    %724 = vmatprep.subr.mxu0 0.0
    %725 = vmatpush1.msra.mxu0 0.0
    %726 = vmatprep.mubr.f32.mxu0 0.0
    %727 = vmatmul.mubr.f32.gmra.mrb[0].mxu0 %v658
    %v728 = vpop.f32.mrb[0].mxu0
    %v729 = vadd.f32 %v614, %v728
    %v730 = vpop.f32.mrb[0].mxu0
    %731 = vmatprep.mubr.f32.mxu0 0.0
    %732 = vmatmul.mubr.f32.gmra.mrb[0].mxu0 %v660
    %v733 = vpop.f32.mrb[0].mxu0
    %v734 = vadd.f32 %v614, %v733
    %v735 = vpop.f32.mrb[0].mxu0
    %736 = vdwg.mxu0
    %v739 = vcombine.high %v729, %v729
    %v741 = vunpack.c.l.s4 1983009808
    %v742 = vunpack.c.0.s8 %v741
    %v743 = vlaneseq
    %v744 = vshrl.u32 %v743, 7
    %v745 = vsub.s32 %v742, %v744
    %v746 = vrot.slane %v729, %v745
    %v748 = vunpack.c.l.s4 1983009808
    %v749 = vunpack.c.0.s8 %v748
    %v750 = vlaneseq
    %v751 = vshrl.u32 %v750, 7
    %v752 = vsub.s32 %v749, %v751
    %v753 = vrot.slane %v739, %v752
    %v754 = vcombine.high %v746, %v746
    %v755 = vcombine.high %v753, %v753
    %v756 = vcombine.high %v734, %v734
    %v758 = vunpack.c.l.s4 1983009808
    %v759 = vunpack.c.0.s8 %v758
    %v760 = vlaneseq
    %v761 = vshrl.u32 %v760, 7
    %v762 = vsub.s32 %v759, %v761
    %v763 = vrot.slane %v734, %v762
    %v765 = vunpack.c.l.s4 1983009808
    %v766 = vunpack.c.0.s8 %v765
    %v767 = vlaneseq
    %v768 = vshrl.u32 %v767, 7
    %v769 = vsub.s32 %v766, %v768
    %v770 = vrot.slane %v756, %v769
    %v771 = vcombine.high %v763, %v763
    %v772 = vcombine.high %v770, %v770
    %v781 = vld [vmem:[%s6] sm:$0xff]
    %v782 = vld [vmem:[%s6 + $0x8] sm:$0xff]
    %v783 = vld [vmem:[%s6 + $0x10] sm:$0xff]
    %v784 = vld [vmem:[%s6 + $0x18] sm:$0xff]
    %v786 = vsel %vm315, 0.0, 0
    %788 = vmatprep.subr.mxu0 0.0
    %789 = vmatpush1.msra.mxu0 %v781
    %790 = vmatprep.subr.mxu0 0.0
    %791 = vmatpush1.msra.mxu0 %v782
    %792 = vmatprep.subr.mxu0 0.0
    %793 = vmatpush1.msra.mxu0 %v783
    %794 = vmatprep.subr.mxu0 0.0
    %795 = vmatpush1.msra.mxu0 %v784
    %796 = vmatprep.subr.mxu0 0.0
    %797 = vmatpush1.msra.mxu0 0.0
    %798 = vmatprep.subr.mxu0 0.0
    %799 = vmatpush1.msra.mxu0 0.0
    %800 = vmatprep.subr.mxu0 0.0
    %801 = vmatpush1.msra.mxu0 0.0
    %802 = vmatprep.subr.mxu0 0.0
    %803 = vmatpush1.msra.mxu0 0.0
    %804 = vmatprep.subr.mxu0 0.0
    %805 = vmatpush1.msra.mxu0 0.0
    %806 = vmatprep.subr.mxu0 0.0
    %807 = vmatpush1.msra.mxu0 0.0
    %808 = vmatprep.subr.mxu0 0.0
    %809 = vmatpush1.msra.mxu0 0.0
    %810 = vmatprep.subr.mxu0 0.0
    %811 = vmatpush1.msra.mxu0 0.0
    %812 = vmatprep.subr.mxu0 0.0
    %813 = vmatpush1.msra.mxu0 0.0
    %814 = vmatprep.subr.mxu0 0.0
    %815 = vmatpush1.msra.mxu0 0.0
    %816 = vmatprep.subr.mxu0 0.0
    %817 = vmatpush1.msra.mxu0 0.0
    %818 = vmatprep.subr.mxu0 0.0
    %819 = vmatpush1.msra.mxu0 0.0
    %820 = vmatprep.subr.mxu0 0.0
    %821 = vmatpush1.msra.mxu0 0.0
    %822 = vmatprep.subr.mxu0 0.0
    %823 = vmatpush1.msra.mxu0 0.0
    %824 = vmatprep.subr.mxu0 0.0
    %825 = vmatpush1.msra.mxu0 0.0
    %826 = vmatprep.subr.mxu0 0.0
    %827 = vmatpush1.msra.mxu0 0.0
    %828 = vmatprep.subr.mxu0 0.0
    %829 = vmatpush1.msra.mxu0 0.0
    %830 = vmatprep.subr.mxu0 0.0
    %831 = vmatpush1.msra.mxu0 0.0
    %832 = vmatprep.subr.mxu0 0.0
    %833 = vmatpush1.msra.mxu0 0.0
    %834 = vmatprep.subr.mxu0 0.0
    %835 = vmatpush1.msra.mxu0 0.0
    %836 = vmatprep.subr.mxu0 0.0
    %837 = vmatpush1.msra.mxu0 0.0
    %838 = vmatprep.subr.mxu0 0.0
    %839 = vmatpush1.msra.mxu0 0.0
    %840 = vmatprep.subr.mxu0 0.0
    %841 = vmatpush1.msra.mxu0 0.0
    %842 = vmatprep.subr.mxu0 0.0
    %843 = vmatpush1.msra.mxu0 0.0
    %844 = vmatprep.subr.mxu0 0.0
    %845 = vmatpush1.msra.mxu0 0.0
    %846 = vmatprep.subr.mxu0 0.0
    %847 = vmatpush1.msra.mxu0 0.0
    %848 = vmatprep.subr.mxu0 0.0
    %849 = vmatpush1.msra.mxu0 0.0
    %850 = vmatprep.subr.mxu0 0.0
    %851 = vmatpush1.msra.mxu0 0.0
    %852 = vmatprep.mubr.f32.mxu0 0.0
    %853 = vmatmul.mubr.f32.gmra.mrb[0].mxu0 %v786
    %v854 = vpop.f32.mrb[0].mxu0
    %v855 = vadd.f32 0.0, %v854
    %v856 = vpop.f32.mrb[0].mxu0
    %857 = vdwg.mxu0
    %v858 = vadd.f32 %v746, %v855
    %v859 = vxor.u32 %v858, 2147483648
    %v860 = vmul.f32 %v859, 1.442695
    %v861 = vpow.pop %v860
    %v862 = vadd.f32 %v861, 1.0
    %v863 = vrcp.pop %v862
    %v864 = vmul.f32 1.0, %v863
    %v865 = vtanh.pop %v858
    %v866 = vmul.f32 %v864, 0.0
    %868 = vrot.lane.b32.xlu0 %v865, 32
    %v869 = vpop.permute.xlu0 %868
    %v871 = vmul.f32 %v864, %v869
    %873 = vrot.lane.b32.xlu0 %v871, 32
    %v874 = vpop.permute.xlu0 %873
    %v876 = vadd.f32 %v866, %v874
    %v877 = vtanh.pop %v876
    %879 = vrot.lane.b32.xlu0 %v877, 32
    %v880 = vpop.permute.xlu0 %879
    %v882 = vmul.f32 %v864, %v880
    %v885 = vunpack.c.l.s4 1983009808
    %v886 = vunpack.c.0.s8 %v885
    %v887 = vlaneseq
    %v888 = vshrl.u32 %v887, 7
    %v889 = vsub.s32 %v886, %v888
    %v890 = vrot.slane %v882, %v889
    %891 = vrot.lane.b32.xlu0 %v890, 64
    %v892 = vpop.permute.xlu0 %891
    %v894 = vadd.f32 %v261, %v892
    %v895 = vsel %vm315, %v892, 0
    %897 = vmatprep.subr.mxu0 0.0
    %898 = vmatpush1.msra.mxu0 %v781
    %899 = vmatprep.subr.mxu0 0.0
    %900 = vmatpush1.msra.mxu0 %v782
    %901 = vmatprep.subr.mxu0 0.0
    %902 = vmatpush1.msra.mxu0 %v783
    %903 = vmatprep.subr.mxu0 0.0
    %904 = vmatpush1.msra.mxu0 %v784
    %905 = vmatprep.subr.mxu0 0.0
    %906 = vmatpush1.msra.mxu0 0.0
    %907 = vmatprep.subr.mxu0 0.0
    %908 = vmatpush1.msra.mxu0 0.0
    %909 = vmatprep.subr.mxu0 0.0
    %910 = vmatpush1.msra.mxu0 0.0
    %911 = vmatprep.subr.mxu0 0.0
    %912 = vmatpush1.msra.mxu0 0.0
    %913 = vmatprep.subr.mxu0 0.0
    %914 = vmatpush1.msra.mxu0 0.0
    %915 = vmatprep.subr.mxu0 0.0
    %916 = vmatpush1.msra.mxu0 0.0
    %917 = vmatprep.subr.mxu0 0.0
    %918 = vmatpush1.msra.mxu0 0.0
    %919 = vmatprep.subr.mxu0 0.0
    %920 = vmatpush1.msra.mxu0 0.0
    %921 = vmatprep.subr.mxu0 0.0
    %922 = vmatpush1.msra.mxu0 0.0
    %923 = vmatprep.subr.mxu0 0.0
    %924 = vmatpush1.msra.mxu0 0.0
    %925 = vmatprep.subr.mxu0 0.0
    %926 = vmatpush1.msra.mxu0 0.0
    %927 = vmatprep.subr.mxu0 0.0
    %928 = vmatpush1.msra.mxu0 0.0
    %929 = vmatprep.subr.mxu0 0.0
    %930 = vmatpush1.msra.mxu0 0.0
    %931 = vmatprep.subr.mxu0 0.0
    %932 = vmatpush1.msra.mxu0 0.0
    %933 = vmatprep.subr.mxu0 0.0
    %934 = vmatpush1.msra.mxu0 0.0
    %935 = vmatprep.subr.mxu0 0.0
    %936 = vmatpush1.msra.mxu0 0.0
    %937 = vmatprep.subr.mxu0 0.0
    %938 = vmatpush1.msra.mxu0 0.0
    %939 = vmatprep.subr.mxu0 0.0
    %940 = vmatpush1.msra.mxu0 0.0
    %941 = vmatprep.subr.mxu0 0.0
    %942 = vmatpush1.msra.mxu0 0.0
    %943 = vmatprep.subr.mxu0 0.0
    %944 = vmatpush1.msra.mxu0 0.0
    %945 = vmatprep.subr.mxu0 0.0
    %946 = vmatpush1.msra.mxu0 0.0
    %947 = vmatprep.subr.mxu0 0.0
    %948 = vmatpush1.msra.mxu0 0.0
    %949 = vmatprep.subr.mxu0 0.0
    %950 = vmatpush1.msra.mxu0 0.0
    %951 = vmatprep.subr.mxu0 0.0
    %952 = vmatpush1.msra.mxu0 0.0
    %953 = vmatprep.subr.mxu0 0.0
    %954 = vmatpush1.msra.mxu0 0.0
    %955 = vmatprep.subr.mxu0 0.0
    %956 = vmatpush1.msra.mxu0 0.0
    %957 = vmatprep.subr.mxu0 0.0
    %958 = vmatpush1.msra.mxu0 0.0
    %959 = vmatprep.subr.mxu0 0.0
    %960 = vmatpush1.msra.mxu0 0.0
    %961 = vmatprep.mubr.f32.mxu0 0.0
    %962 = vmatmul.mubr.f32.gmra.mrb[0].mxu0 %v895
    %v963 = vpop.f32.mrb[0].mxu0
    %v964 = vadd.f32 0.0, %v963
    %v965 = vpop.f32.mrb[0].mxu0
    %966 = vdwg.mxu0
    %v967 = vadd.f32 %v754, %v964
    %v968 = vxor.u32 %v967, 2147483648
    %v969 = vmul.f32 %v968, 1.442695
    %v970 = vpow.pop %v969
    %v971 = vadd.f32 %v970, 1.0
    %v972 = vrcp.pop %v971
    %v973 = vmul.f32 1.0, %v972
    %v974 = vtanh.pop %v967
    %v975 = vmul.f32 %v973, %v876
    %977 = vrot.lane.b32.xlu0 %v974, 32
    %v978 = vpop.permute.xlu0 %977
    %v980 = vmul.f32 %v973, %v978
    %982 = vrot.lane.b32.xlu0 %v980, 32
    %v983 = vpop.permute.xlu0 %982
    %v985 = vadd.f32 %v975, %v983
    %v986 = vtanh.pop %v985
    %988 = vrot.lane.b32.xlu0 %v986, 32
    %v989 = vpop.permute.xlu0 %988
    %v991 = vmul.f32 %v973, %v989
    %v994 = vunpack.c.l.s4 1983009808
    %v995 = vunpack.c.0.s8 %v994
    %v996 = vlaneseq
    %v997 = vshrl.u32 %v996, 7
    %v998 = vsub.s32 %v995, %v997
    %v999 = vrot.slane %v991, %v998
    %1000 = vrot.lane.b32.xlu0 %v999, 64
    %v1001 = vpop.permute.xlu0 %1000
    %v1003 = vadd.f32 %v262, %v1001
    %v1004 = vsel %vm315, %v1001, 0
    %1006 = vmatprep.subr.mxu0 0.0
    %1007 = vmatpush1.msra.mxu0 %v781
    %1008 = vmatprep.subr.mxu0 0.0
    %1009 = vmatpush1.msra.mxu0 %v782
    %1010 = vmatprep.subr.mxu0 0.0
    %1011 = vmatpush1.msra.mxu0 %v783
    %1012 = vmatprep.subr.mxu0 0.0
    %1013 = vmatpush1.msra.mxu0 %v784
    %1014 = vmatprep.subr.mxu0 0.0
    %1015 = vmatpush1.msra.mxu0 0.0
    %1016 = vmatprep.subr.mxu0 0.0
    %1017 = vmatpush1.msra.mxu0 0.0
    %1018 = vmatprep.subr.mxu0 0.0
    %1019 = vmatpush1.msra.mxu0 0.0
    %1020 = vmatprep.subr.mxu0 0.0
    %1021 = vmatpush1.msra.mxu0 0.0
    %1022 = vmatprep.subr.mxu0 0.0
    %1023 = vmatpush1.msra.mxu0 0.0
    %1024 = vmatprep.subr.mxu0 0.0
    %1025 = vmatpush1.msra.mxu0 0.0
    %1026 = vmatprep.subr.mxu0 0.0
    %1027 = vmatpush1.msra.mxu0 0.0
    %1028 = vmatprep.subr.mxu0 0.0
    %1029 = vmatpush1.msra.mxu0 0.0
    %1030 = vmatprep.subr.mxu0 0.0
    %1031 = vmatpush1.msra.mxu0 0.0
    %1032 = vmatprep.subr.mxu0 0.0
    %1033 = vmatpush1.msra.mxu0 0.0
    %1034 = vmatprep.subr.mxu0 0.0
    %1035 = vmatpush1.msra.mxu0 0.0
    %1036 = vmatprep.subr.mxu0 0.0
    %1037 = vmatpush1.msra.mxu0 0.0
    %1038 = vmatprep.subr.mxu0 0.0
    %1039 = vmatpush1.msra.mxu0 0.0
    %1040 = vmatprep.subr.mxu0 0.0
    %1041 = vmatpush1.msra.mxu0 0.0
    %1042 = vmatprep.subr.mxu0 0.0
    %1043 = vmatpush1.msra.mxu0 0.0
    %1044 = vmatprep.subr.mxu0 0.0
    %1045 = vmatpush1.msra.mxu0 0.0
    %1046 = vmatprep.subr.mxu0 0.0
    %1047 = vmatpush1.msra.mxu0 0.0
    %1048 = vmatprep.subr.mxu0 0.0
    %1049 = vmatpush1.msra.mxu0 0.0
    %1050 = vmatprep.subr.mxu0 0.0
    %1051 = vmatpush1.msra.mxu0 0.0
    %1052 = vmatprep.subr.mxu0 0.0
    %1053 = vmatpush1.msra.mxu0 0.0
    %1054 = vmatprep.subr.mxu0 0.0
    %1055 = vmatpush1.msra.mxu0 0.0
    %1056 = vmatprep.subr.mxu0 0.0
    %1057 = vmatpush1.msra.mxu0 0.0
    %1058 = vmatprep.subr.mxu0 0.0
    %1059 = vmatpush1.msra.mxu0 0.0
    %1060 = vmatprep.subr.mxu0 0.0
    %1061 = vmatpush1.msra.mxu0 0.0
    %1062 = vmatprep.subr.mxu0 0.0
    %1063 = vmatpush1.msra.mxu0 0.0
    %1064 = vmatprep.subr.mxu0 0.0
    %1065 = vmatpush1.msra.mxu0 0.0
    %1066 = vmatprep.subr.mxu0 0.0
    %1067 = vmatpush1.msra.mxu0 0.0
    %1068 = vmatprep.subr.mxu0 0.0
    %1069 = vmatpush1.msra.mxu0 0.0
    %1070 = vmatprep.mubr.f32.mxu0 0.0
    %1071 = vmatmul.mubr.f32.gmra.mrb[0].mxu0 %v1004
    %v1072 = vpop.f32.mrb[0].mxu0
    %v1073 = vadd.f32 0.0, %v1072
    %v1074 = vpop.f32.mrb[0].mxu0
    %1075 = vdwg.mxu0
    %v1076 = vadd.f32 %v753, %v1073
    %v1077 = vxor.u32 %v1076, 2147483648
    %v1078 = vmul.f32 %v1077, 1.442695
    %v1079 = vpow.pop %v1078
    %v1080 = vadd.f32 %v1079, 1.0
    %v1081 = vrcp.pop %v1080
    %v1082 = vmul.f32 1.0, %v1081
    %v1083 = vtanh.pop %v1076
    %v1084 = vmul.f32 %v1082, %v985
    %1086 = vrot.lane.b32.xlu0 %v1083, 32
    %v1087 = vpop.permute.xlu0 %1086
    %v1089 = vmul.f32 %v1082, %v1087
    %1091 = vrot.lane.b32.xlu0 %v1089, 32
    %v1092 = vpop.permute.xlu0 %1091
    %v1094 = vadd.f32 %v1084, %v1092
    %v1095 = vtanh.pop %v1094
    %1097 = vrot.lane.b32.xlu0 %v1095, 32
    %v1098 = vpop.permute.xlu0 %1097
    %v1100 = vmul.f32 %v1082, %v1098
    %v1103 = vunpack.c.l.s4 1983009808
    %v1104 = vunpack.c.0.s8 %v1103
    %v1105 = vlaneseq
    %v1106 = vshrl.u32 %v1105, 7
    %v1107 = vsub.s32 %v1104, %v1106
    %v1108 = vrot.slane %v1100, %v1107
    %1109 = vrot.lane.b32.xlu0 %v1108, 64
    %v1110 = vpop.permute.xlu0 %1109
    %v1112 = vadd.f32 %v263, %v1110
    %v1113 = vsel %vm315, %v1110, 0
    %1115 = vmatprep.subr.mxu0 0.0
    %1116 = vmatpush1.msra.mxu0 %v781
    %1117 = vmatprep.subr.mxu0 0.0
    %1118 = vmatpush1.msra.mxu0 %v782
    %1119 = vmatprep.subr.mxu0 0.0
    %1120 = vmatpush1.msra.mxu0 %v783
    %1121 = vmatprep.subr.mxu0 0.0
    %1122 = vmatpush1.msra.mxu0 %v784
    %1123 = vmatprep.subr.mxu0 0.0
    %1124 = vmatpush1.msra.mxu0 0.0
    %1125 = vmatprep.subr.mxu0 0.0
    %1126 = vmatpush1.msra.mxu0 0.0
    %1127 = vmatprep.subr.mxu0 0.0
    %1128 = vmatpush1.msra.mxu0 0.0
    %1129 = vmatprep.subr.mxu0 0.0
    %1130 = vmatpush1.msra.mxu0 0.0
    %1131 = vmatprep.subr.mxu0 0.0
    %1132 = vmatpush1.msra.mxu0 0.0
    %1133 = vmatprep.subr.mxu0 0.0
    %1134 = vmatpush1.msra.mxu0 0.0
    %1135 = vmatprep.subr.mxu0 0.0
    %1136 = vmatpush1.msra.mxu0 0.0
    %1137 = vmatprep.subr.mxu0 0.0
    %1138 = vmatpush1.msra.mxu0 0.0
    %1139 = vmatprep.subr.mxu0 0.0
    %1140 = vmatpush1.msra.mxu0 0.0
    %1141 = vmatprep.subr.mxu0 0.0
    %1142 = vmatpush1.msra.mxu0 0.0
    %1143 = vmatprep.subr.mxu0 0.0
    %1144 = vmatpush1.msra.mxu0 0.0
    %1145 = vmatprep.subr.mxu0 0.0
    %1146 = vmatpush1.msra.mxu0 0.0
    %1147 = vmatprep.subr.mxu0 0.0
    %1148 = vmatpush1.msra.mxu0 0.0
    %1149 = vmatprep.subr.mxu0 0.0
    %1150 = vmatpush1.msra.mxu0 0.0
    %1151 = vmatprep.subr.mxu0 0.0
    %1152 = vmatpush1.msra.mxu0 0.0
    %1153 = vmatprep.subr.mxu0 0.0
    %1154 = vmatpush1.msra.mxu0 0.0
    %1155 = vmatprep.subr.mxu0 0.0
    %1156 = vmatpush1.msra.mxu0 0.0
    %1157 = vmatprep.subr.mxu0 0.0
    %1158 = vmatpush1.msra.mxu0 0.0
    %1159 = vmatprep.subr.mxu0 0.0
    %1160 = vmatpush1.msra.mxu0 0.0
    %1161 = vmatprep.subr.mxu0 0.0
    %1162 = vmatpush1.msra.mxu0 0.0
    %1163 = vmatprep.subr.mxu0 0.0
    %1164 = vmatpush1.msra.mxu0 0.0
    %1165 = vmatprep.subr.mxu0 0.0
    %1166 = vmatpush1.msra.mxu0 0.0
    %1167 = vmatprep.subr.mxu0 0.0
    %1168 = vmatpush1.msra.mxu0 0.0
    %1169 = vmatprep.subr.mxu0 0.0
    %1170 = vmatpush1.msra.mxu0 0.0
    %1171 = vmatprep.subr.mxu0 0.0
    %1172 = vmatpush1.msra.mxu0 0.0
    %1173 = vmatprep.subr.mxu0 0.0
    %1174 = vmatpush1.msra.mxu0 0.0
    %1175 = vmatprep.subr.mxu0 0.0
    %1176 = vmatpush1.msra.mxu0 0.0
    %1177 = vmatprep.subr.mxu0 0.0
    %1178 = vmatpush1.msra.mxu0 0.0
    %1179 = vmatprep.mubr.f32.mxu0 0.0
    %1180 = vmatmul.mubr.f32.gmra.mrb[0].mxu0 %v1113
    %v1181 = vpop.f32.mrb[0].mxu0
    %v1182 = vadd.f32 0.0, %v1181
    %v1183 = vpop.f32.mrb[0].mxu0
    %1184 = vdwg.mxu0
    %v1185 = vadd.f32 %v755, %v1182
    %v1186 = vxor.u32 %v1185, 2147483648
    %v1187 = vmul.f32 %v1186, 1.442695
    %v1188 = vpow.pop %v1187
    %v1189 = vadd.f32 %v1188, 1.0
    %v1190 = vrcp.pop %v1189
    %v1191 = vmul.f32 1.0, %v1190
    %v1192 = vtanh.pop %v1185
    %v1193 = vmul.f32 %v1191, %v1094
    %1195 = vrot.lane.b32.xlu0 %v1192, 32
    %v1196 = vpop.permute.xlu0 %1195
    %v1198 = vmul.f32 %v1191, %v1196
    %1200 = vrot.lane.b32.xlu0 %v1198, 32
    %v1201 = vpop.permute.xlu0 %1200
    %v1203 = vadd.f32 %v1193, %v1201
    %v1204 = vtanh.pop %v1203
    %1206 = vrot.lane.b32.xlu0 %v1204, 32
    %v1207 = vpop.permute.xlu0 %1206
    %v1209 = vmul.f32 %v1191, %v1207
    %v1212 = vunpack.c.l.s4 1983009808
    %v1213 = vunpack.c.0.s8 %v1212
    %v1214 = vlaneseq
    %v1215 = vshrl.u32 %v1214, 7
    %v1216 = vsub.s32 %v1213, %v1215
    %v1217 = vrot.slane %v1209, %v1216
    %1218 = vrot.lane.b32.xlu0 %v1217, 64
    %v1219 = vpop.permute.xlu0 %1218
    %v1221 = vadd.f32 %v264, %v1219
    %v1222 = vsel %vm315, %v1219, 0
    %1224 = vmatprep.subr.mxu0 0.0
    %1225 = vmatpush1.msra.mxu0 %v781
    %1226 = vmatprep.subr.mxu0 0.0
    %1227 = vmatpush1.msra.mxu0 %v782
    %1228 = vmatprep.subr.mxu0 0.0
    %1229 = vmatpush1.msra.mxu0 %v783
    %1230 = vmatprep.subr.mxu0 0.0
    %1231 = vmatpush1.msra.mxu0 %v784
    %1232 = vmatprep.subr.mxu0 0.0
    %1233 = vmatpush1.msra.mxu0 0.0
    %1234 = vmatprep.subr.mxu0 0.0
    %1235 = vmatpush1.msra.mxu0 0.0
    %1236 = vmatprep.subr.mxu0 0.0
    %1237 = vmatpush1.msra.mxu0 0.0
    %1238 = vmatprep.subr.mxu0 0.0
    %1239 = vmatpush1.msra.mxu0 0.0
    %1240 = vmatprep.subr.mxu0 0.0
    %1241 = vmatpush1.msra.mxu0 0.0
    %1242 = vmatprep.subr.mxu0 0.0
    %1243 = vmatpush1.msra.mxu0 0.0
    %1244 = vmatprep.subr.mxu0 0.0
    %1245 = vmatpush1.msra.mxu0 0.0
    %1246 = vmatprep.subr.mxu0 0.0
    %1247 = vmatpush1.msra.mxu0 0.0
    %1248 = vmatprep.subr.mxu0 0.0
    %1249 = vmatpush1.msra.mxu0 0.0
    %1250 = vmatprep.subr.mxu0 0.0
    %1251 = vmatpush1.msra.mxu0 0.0
    %1252 = vmatprep.subr.mxu0 0.0
    %1253 = vmatpush1.msra.mxu0 0.0
    %1254 = vmatprep.subr.mxu0 0.0
    %1255 = vmatpush1.msra.mxu0 0.0
    %1256 = vmatprep.subr.mxu0 0.0
    %1257 = vmatpush1.msra.mxu0 0.0
    %1258 = vmatprep.subr.mxu0 0.0
    %1259 = vmatpush1.msra.mxu0 0.0
    %1260 = vmatprep.subr.mxu0 0.0
    %1261 = vmatpush1.msra.mxu0 0.0
    %1262 = vmatprep.subr.mxu0 0.0
    %1263 = vmatpush1.msra.mxu0 0.0
    %1264 = vmatprep.subr.mxu0 0.0
    %1265 = vmatpush1.msra.mxu0 0.0
    %1266 = vmatprep.subr.mxu0 0.0
    %1267 = vmatpush1.msra.mxu0 0.0
    %1268 = vmatprep.subr.mxu0 0.0
    %1269 = vmatpush1.msra.mxu0 0.0
    %1270 = vmatprep.subr.mxu0 0.0
    %1271 = vmatpush1.msra.mxu0 0.0
    %1272 = vmatprep.subr.mxu0 0.0
    %1273 = vmatpush1.msra.mxu0 0.0
    %1274 = vmatprep.subr.mxu0 0.0
    %1275 = vmatpush1.msra.mxu0 0.0
    %1276 = vmatprep.subr.mxu0 0.0
    %1277 = vmatpush1.msra.mxu0 0.0
    %1278 = vmatprep.subr.mxu0 0.0
    %1279 = vmatpush1.msra.mxu0 0.0
    %1280 = vmatprep.subr.mxu0 0.0
    %1281 = vmatpush1.msra.mxu0 0.0
    %1282 = vmatprep.subr.mxu0 0.0
    %1283 = vmatpush1.msra.mxu0 0.0
    %1284 = vmatprep.subr.mxu0 0.0
    %1285 = vmatpush1.msra.mxu0 0.0
    %1286 = vmatprep.subr.mxu0 0.0
    %1287 = vmatpush1.msra.mxu0 0.0
    %1288 = vmatprep.mubr.f32.mxu0 0.0
    %1289 = vmatmul.mubr.f32.gmra.mrb[0].mxu0 %v1222
    %v1290 = vpop.f32.mrb[0].mxu0
    %v1291 = vadd.f32 0.0, %v1290
    %v1292 = vpop.f32.mrb[0].mxu0
    %1293 = vdwg.mxu0
    %v1294 = vadd.f32 %v763, %v1291
    %v1295 = vxor.u32 %v1294, 2147483648
    %v1296 = vmul.f32 %v1295, 1.442695
    %v1297 = vpow.pop %v1296
    %v1298 = vadd.f32 %v1297, 1.0
    %v1299 = vrcp.pop %v1298
    %v1300 = vmul.f32 1.0, %v1299
    %v1301 = vtanh.pop %v1294
    %v1302 = vmul.f32 %v1300, %v1203
    %1304 = vrot.lane.b32.xlu0 %v1301, 32
    %v1305 = vpop.permute.xlu0 %1304
    %v1307 = vmul.f32 %v1300, %v1305
    %1309 = vrot.lane.b32.xlu0 %v1307, 32
    %v1310 = vpop.permute.xlu0 %1309
    %v1312 = vadd.f32 %v1302, %v1310
    %v1313 = vtanh.pop %v1312
    %1315 = vrot.lane.b32.xlu0 %v1313, 32
    %v1316 = vpop.permute.xlu0 %1315
    %v1318 = vmul.f32 %v1300, %v1316
    %v1321 = vunpack.c.l.s4 1983009808
    %v1322 = vunpack.c.0.s8 %v1321
    %v1323 = vlaneseq
    %v1324 = vshrl.u32 %v1323, 7
    %v1325 = vsub.s32 %v1322, %v1324
    %v1326 = vrot.slane %v1318, %v1325
    %1327 = vrot.lane.b32.xlu0 %v1326, 64
    %v1328 = vpop.permute.xlu0 %1327
    %v1330 = vadd.f32 %v265, %v1328
    %v1331 = vsel %vm315, %v1328, 0
    %1333 = vmatprep.subr.mxu0 0.0
    %1334 = vmatpush1.msra.mxu0 %v781
    %1335 = vmatprep.subr.mxu0 0.0
    %1336 = vmatpush1.msra.mxu0 %v782
    %1337 = vmatprep.subr.mxu0 0.0
    %1338 = vmatpush1.msra.mxu0 %v783
    %1339 = vmatprep.subr.mxu0 0.0
    %1340 = vmatpush1.msra.mxu0 %v784
    %1341 = vmatprep.subr.mxu0 0.0
    %1342 = vmatpush1.msra.mxu0 0.0
    %1343 = vmatprep.subr.mxu0 0.0
    %1344 = vmatpush1.msra.mxu0 0.0
    %1345 = vmatprep.subr.mxu0 0.0
    %1346 = vmatpush1.msra.mxu0 0.0
    %1347 = vmatprep.subr.mxu0 0.0
    %1348 = vmatpush1.msra.mxu0 0.0
    %1349 = vmatprep.subr.mxu0 0.0
    %1350 = vmatpush1.msra.mxu0 0.0
    %1351 = vmatprep.subr.mxu0 0.0
    %1352 = vmatpush1.msra.mxu0 0.0
    %1353 = vmatprep.subr.mxu0 0.0
    %1354 = vmatpush1.msra.mxu0 0.0
    %1355 = vmatprep.subr.mxu0 0.0
    %1356 = vmatpush1.msra.mxu0 0.0
    %1357 = vmatprep.subr.mxu0 0.0
    %1358 = vmatpush1.msra.mxu0 0.0
    %1359 = vmatprep.subr.mxu0 0.0
    %1360 = vmatpush1.msra.mxu0 0.0
    %1361 = vmatprep.subr.mxu0 0.0
    %1362 = vmatpush1.msra.mxu0 0.0
    %1363 = vmatprep.subr.mxu0 0.0
    %1364 = vmatpush1.msra.mxu0 0.0
    %1365 = vmatprep.subr.mxu0 0.0
    %1366 = vmatpush1.msra.mxu0 0.0
    %1367 = vmatprep.subr.mxu0 0.0
    %1368 = vmatpush1.msra.mxu0 0.0
    %1369 = vmatprep.subr.mxu0 0.0
    %1370 = vmatpush1.msra.mxu0 0.0
    %1371 = vmatprep.subr.mxu0 0.0
    %1372 = vmatpush1.msra.mxu0 0.0
    %1373 = vmatprep.subr.mxu0 0.0
    %1374 = vmatpush1.msra.mxu0 0.0
    %1375 = vmatprep.subr.mxu0 0.0
    %1376 = vmatpush1.msra.mxu0 0.0
    %1377 = vmatprep.subr.mxu0 0.0
    %1378 = vmatpush1.msra.mxu0 0.0
    %1379 = vmatprep.subr.mxu0 0.0
    %1380 = vmatpush1.msra.mxu0 0.0
    %1381 = vmatprep.subr.mxu0 0.0
    %1382 = vmatpush1.msra.mxu0 0.0
    %1383 = vmatprep.subr.mxu0 0.0
    %1384 = vmatpush1.msra.mxu0 0.0
    %1385 = vmatprep.subr.mxu0 0.0
    %1386 = vmatpush1.msra.mxu0 0.0
    %1387 = vmatprep.subr.mxu0 0.0
    %1388 = vmatpush1.msra.mxu0 0.0
    %1389 = vmatprep.subr.mxu0 0.0
    %1390 = vmatpush1.msra.mxu0 0.0
    %1391 = vmatprep.subr.mxu0 0.0
    %1392 = vmatpush1.msra.mxu0 0.0
    %1393 = vmatprep.subr.mxu0 0.0
    %1394 = vmatpush1.msra.mxu0 0.0
    %1395 = vmatprep.subr.mxu0 0.0
    %1396 = vmatpush1.msra.mxu0 0.0
    %1397 = vmatprep.mubr.f32.mxu0 0.0
    %1398 = vmatmul.mubr.f32.gmra.mrb[0].mxu0 %v1331
    %v1399 = vpop.f32.mrb[0].mxu0
    %v1400 = vadd.f32 0.0, %v1399
    %v1401 = vpop.f32.mrb[0].mxu0
    %1402 = vdwg.mxu0
    %v1403 = vadd.f32 %v771, %v1400
    %v1404 = vxor.u32 %v1403, 2147483648
    %v1405 = vmul.f32 %v1404, 1.442695
    %v1406 = vpow.pop %v1405
    %v1407 = vadd.f32 %v1406, 1.0
    %v1408 = vrcp.pop %v1407
    %v1409 = vmul.f32 1.0, %v1408
    %v1410 = vtanh.pop %v1403
    %v1411 = vmul.f32 %v1409, %v1312
    %1413 = vrot.lane.b32.xlu0 %v1410, 32
    %v1414 = vpop.permute.xlu0 %1413
    %v1416 = vmul.f32 %v1409, %v1414
    %1418 = vrot.lane.b32.xlu0 %v1416, 32
    %v1419 = vpop.permute.xlu0 %1418
    %v1421 = vadd.f32 %v1411, %v1419
    %v1422 = vtanh.pop %v1421
    %1424 = vrot.lane.b32.xlu0 %v1422, 32
    %v1425 = vpop.permute.xlu0 %1424
    %v1427 = vmul.f32 %v1409, %v1425
    %v1430 = vunpack.c.l.s4 1983009808
    %v1431 = vunpack.c.0.s8 %v1430
    %v1432 = vlaneseq
    %v1433 = vshrl.u32 %v1432, 7
    %v1434 = vsub.s32 %v1431, %v1433
    %v1435 = vrot.slane %v1427, %v1434
    %1436 = vrot.lane.b32.xlu0 %v1435, 64
    %v1437 = vpop.permute.xlu0 %1436
    %v1439 = vadd.f32 %v266, %v1437
    %v1440 = vsel %vm315, %v1437, 0
    %1442 = vmatprep.subr.mxu0 0.0
    %1443 = vmatpush1.msra.mxu0 %v781
    %1444 = vmatprep.subr.mxu0 0.0
    %1445 = vmatpush1.msra.mxu0 %v782
    %1446 = vmatprep.subr.mxu0 0.0
    %1447 = vmatpush1.msra.mxu0 %v783
    %1448 = vmatprep.subr.mxu0 0.0
    %1449 = vmatpush1.msra.mxu0 %v784
    %1450 = vmatprep.subr.mxu0 0.0
    %1451 = vmatpush1.msra.mxu0 0.0
    %1452 = vmatprep.subr.mxu0 0.0
    %1453 = vmatpush1.msra.mxu0 0.0
    %1454 = vmatprep.subr.mxu0 0.0
    %1455 = vmatpush1.msra.mxu0 0.0
    %1456 = vmatprep.subr.mxu0 0.0
    %1457 = vmatpush1.msra.mxu0 0.0
    %1458 = vmatprep.subr.mxu0 0.0
    %1459 = vmatpush1.msra.mxu0 0.0
    %1460 = vmatprep.subr.mxu0 0.0
    %1461 = vmatpush1.msra.mxu0 0.0
    %1462 = vmatprep.subr.mxu0 0.0
    %1463 = vmatpush1.msra.mxu0 0.0
    %1464 = vmatprep.subr.mxu0 0.0
    %1465 = vmatpush1.msra.mxu0 0.0
    %1466 = vmatprep.subr.mxu0 0.0
    %1467 = vmatpush1.msra.mxu0 0.0
    %1468 = vmatprep.subr.mxu0 0.0
    %1469 = vmatpush1.msra.mxu0 0.0
    %1470 = vmatprep.subr.mxu0 0.0
    %1471 = vmatpush1.msra.mxu0 0.0
    %1472 = vmatprep.subr.mxu0 0.0
    %1473 = vmatpush1.msra.mxu0 0.0
    %1474 = vmatprep.subr.mxu0 0.0
    %1475 = vmatpush1.msra.mxu0 0.0
    %1476 = vmatprep.subr.mxu0 0.0
    %1477 = vmatpush1.msra.mxu0 0.0
    %1478 = vmatprep.subr.mxu0 0.0
    %1479 = vmatpush1.msra.mxu0 0.0
    %1480 = vmatprep.subr.mxu0 0.0
    %1481 = vmatpush1.msra.mxu0 0.0
    %1482 = vmatprep.subr.mxu0 0.0
    %1483 = vmatpush1.msra.mxu0 0.0
    %1484 = vmatprep.subr.mxu0 0.0
    %1485 = vmatpush1.msra.mxu0 0.0
    %1486 = vmatprep.subr.mxu0 0.0
    %1487 = vmatpush1.msra.mxu0 0.0
    %1488 = vmatprep.subr.mxu0 0.0
    %1489 = vmatpush1.msra.mxu0 0.0
    %1490 = vmatprep.subr.mxu0 0.0
    %1491 = vmatpush1.msra.mxu0 0.0
    %1492 = vmatprep.subr.mxu0 0.0
    %1493 = vmatpush1.msra.mxu0 0.0
    %1494 = vmatprep.subr.mxu0 0.0
    %1495 = vmatpush1.msra.mxu0 0.0
    %1496 = vmatprep.subr.mxu0 0.0
    %1497 = vmatpush1.msra.mxu0 0.0
    %1498 = vmatprep.subr.mxu0 0.0
    %1499 = vmatpush1.msra.mxu0 0.0
    %1500 = vmatprep.subr.mxu0 0.0
    %1501 = vmatpush1.msra.mxu0 0.0
    %1502 = vmatprep.subr.mxu0 0.0
    %1503 = vmatpush1.msra.mxu0 0.0
    %1504 = vmatprep.subr.mxu0 0.0
    %1505 = vmatpush1.msra.mxu0 0.0
    %1506 = vmatprep.mubr.f32.mxu0 0.0
    %1507 = vmatmul.mubr.f32.gmra.mrb[0].mxu0 %v1440
    %v1508 = vpop.f32.mrb[0].mxu0
    %v1509 = vadd.f32 0.0, %v1508
    %v1510 = vpop.f32.mrb[0].mxu0
    %1511 = vdwg.mxu0
    %v1512 = vadd.f32 %v770, %v1509
    %v1513 = vxor.u32 %v1512, 2147483648
    %v1514 = vmul.f32 %v1513, 1.442695
    %v1515 = vpow.pop %v1514
    %v1516 = vadd.f32 %v1515, 1.0
    %v1517 = vrcp.pop %v1516
    %v1518 = vmul.f32 1.0, %v1517
    %v1519 = vtanh.pop %v1512
    %v1520 = vmul.f32 %v1518, %v1421
    %1522 = vrot.lane.b32.xlu0 %v1519, 32
    %v1523 = vpop.permute.xlu0 %1522
    %v1525 = vmul.f32 %v1518, %v1523
    %1527 = vrot.lane.b32.xlu0 %v1525, 32
    %v1528 = vpop.permute.xlu0 %1527
    %v1530 = vadd.f32 %v1520, %v1528
    %v1531 = vtanh.pop %v1530
    %1533 = vrot.lane.b32.xlu0 %v1531, 32
    %v1534 = vpop.permute.xlu0 %1533
    %v1536 = vmul.f32 %v1518, %v1534
    %v1539 = vunpack.c.l.s4 1983009808
    %v1540 = vunpack.c.0.s8 %v1539
    %v1541 = vlaneseq
    %v1542 = vshrl.u32 %v1541, 7
    %v1543 = vsub.s32 %v1540, %v1542
    %v1544 = vrot.slane %v1536, %v1543
    %1545 = vrot.lane.b32.xlu0 %v1544, 64
    %v1546 = vpop.permute.xlu0 %1545
    %v1548 = vadd.f32 %v267, %v1546
    %v1549 = vsel %vm315, %v1546, 0
    %1551 = vmatprep.subr.mxu0 0.0
    %1552 = vmatpush1.msra.mxu0 %v781
    %1553 = vmatprep.subr.mxu0 0.0
    %1554 = vmatpush1.msra.mxu0 %v782
    %1555 = vmatprep.subr.mxu0 0.0
    %1556 = vmatpush1.msra.mxu0 %v783
    %1557 = vmatprep.subr.mxu0 0.0
    %1558 = vmatpush1.msra.mxu0 %v784
    %1559 = vmatprep.subr.mxu0 0.0
    %1560 = vmatpush1.msra.mxu0 0.0
    %1561 = vmatprep.subr.mxu0 0.0
    %1562 = vmatpush1.msra.mxu0 0.0
    %1563 = vmatprep.subr.mxu0 0.0
    %1564 = vmatpush1.msra.mxu0 0.0
    %1565 = vmatprep.subr.mxu0 0.0
    %1566 = vmatpush1.msra.mxu0 0.0
    %1567 = vmatprep.subr.mxu0 0.0
    %1568 = vmatpush1.msra.mxu0 0.0
    %1569 = vmatprep.subr.mxu0 0.0
    %1570 = vmatpush1.msra.mxu0 0.0
    %1571 = vmatprep.subr.mxu0 0.0
    %1572 = vmatpush1.msra.mxu0 0.0
    %1573 = vmatprep.subr.mxu0 0.0
    %1574 = vmatpush1.msra.mxu0 0.0
    %1575 = vmatprep.subr.mxu0 0.0
    %1576 = vmatpush1.msra.mxu0 0.0
    %1577 = vmatprep.subr.mxu0 0.0
    %1578 = vmatpush1.msra.mxu0 0.0
    %1579 = vmatprep.subr.mxu0 0.0
    %1580 = vmatpush1.msra.mxu0 0.0
    %1581 = vmatprep.subr.mxu0 0.0
    %1582 = vmatpush1.msra.mxu0 0.0
    %1583 = vmatprep.subr.mxu0 0.0
    %1584 = vmatpush1.msra.mxu0 0.0
    %1585 = vmatprep.subr.mxu0 0.0
    %1586 = vmatpush1.msra.mxu0 0.0
    %1587 = vmatprep.subr.mxu0 0.0
    %1588 = vmatpush1.msra.mxu0 0.0
    %1589 = vmatprep.subr.mxu0 0.0
    %1590 = vmatpush1.msra.mxu0 0.0
    %1591 = vmatprep.subr.mxu0 0.0
    %1592 = vmatpush1.msra.mxu0 0.0
    %1593 = vmatprep.subr.mxu0 0.0
    %1594 = vmatpush1.msra.mxu0 0.0
    %1595 = vmatprep.subr.mxu0 0.0
    %1596 = vmatpush1.msra.mxu0 0.0
    %1597 = vmatprep.subr.mxu0 0.0
    %1598 = vmatpush1.msra.mxu0 0.0
    %1599 = vmatprep.subr.mxu0 0.0
    %1600 = vmatpush1.msra.mxu0 0.0
    %1601 = vmatprep.subr.mxu0 0.0
    %1602 = vmatpush1.msra.mxu0 0.0
    %1603 = vmatprep.subr.mxu0 0.0
    %1604 = vmatpush1.msra.mxu0 0.0
    %1605 = vmatprep.subr.mxu0 0.0
    %1606 = vmatpush1.msra.mxu0 0.0
    %1607 = vmatprep.subr.mxu0 0.0
    %1608 = vmatpush1.msra.mxu0 0.0
    %1609 = vmatprep.subr.mxu0 0.0
    %1610 = vmatpush1.msra.mxu0 0.0
    %1611 = vmatprep.subr.mxu0 0.0
    %1612 = vmatpush1.msra.mxu0 0.0
    %1613 = vmatprep.subr.mxu0 0.0
    %1614 = vmatpush1.msra.mxu0 0.0
    %1615 = vmatprep.mubr.f32.mxu0 0.0
    %1616 = vmatmul.mubr.f32.gmra.mrb[0].mxu0 %v1549
    %v1617 = vpop.f32.mrb[0].mxu0
    %v1618 = vadd.f32 0.0, %v1617
    %v1619 = vpop.f32.mrb[0].mxu0
    %1620 = vdwg.mxu0
    %v1621 = vadd.f32 %v772, %v1618
    %v1622 = vxor.u32 %v1621, 2147483648
    %v1623 = vmul.f32 %v1622, 1.442695
    %v1624 = vpow.pop %v1623
    %v1625 = vadd.f32 %v1624, 1.0
    %v1626 = vrcp.pop %v1625
    %v1627 = vmul.f32 1.0, %v1626
    %v1628 = vtanh.pop %v1621
    %v1629 = vmul.f32 %v1627, %v1530
    %1631 = vrot.lane.b32.xlu0 %v1628, 32
    %v1632 = vpop.permute.xlu0 %1631
    %v1634 = vmul.f32 %v1627, %v1632
    %1636 = vrot.lane.b32.xlu0 %v1634, 32
    %v1637 = vpop.permute.xlu0 %1636
    %v1639 = vadd.f32 %v1629, %v1637
    %v1640 = vtanh.pop %v1639
    %1642 = vrot.lane.b32.xlu0 %v1640, 32
    %v1643 = vpop.permute.xlu0 %1642
    %v1645 = vmul.f32 %v1627, %v1643
    %v1648 = vunpack.c.l.s4 1983009808
    %v1649 = vunpack.c.0.s8 %v1648
    %v1650 = vlaneseq
    %v1651 = vshrl.u32 %v1650, 7
    %v1652 = vsub.s32 %v1649, %v1651
    %v1653 = vrot.slane %v1645, %v1652
    %1654 = vrot.lane.b32.xlu0 %v1653, 64
    %v1655 = vpop.permute.xlu0 %1654
    %v1657 = vadd.f32 %v268, %v1655
    %vm1658 = vcmask 254976
    %1659 = vst.msk [vmem:[#allocation28] sm:$0x3] %vm1658, %v1655
    %v1662 = vunpack.c.l.s4 1983009808
    %v1663 = vunpack.c.0.s8 %v1662
    %v1664 = vlaneseq
    %v1665 = vshrl.u32 %v1664, 7
    %v1666 = vsub.s32 %v1663, %v1665
    %v1667 = vrot.slane %v1639, %v1666
    %1668 = vrot.lane.b32.xlu0 %v1667, 96
    %v1669 = vpop.permute.xlu0 %1668
    %1671 = vst.msk [vmem:[#allocation30] sm:$0x3] %vm1658, %v1669
    %v1673 = vrot.slane %v1003, 6
    %v1676 = vrot.slane %v1112, 4
    %v1679 = vrot.slane %v1221, 2
    %v1682 = vrot.slane %v1439, 6
    %v1685 = vrot.slane %v1548, 4
    %v1688 = vrot.slane %v1657, 2
    %vm1690 = vcmask 1041408
    %v1691 = vsel %vm1690, %v894, %v1673
    %vm1692 = vcmask 1043456
    %v1693 = vsel %vm1692, %v1691, %v1676
    %vm1694 = vcmask 1045504
    %v1695 = vsel %vm1694, %v1693, %v1679
    %v1696 = vsel %vm1690, %v1330, %v1682
    %v1697 = vsel %vm1692, %v1696, %v1685
    %v1698 = vsel %vm1694, %v1697, %v1688
    %v1699 = vld [vmem:[#allocation14] sm:$0x1]
    %v1700 = vld [vmem:[#allocation15] sm:$0x1]
    %v1701 = vsel %vm315, %v1695, 0.0
    %1702 = vadd.xlane.f32.xlu0 %v1701
    %v1703 = vpop.xlane.xlu0 %1702
    %v1704 = vsel %vm315, %v1698, 0.0
    %1705 = vadd.xlane.f32.xlu0 %v1704
    %v1706 = vpop.xlane.xlu0 %1705
    %v1707 = vmul.f32 %v1703, %v322
    %v1708 = vmul.f32 %v1706, %v322
    %v1709 = vsub.f32 %v1695, %v1707
    %v1710 = vsub.f32 %v1698, %v1708
    %v1711 = vmul.f32 %v1709, %v1709
    %v1712 = vmul.f32 %v1710, %v1710
    %v1713 = vsel %vm315, %v1711, 0.0
    %1714 = vadd.xlane.f32.xlu0 %v1713
    %v1715 = vpop.xlane.xlu0 %1714
    %v1716 = vsel %vm315, %v1712, 0.0
    %1717 = vadd.xlane.f32.xlu0 %v1716
    %v1718 = vpop.xlane.xlu0 %1717
    %v1719 = vmul.f32 %v1715, %v322
    %v1720 = vmul.f32 %v1718, %v322
    %v1721 = vadd.f32 %v1719, 1e-05
    %v1722 = vadd.f32 %v1720, 1e-05
    %v1723 = vrsqrt.pop %v1721
    %v1724 = vrsqrt.pop %v1722
    %v1725 = vmul.f32 %v1709, %v1723
    %v1726 = vmul.f32 %v1710, %v1724
    %v1728 = vlaneseq
    %v1729 = vshrl.u32 %v1728, 7
    %v1730 = vsub.s32 0, %v1729
    %v1731 = vrot.slane %v1699, %v1730
    %v1733 = vmul.f32 %v1725, %v1731
    %v1734 = vmul.f32 %v1726, %v1731
    %v1736 = vlaneseq
    %v1737 = vshrl.u32 %v1736, 7
    %v1738 = vsub.s32 0, %v1737
    %v1739 = vrot.slane %v1700, %v1738
    %v1741 = vadd.f32 %v1733, %v1739
    %v1742 = vadd.f32 %v1734, %v1739
    %v1743 = vld [vmem:[%s10] sm:$0xff]
    %v1744 = vld [vmem:[%s10 + $0x8] sm:$0xff]
    %v1745 = vld [vmem:[%s10 + $0x10] sm:$0xff]
    %v1746 = vld [vmem:[%s10 + $0x18] sm:$0xff]
    %v1747 = vld [vmem:[#allocation17] sm:$0x1]
    %v1749 = vlaneseq
    %v1750 = vshrl.u32 %v1749, 7
    %v1751 = vsub.s32 0, %v1750
    %v1752 = vrot.slane %v1747, %v1751
    %v1755 = vsel %vm315, %v1741, 0
    %v1758 = vsel %vm315, %v1742, 0
    %1760 = vmatprep.subr.mxu0 0.0
    %1761 = vmatpush1.msra.mxu0 %v1743
    %1762 = vmatprep.subr.mxu0 0.0
    %1763 = vmatpush1.msra.mxu0 %v1744
    %1764 = vmatprep.subr.mxu0 0.0
    %1765 = vmatpush1.msra.mxu0 %v1745
    %1766 = vmatprep.subr.mxu0 0.0
    %1767 = vmatpush1.msra.mxu0 %v1746
    %1768 = vmatprep.subr.mxu0 0.0
    %1769 = vmatpush1.msra.mxu0 0.0
    %1770 = vmatprep.subr.mxu0 0.0
    %1771 = vmatpush1.msra.mxu0 0.0
    %1772 = vmatprep.subr.mxu0 0.0
    %1773 = vmatpush1.msra.mxu0 0.0
    %1774 = vmatprep.subr.mxu0 0.0
    %1775 = vmatpush1.msra.mxu0 0.0
    %1776 = vmatprep.subr.mxu0 0.0
    %1777 = vmatpush1.msra.mxu0 0.0
    %1778 = vmatprep.subr.mxu0 0.0
    %1779 = vmatpush1.msra.mxu0 0.0
    %1780 = vmatprep.subr.mxu0 0.0
    %1781 = vmatpush1.msra.mxu0 0.0
    %1782 = vmatprep.subr.mxu0 0.0
    %1783 = vmatpush1.msra.mxu0 0.0
    %1784 = vmatprep.subr.mxu0 0.0
    %1785 = vmatpush1.msra.mxu0 0.0
    %1786 = vmatprep.subr.mxu0 0.0
    %1787 = vmatpush1.msra.mxu0 0.0
    %1788 = vmatprep.subr.mxu0 0.0
    %1789 = vmatpush1.msra.mxu0 0.0
    %1790 = vmatprep.subr.mxu0 0.0
    %1791 = vmatpush1.msra.mxu0 0.0
    %1792 = vmatprep.subr.mxu0 0.0
    %1793 = vmatpush1.msra.mxu0 0.0
    %1794 = vmatprep.subr.mxu0 0.0
    %1795 = vmatpush1.msra.mxu0 0.0
    %1796 = vmatprep.subr.mxu0 0.0
    %1797 = vmatpush1.msra.mxu0 0.0
    %1798 = vmatprep.subr.mxu0 0.0
    %1799 = vmatpush1.msra.mxu0 0.0
    %1800 = vmatprep.subr.mxu0 0.0
    %1801 = vmatpush1.msra.mxu0 0.0
    %1802 = vmatprep.subr.mxu0 0.0
    %1803 = vmatpush1.msra.mxu0 0.0
    %1804 = vmatprep.subr.mxu0 0.0
    %1805 = vmatpush1.msra.mxu0 0.0
    %1806 = vmatprep.subr.mxu0 0.0
    %1807 = vmatpush1.msra.mxu0 0.0
    %1808 = vmatprep.subr.mxu0 0.0
    %1809 = vmatpush1.msra.mxu0 0.0
    %1810 = vmatprep.subr.mxu0 0.0
    %1811 = vmatpush1.msra.mxu0 0.0
    %1812 = vmatprep.subr.mxu0 0.0
    %1813 = vmatpush1.msra.mxu0 0.0
    %1814 = vmatprep.subr.mxu0 0.0
    %1815 = vmatpush1.msra.mxu0 0.0
    %1816 = vmatprep.subr.mxu0 0.0
    %1817 = vmatpush1.msra.mxu0 0.0
    %1818 = vmatprep.subr.mxu0 0.0
    %1819 = vmatpush1.msra.mxu0 0.0
    %1820 = vmatprep.subr.mxu0 0.0
    %1821 = vmatpush1.msra.mxu0 0.0
    %1822 = vmatprep.subr.mxu0 0.0
    %1823 = vmatpush1.msra.mxu0 0.0
    %1824 = vmatprep.mubr.f32.mxu0 0.0
    %1825 = vmatmul.mubr.f32.gmra.mrb[0].mxu0 %v1755
    %v1826 = vpop.f32.mrb[0].mxu0
    %v1827 = vadd.f32 %v1752, %v1826
    %v1828 = vpop.f32.mrb[0].mxu0
    %1829 = vmatprep.mubr.f32.mxu0 0.0
    %1830 = vmatmul.mubr.f32.gmra.mrb[0].mxu0 %v1758
    %v1831 = vpop.f32.mrb[0].mxu0
    %v1832 = vadd.f32 %v1752, %v1831
    %v1833 = vpop.f32.mrb[0].mxu0
    %1834 = vdwg.mxu0
    %v1835 = vld [vmem:[#allocation6] sm:$0x3]
    %v1836 = vld [vmem:[#allocation6 + $0x2] sm:$0x3]
    %v1837 = vld [vmem:[#allocation6 + $0x4] sm:$0x3]
    %v1838 = vld [vmem:[#allocation6 + $0x6] sm:$0x3]
    %v1839 = vld [vmem:[#allocation6 + $0x8] sm:$0x3]
    %v1840 = vld [vmem:[#allocation6 + $0xa] sm:$0x3]
    %v1841 = vld [vmem:[#allocation6 + $0xc] sm:$0x3]
    %v1842 = vld [vmem:[#allocation6 + $0xe] sm:$0x3]
    %v1843 = vld [vmem:[#allocation6 + $0x10] sm:$0x3]
    %v1844 = vld [vmem:[#allocation6 + $0x12] sm:$0x3]
    %v1845 = vld [vmem:[%s12] sm:$0xff]
    %v1846 = vld [vmem:[%s12 + $0x8] sm:$0xff]
    %v1847 = vld [vmem:[%s12 + $0x10] sm:$0xff]
    %v1848 = vld [vmem:[%s12 + $0x18] sm:$0xff]
    %v1849 = vld [vmem:[#allocation18] sm:$0x1]
    %v1851 = vlaneseq
    %v1852 = vshrl.u32 %v1851, 7
    %v1853 = vsub.s32 0, %v1852
    %v1854 = vrot.slane %v1849, %v1853
    %v1866 = vcombine.low %v1835, %v1836
    %v1867 = vcombine.low %v1837, %v1838
    %v1869 = vunpack.c.l.s4 1983009808
    %v1870 = vunpack.c.0.s8 %v1869
    %v1871 = vlaneseq
    %v1872 = vshrl.u32 %v1871, 7
    %v1873 = vsub.s32 %v1870, %v1872
    %v1874 = vrot.slane %v1866, %v1873
    %v1876 = vunpack.c.l.s4 1983009808
    %v1877 = vunpack.c.0.s8 %v1876
    %v1878 = vlaneseq
    %v1879 = vshrl.u32 %v1878, 7
    %v1880 = vsub.s32 %v1877, %v1879
    %v1881 = vrot.slane %v1867, %v1880
    %v1882 = vcombine.low %v1874, %v1881
    %v1883 = vcombine.low %v1839, %v1840
    %v1884 = vcombine.low %v1841, %v1842
    %v1886 = vunpack.c.l.s4 1983009808
    %v1887 = vunpack.c.0.s8 %v1886
    %v1888 = vlaneseq
    %v1889 = vshrl.u32 %v1888, 7
    %v1890 = vsub.s32 %v1887, %v1889
    %v1891 = vrot.slane %v1883, %v1890
    %v1893 = vunpack.c.l.s4 1983009808
    %v1894 = vunpack.c.0.s8 %v1893
    %v1895 = vlaneseq
    %v1896 = vshrl.u32 %v1895, 7
    %v1897 = vsub.s32 %v1894, %v1896
    %v1898 = vrot.slane %v1884, %v1897
    %v1899 = vcombine.low %v1891, %v1898
    %v1900 = vcombine.low %v1843, %v1844
    %v1902 = vunpack.c.l.s4 1983009808
    %v1903 = vunpack.c.0.s8 %v1902
    %v1904 = vlaneseq
    %v1905 = vshrl.u32 %v1904, 7
    %v1906 = vsub.s32 %v1903, %v1905
    %v1907 = vrot.slane %v1900, %v1906
    %v1908 = vsel %vm315, %v1882, 0
    %v1910 = vsel %vm315, %v1899, 0
    %v1912 = vsel %vm315, %v1907, 0
    %1914 = vmatprep.subr.mxu0 0.0
    %1915 = vmatpush1.msra.mxu0 %v1845
    %1916 = vmatprep.subr.mxu0 0.0
    %1917 = vmatpush1.msra.mxu0 %v1846
    %1918 = vmatprep.subr.mxu0 0.0
    %1919 = vmatpush1.msra.mxu0 %v1847
    %1920 = vmatprep.subr.mxu0 0.0
    %1921 = vmatpush1.msra.mxu0 %v1848
    %1922 = vmatprep.subr.mxu0 0.0
    %1923 = vmatpush1.msra.mxu0 0.0
    %1924 = vmatprep.subr.mxu0 0.0
    %1925 = vmatpush1.msra.mxu0 0.0
    %1926 = vmatprep.subr.mxu0 0.0
    %1927 = vmatpush1.msra.mxu0 0.0
    %1928 = vmatprep.subr.mxu0 0.0
    %1929 = vmatpush1.msra.mxu0 0.0
    %1930 = vmatprep.subr.mxu0 0.0
    %1931 = vmatpush1.msra.mxu0 0.0
    %1932 = vmatprep.subr.mxu0 0.0
    %1933 = vmatpush1.msra.mxu0 0.0
    %1934 = vmatprep.subr.mxu0 0.0
    %1935 = vmatpush1.msra.mxu0 0.0
    %1936 = vmatprep.subr.mxu0 0.0
    %1937 = vmatpush1.msra.mxu0 0.0
    %1938 = vmatprep.subr.mxu0 0.0
    %1939 = vmatpush1.msra.mxu0 0.0
    %1940 = vmatprep.subr.mxu0 0.0
    %1941 = vmatpush1.msra.mxu0 0.0
    %1942 = vmatprep.subr.mxu0 0.0
    %1943 = vmatpush1.msra.mxu0 0.0
    %1944 = vmatprep.subr.mxu0 0.0
    %1945 = vmatpush1.msra.mxu0 0.0
    %1946 = vmatprep.subr.mxu0 0.0
    %1947 = vmatpush1.msra.mxu0 0.0
    %1948 = vmatprep.subr.mxu0 0.0
    %1949 = vmatpush1.msra.mxu0 0.0
    %1950 = vmatprep.subr.mxu0 0.0
    %1951 = vmatpush1.msra.mxu0 0.0
    %1952 = vmatprep.subr.mxu0 0.0
    %1953 = vmatpush1.msra.mxu0 0.0
    %1954 = vmatprep.subr.mxu0 0.0
    %1955 = vmatpush1.msra.mxu0 0.0
    %1956 = vmatprep.subr.mxu0 0.0
    %1957 = vmatpush1.msra.mxu0 0.0
    %1958 = vmatprep.subr.mxu0 0.0
    %1959 = vmatpush1.msra.mxu0 0.0
    %1960 = vmatprep.subr.mxu0 0.0
    %1961 = vmatpush1.msra.mxu0 0.0
    %1962 = vmatprep.subr.mxu0 0.0
    %1963 = vmatpush1.msra.mxu0 0.0
    %1964 = vmatprep.subr.mxu0 0.0
    %1965 = vmatpush1.msra.mxu0 0.0
    %1966 = vmatprep.subr.mxu0 0.0
    %1967 = vmatpush1.msra.mxu0 0.0
    %1968 = vmatprep.subr.mxu0 0.0
    %1969 = vmatpush1.msra.mxu0 0.0
    %1970 = vmatprep.subr.mxu0 0.0
    %1971 = vmatpush1.msra.mxu0 0.0
    %1972 = vmatprep.subr.mxu0 0.0
    %1973 = vmatpush1.msra.mxu0 0.0
    %1974 = vmatprep.subr.mxu0 0.0
    %1975 = vmatpush1.msra.mxu0 0.0
    %1976 = vmatprep.subr.mxu0 0.0
    %1977 = vmatpush1.msra.mxu0 0.0
    %1978 = vmatprep.mubr.f32.mxu0 0.0
    %1979 = vmatmul.mubr.f32.gmra.mrb[0].mxu0 %v1908
    %v1980 = vpop.f32.mrb[0].mxu0
    %v1981 = vadd.f32 %v1854, %v1980
    %v1982 = vpop.f32.mrb[0].mxu0
    %1983 = vmatprep.mubr.f32.mxu0 0.0
    %1984 = vmatmul.mubr.f32.gmra.mrb[0].mxu0 %v1910
    %v1985 = vpop.f32.mrb[0].mxu0
    %v1986 = vadd.f32 %v1854, %v1985
    %v1987 = vpop.f32.mrb[0].mxu0
    %1988 = vmatprep.mubr.f32.mxu0 0.0
    %1989 = vmatmul.mubr.f32.gmra.mrb[0].mxu0 %v1912
    %v1990 = vpop.f32.mrb[0].mxu0
    %v1991 = vadd.f32 %v1854, %v1990
    %v1992 = vpop.f32.mrb[0].mxu0
    %1993 = vdwg.mxu0
    %v1996 = vcombine.high %v1827, %v1827
    %v1998 = vunpack.c.l.s4 1983009808
    %v1999 = vunpack.c.0.s8 %v1998
    %v2000 = vlaneseq
    %v2001 = vshrl.u32 %v2000, 7
    %v2002 = vsub.s32 %v1999, %v2001
    %v2003 = vrot.slane %v1827, %v2002
    %v2005 = vunpack.c.l.s4 1983009808
    %v2006 = vunpack.c.0.s8 %v2005
    %v2007 = vlaneseq
    %v2008 = vshrl.u32 %v2007, 7
    %v2009 = vsub.s32 %v2006, %v2008
    %v2010 = vrot.slane %v1996, %v2009
    %v2011 = vcombine.high %v2003, %v2003
    %v2012 = vcombine.high %v2010, %v2010
    %v2013 = vcombine.high %v1832, %v1832
    %v2015 = vunpack.c.l.s4 1983009808
    %v2016 = vunpack.c.0.s8 %v2015
    %v2017 = vlaneseq
    %v2018 = vshrl.u32 %v2017, 7
    %v2019 = vsub.s32 %v2016, %v2018
    %v2020 = vrot.slane %v1832, %v2019
    %v2022 = vunpack.c.l.s4 1983009808
    %v2023 = vunpack.c.0.s8 %v2022
    %v2024 = vlaneseq
    %v2025 = vshrl.u32 %v2024, 7
    %v2026 = vsub.s32 %v2023, %v2025
    %v2027 = vrot.slane %v2013, %v2026
    %v2028 = vcombine.high %v2020, %v2020
    %v2029 = vcombine.high %v2027, %v2027
    %v2033 = vcombine.high %v1981, %v1981
    %v2035 = vunpack.c.l.s4 1983009808
    %v2036 = vunpack.c.0.s8 %v2035
    %v2037 = vlaneseq
    %v2038 = vshrl.u32 %v2037, 7
    %v2039 = vsub.s32 %v2036, %v2038
    %v2040 = vrot.slane %v1981, %v2039
    %v2042 = vunpack.c.l.s4 1983009808
    %v2043 = vunpack.c.0.s8 %v2042
    %v2044 = vlaneseq
    %v2045 = vshrl.u32 %v2044, 7
    %v2046 = vsub.s32 %v2043, %v2045
    %v2047 = vrot.slane %v2033, %v2046
    %v2048 = vcombine.high %v2040, %v2040
    %v2049 = vcombine.high %v2047, %v2047
    %v2050 = vcombine.high %v1986, %v1986
    %v2052 = vunpack.c.l.s4 1983009808
    %v2053 = vunpack.c.0.s8 %v2052
    %v2054 = vlaneseq
    %v2055 = vshrl.u32 %v2054, 7
    %v2056 = vsub.s32 %v2053, %v2055
    %v2057 = vrot.slane %v1986, %v2056
    %v2059 = vunpack.c.l.s4 1983009808
    %v2060 = vunpack.c.0.s8 %v2059
    %v2061 = vlaneseq
    %v2062 = vshrl.u32 %v2061, 7
    %v2063 = vsub.s32 %v2060, %v2062
    %v2064 = vrot.slane %v2050, %v2063
    %v2065 = vcombine.high %v2057, %v2057
    %v2066 = vcombine.high %v2064, %v2064
    %v2068 = vunpack.c.l.s4 1983009808
    %v2069 = vunpack.c.0.s8 %v2068
    %v2070 = vlaneseq
    %v2071 = vshrl.u32 %v2070, 7
    %v2072 = vsub.s32 %v2069, %v2071
    %v2073 = vrot.slane %v1991, %v2072
    %v2074 = vcombine.high %v2073, %v2073
    %v2075 = vld [vmem:[#allocation20] sm:$0xff]
    %v2076 = vld [vmem:[#allocation20 + $0x8] sm:$0xff]
    %v2077 = vld [vmem:[#allocation20 + $0x10] sm:$0xff]
    %v2078 = vld [vmem:[#allocation20 + $0x18] sm:$0xff]
    %v2079 = vld [vmem:[#allocation8] sm:$0x1]
    %vm2080 = vcmp.gt.s32.totalorder %v2079, 0
    %v2081 = vsel %vm2080, -1e+09, 0.0
    %v2082 = vlaneseq
    %v2083 = vshrl.u32 %v2082, 7
    %v2084 = vsub.s32 0, %v2083
    %v2085 = vrot.slane %v2003, %v2084
    %v2086 = vlaneseq
    %v2087 = vshrl.u32 %v2086, 7
    %v2088 = vsub.s32 0, %v2087
    %v2089 = vrot.slane %v2011, %v2088
    %v2090 = vlaneseq
    %v2091 = vshrl.u32 %v2090, 7
    %v2092 = vsub.s32 0, %v2091
    %v2093 = vrot.slane %v2010, %v2092
    %v2094 = vlaneseq
    %v2095 = vshrl.u32 %v2094, 7
    %v2096 = vsub.s32 0, %v2095
    %v2097 = vrot.slane %v2012, %v2096
    %v2098 = vlaneseq
    %v2099 = vshrl.u32 %v2098, 7
    %v2100 = vsub.s32 0, %v2099
    %v2101 = vrot.slane %v2020, %v2100
    %v2102 = vlaneseq
    %v2103 = vshrl.u32 %v2102, 7
    %v2104 = vsub.s32 0, %v2103
    %v2105 = vrot.slane %v2028, %v2104
    %v2106 = vlaneseq
    %v2107 = vshrl.u32 %v2106, 7
    %v2108 = vsub.s32 0, %v2107
    %v2109 = vrot.slane %v2027, %v2108
    %v2110 = vlaneseq
    %v2111 = vshrl.u32 %v2110, 7
    %v2112 = vsub.s32 0, %v2111
    %v2113 = vrot.slane %v2029, %v2112
    %vm2114 = vcmask 1041409
    %v2115 = vsel %vm2114, %v2089, %v2085
    %vm2116 = vcmask 1042434
    %v2117 = vsel %vm2116, %v2093, %v2115
    %vm2118 = vcmask 1043459
    %v2119 = vsel %vm2118, %v2097, %v2117
    %vm2120 = vcmask 1044484
    %v2121 = vsel %vm2120, %v2101, %v2119
    %vm2122 = vcmask 1045509
    %v2123 = vsel %vm2122, %v2105, %v2121
    %vm2124 = vcmask 1046534
    %v2125 = vsel %vm2124, %v2109, %v2123
    %vm2126 = vcmask 1047559
    %v2127 = vsel %vm2126, %v2113, %v2125
    %v2128 = vlaneseq
    %v2129 = vshrl.u32 %v2128, 7
    %v2130 = vsub.s32 0, %v2129
    %v2131 = vrot.slane %v2040, %v2130
    %v2132 = vlaneseq
    %v2133 = vshrl.u32 %v2132, 7
    %v2134 = vsub.s32 0, %v2133
    %v2135 = vrot.slane %v2048, %v2134
    %v2136 = vlaneseq
    %v2137 = vshrl.u32 %v2136, 7
    %v2138 = vsub.s32 0, %v2137
    %v2139 = vrot.slane %v2047, %v2138
    %v2140 = vlaneseq
    %v2141 = vshrl.u32 %v2140, 7
    %v2142 = vsub.s32 0, %v2141
    %v2143 = vrot.slane %v2049, %v2142
    %v2144 = vlaneseq
    %v2145 = vshrl.u32 %v2144, 7
    %v2146 = vsub.s32 0, %v2145
    %v2147 = vrot.slane %v2057, %v2146
    %v2148 = vlaneseq
    %v2149 = vshrl.u32 %v2148, 7
    %v2150 = vsub.s32 0, %v2149
    %v2151 = vrot.slane %v2065, %v2150
    %v2152 = vlaneseq
    %v2153 = vshrl.u32 %v2152, 7
    %v2154 = vsub.s32 0, %v2153
    %v2155 = vrot.slane %v2064, %v2154
    %v2156 = vlaneseq
    %v2157 = vshrl.u32 %v2156, 7
    %v2158 = vsub.s32 0, %v2157
    %v2159 = vrot.slane %v2066, %v2158
    %v2160 = vlaneseq
    %v2161 = vshrl.u32 %v2160, 7
    %v2162 = vsub.s32 0, %v2161
    %v2163 = vrot.slane %v2073, %v2162
    %v2164 = vlaneseq
    %v2165 = vshrl.u32 %v2164, 7
    %v2166 = vsub.s32 0, %v2165
    %v2167 = vrot.slane %v2074, %v2166
    %v2168 = vsel %vm2114, %v2135, %v2131
    %v2169 = vsel %vm2116, %v2139, %v2168
    %v2170 = vsel %vm2118, %v2143, %v2169
    %v2171 = vsel %vm2120, %v2147, %v2170
    %v2172 = vsel %vm2122, %v2151, %v2171
    %v2173 = vsel %vm2124, %v2155, %v2172
    %v2174 = vsel %vm2126, %v2159, %v2173
    %v2175 = vsel %vm2114, %v2167, %v2163
    %vm2176 = vcmask 64512
    %v2177 = vsel %vm2176, %v2127, 0
    %v2179 = vsel %vm2176, %v2174, 0
    %v2181 = vsel %vm2176, %v2175, 0
    %2183 = vmatprep.subr.mxu0 0.0
    %2184 = vmatpush1.xpose.msra.mxu0 %v2179
    %2185 = vmatprep.subr.mxu0 0.0
    %2186 = vmatpush1.xpose.msra.mxu0 %v2181
    %2187 = vmatprep.subr.mxu0 0.0
    %2188 = vmatpush1.xpose.msra.mxu0 0.0
    %2189 = vmatprep.subr.mxu0 0.0
    %2190 = vmatpush1.xpose.msra.mxu0 0.0
    %2191 = vmatprep.subr.mxu0 0.0
    %2192 = vmatpush1.xpose.msra.mxu0 0.0
    %2193 = vmatprep.subr.mxu0 0.0
    %2194 = vmatpush1.xpose.msra.mxu0 0.0
    %2195 = vmatprep.subr.mxu0 0.0
    %2196 = vmatpush1.xpose.msra.mxu0 0.0
    %2197 = vmatprep.subr.mxu0 0.0
    %2198 = vmatpush1.xpose.msra.mxu0 0.0
    %2199 = vmatprep.subr.mxu0 0.0
    %2200 = vmatpush1.xpose.msra.mxu0 0.0
    %2201 = vmatprep.subr.mxu0 0.0
    %2202 = vmatpush1.xpose.msra.mxu0 0.0
    %2203 = vmatprep.subr.mxu0 0.0
    %2204 = vmatpush1.xpose.msra.mxu0 0.0
    %2205 = vmatprep.subr.mxu0 0.0
    %2206 = vmatpush1.xpose.msra.mxu0 0.0
    %2207 = vmatprep.subr.mxu0 0.0
    %2208 = vmatpush1.xpose.msra.mxu0 0.0
    %2209 = vmatprep.subr.mxu0 0.0
    %2210 = vmatpush1.xpose.msra.mxu0 0.0
    %2211 = vmatprep.subr.mxu0 0.0
    %2212 = vmatpush1.xpose.msra.mxu0 0.0
    %2213 = vmatprep.subr.mxu0 0.0
    %2214 = vmatpush1.xpose.msra.mxu0 0.0
    %2215 = vmatprep.subr.mxu0 0.0
    %2216 = vmatpush1.xpose.msra.mxu0 0.0
    %2217 = vmatprep.subr.mxu0 0.0
    %2218 = vmatpush1.xpose.msra.mxu0 0.0
    %2219 = vmatprep.subr.mxu0 0.0
    %2220 = vmatpush1.xpose.msra.mxu0 0.0
    %2221 = vmatprep.subr.mxu0 0.0
    %2222 = vmatpush1.xpose.msra.mxu0 0.0
    %2223 = vmatprep.subr.mxu0 0.0
    %2224 = vmatpush1.xpose.msra.mxu0 0.0
    %2225 = vmatprep.subr.mxu0 0.0
    %2226 = vmatpush1.xpose.msra.mxu0 0.0
    %2227 = vmatprep.subr.mxu0 0.0
    %2228 = vmatpush1.xpose.msra.mxu0 0.0
    %2229 = vmatprep.subr.mxu0 0.0
    %2230 = vmatpush1.xpose.msra.mxu0 0.0
    %2231 = vmatprep.subr.mxu0 0.0
    %2232 = vmatpush1.xpose.msra.mxu0 0.0
    %2233 = vmatprep.subr.mxu0 0.0
    %2234 = vmatpush1.xpose.msra.mxu0 0.0
    %2235 = vmatprep.subr.mxu0 0.0
    %2236 = vmatpush1.xpose.msra.mxu0 0.0
    %2237 = vmatprep.subr.mxu0 0.0
    %2238 = vmatpush1.xpose.msra.mxu0 0.0
    %2239 = vmatprep.subr.mxu0 0.0
    %2240 = vmatpush1.xpose.msra.mxu0 0.0
    %2241 = vmatprep.subr.mxu0 0.0
    %2242 = vmatpush1.xpose.msra.mxu0 0.0
    %2243 = vmatprep.subr.mxu0 0.0
    %2244 = vmatpush1.xpose.msra.mxu0 0.0
    %2245 = vmatprep.subr.mxu0 0.0
    %2246 = vmatpush1.xpose.msra.mxu0 0.0
    %2247 = vmatprep.mubr.f32.mxu0 0.0
    %2248 = vmatmul.mubr.f32.gmra.mrb[0].mxu0 %v2177
    %v2249 = vpop.f32.mrb[0].mxu0
    %v2250 = vadd.f32 0.0, %v2249
    %v2251 = vpop.f32.mrb[0].mxu0
    %2252 = vdwg.mxu0
    %v2253 = vmul.f32 %v2250, 0.35355338
    %v2255 = vlaneseq
    %v2256 = vshrl.u32 %v2255, 7
    %v2257 = vsub.s32 0, %v2256
    %v2258 = vrot.slane %v2081, %v2257
    %v2260 = vadd.f32 %v2253, %v2258
    %vm2261 = vcmask 80896
    %v2262 = vsel %vm2261, %v2260, -inf
    %2263 = vmax.xlane.f32.xlu0 %v2262
    %v2264 = vpop.xlane.xlu0 %2263
    %v2265 = vsub.f32 %v2260, %v2264
    %v2266 = vmul.f32 %v2265, 1.442695
    %v2267 = vpow.pop %v2266
    %v2268 = vsel %vm2261, %v2267, 0.0
    %2269 = vadd.xlane.f32.xlu0 %v2268
    %v2270 = vpop.xlane.xlu0 %2269
    %v2271 = vrcp.pop %v2270
    %v2272 = vmul.f32 %v2267, %v2271
    %2273 = vrot.lane.b32.xlu0 %v2174, 96
    %v2274 = vpop.permute.xlu0 %2273
    %2275 = vrot.lane.b32.xlu0 %v2175, 96
    %v2276 = vpop.permute.xlu0 %2275
    %v2279 = vsel %vm2261, %v2272, 0
    %v2281 = vsel %vm1690, %v2276, 0
    %2283 = vmatprep.subr.mxu0 0.0
    %2284 = vmatpush1.msra.mxu0 %v2274
    %2285 = vmatprep.subr.mxu0 0.0
    %2286 = vmatpush1.msra.mxu0 %v2281
    %2287 = vmatprep.subr.mxu0 0.0
    %2288 = vmatpush1.msra.mxu0 0.0
    %2289 = vmatprep.subr.mxu0 0.0
    %2290 = vmatpush1.msra.mxu0 0.0
    %2291 = vmatprep.subr.mxu0 0.0
    %2292 = vmatpush1.msra.mxu0 0.0
    %2293 = vmatprep.subr.mxu0 0.0
    %2294 = vmatpush1.msra.mxu0 0.0
    %2295 = vmatprep.subr.mxu0 0.0
    %2296 = vmatpush1.msra.mxu0 0.0
    %2297 = vmatprep.subr.mxu0 0.0
    %2298 = vmatpush1.msra.mxu0 0.0
    %2299 = vmatprep.subr.mxu0 0.0
    %2300 = vmatpush1.msra.mxu0 0.0
    %2301 = vmatprep.subr.mxu0 0.0
    %2302 = vmatpush1.msra.mxu0 0.0
    %2303 = vmatprep.subr.mxu0 0.0
    %2304 = vmatpush1.msra.mxu0 0.0
    %2305 = vmatprep.subr.mxu0 0.0
    %2306 = vmatpush1.msra.mxu0 0.0
    %2307 = vmatprep.subr.mxu0 0.0
    %2308 = vmatpush1.msra.mxu0 0.0
    %2309 = vmatprep.subr.mxu0 0.0
    %2310 = vmatpush1.msra.mxu0 0.0
    %2311 = vmatprep.subr.mxu0 0.0
    %2312 = vmatpush1.msra.mxu0 0.0
    %2313 = vmatprep.subr.mxu0 0.0
    %2314 = vmatpush1.msra.mxu0 0.0
    %2315 = vmatprep.subr.mxu0 0.0
    %2316 = vmatpush1.msra.mxu0 0.0
    %2317 = vmatprep.subr.mxu0 0.0
    %2318 = vmatpush1.msra.mxu0 0.0
    %2319 = vmatprep.subr.mxu0 0.0
    %2320 = vmatpush1.msra.mxu0 0.0
    %2321 = vmatprep.subr.mxu0 0.0
    %2322 = vmatpush1.msra.mxu0 0.0
    %2323 = vmatprep.subr.mxu0 0.0
    %2324 = vmatpush1.msra.mxu0 0.0
    %2325 = vmatprep.subr.mxu0 0.0
    %2326 = vmatpush1.msra.mxu0 0.0
    %2327 = vmatprep.subr.mxu0 0.0
    %2328 = vmatpush1.msra.mxu0 0.0
    %2329 = vmatprep.subr.mxu0 0.0
    %2330 = vmatpush1.msra.mxu0 0.0
    %2331 = vmatprep.subr.mxu0 0.0
    %2332 = vmatpush1.msra.mxu0 0.0
    %2333 = vmatprep.subr.mxu0 0.0
    %2334 = vmatpush1.msra.mxu0 0.0
    %2335 = vmatprep.subr.mxu0 0.0
    %2336 = vmatpush1.msra.mxu0 0.0
    %2337 = vmatprep.subr.mxu0 0.0
    %2338 = vmatpush1.msra.mxu0 0.0
    %2339 = vmatprep.subr.mxu0 0.0
    %2340 = vmatpush1.msra.mxu0 0.0
    %2341 = vmatprep.subr.mxu0 0.0
    %2342 = vmatpush1.msra.mxu0 0.0
    %2343 = vmatprep.subr.mxu0 0.0
    %2344 = vmatpush1.msra.mxu0 0.0
    %2345 = vmatprep.subr.mxu0 0.0
    %2346 = vmatpush1.msra.mxu0 0.0
    %2347 = vmatprep.mubr.f32.mxu0 0.0
    %2348 = vmatmul.mubr.f32.gmra.mrb[0].mxu0 %v2279
    %v2349 = vpop.f32.mrb[0].mxu0
    %v2350 = vadd.f32 0.0, %v2349
    %v2351 = vpop.f32.mrb[0].mxu0
    %2352 = vdwg.mxu0
    %2353 = vrot.lane.b32.xlu0 %v2127, 120
    %v2354 = vpop.permute.xlu0 %2353
    %2355 = vrot.lane.b32.xlu0 %v2174, 120
    %v2356 = vpop.permute.xlu0 %2355
    %2357 = vrot.lane.b32.xlu0 %v2175, 120
    %v2358 = vpop.permute.xlu0 %2357
    %v2359 = vsel %vm2176, %v2354, 0
    %v2361 = vsel %vm2176, %v2356, 0
    %v2363 = vsel %vm2176, %v2358, 0
    %2365 = vmatprep.subr.mxu0 0.0
    %2366 = vmatpush1.xpose.msra.mxu0 %v2361
    %2367 = vmatprep.subr.mxu0 0.0
    %2368 = vmatpush1.xpose.msra.mxu0 %v2363
    %2369 = vmatprep.subr.mxu0 0.0
    %2370 = vmatpush1.xpose.msra.mxu0 0.0
    %2371 = vmatprep.subr.mxu0 0.0
    %2372 = vmatpush1.xpose.msra.mxu0 0.0
    %2373 = vmatprep.subr.mxu0 0.0
    %2374 = vmatpush1.xpose.msra.mxu0 0.0
    %2375 = vmatprep.subr.mxu0 0.0
    %2376 = vmatpush1.xpose.msra.mxu0 0.0
    %2377 = vmatprep.subr.mxu0 0.0
    %2378 = vmatpush1.xpose.msra.mxu0 0.0
    %2379 = vmatprep.subr.mxu0 0.0
    %2380 = vmatpush1.xpose.msra.mxu0 0.0
    %2381 = vmatprep.subr.mxu0 0.0
    %2382 = vmatpush1.xpose.msra.mxu0 0.0
    %2383 = vmatprep.subr.mxu0 0.0
    %2384 = vmatpush1.xpose.msra.mxu0 0.0
    %2385 = vmatprep.subr.mxu0 0.0
    %2386 = vmatpush1.xpose.msra.mxu0 0.0
    %2387 = vmatprep.subr.mxu0 0.0
    %2388 = vmatpush1.xpose.msra.mxu0 0.0
    %2389 = vmatprep.subr.mxu0 0.0
    %2390 = vmatpush1.xpose.msra.mxu0 0.0
    %2391 = vmatprep.subr.mxu0 0.0
    %2392 = vmatpush1.xpose.msra.mxu0 0.0
    %2393 = vmatprep.subr.mxu0 0.0
    %2394 = vmatpush1.xpose.msra.mxu0 0.0
    %2395 = vmatprep.subr.mxu0 0.0
    %2396 = vmatpush1.xpose.msra.mxu0 0.0
    %2397 = vmatprep.subr.mxu0 0.0
    %2398 = vmatpush1.xpose.msra.mxu0 0.0
    %2399 = vmatprep.subr.mxu0 0.0
    %2400 = vmatpush1.xpose.msra.mxu0 0.0
    %2401 = vmatprep.subr.mxu0 0.0
    %2402 = vmatpush1.xpose.msra.mxu0 0.0
    %2403 = vmatprep.subr.mxu0 0.0
    %2404 = vmatpush1.xpose.msra.mxu0 0.0
    %2405 = vmatprep.subr.mxu0 0.0
    %2406 = vmatpush1.xpose.msra.mxu0 0.0
    %2407 = vmatprep.subr.mxu0 0.0
    %2408 = vmatpush1.xpose.msra.mxu0 0.0
    %2409 = vmatprep.subr.mxu0 0.0
    %2410 = vmatpush1.xpose.msra.mxu0 0.0
    %2411 = vmatprep.subr.mxu0 0.0
    %2412 = vmatpush1.xpose.msra.mxu0 0.0
    %2413 = vmatprep.subr.mxu0 0.0
    %2414 = vmatpush1.xpose.msra.mxu0 0.0
    %2415 = vmatprep.subr.mxu0 0.0
    %2416 = vmatpush1.xpose.msra.mxu0 0.0
    %2417 = vmatprep.subr.mxu0 0.0
    %2418 = vmatpush1.xpose.msra.mxu0 0.0
    %2419 = vmatprep.subr.mxu0 0.0
    %2420 = vmatpush1.xpose.msra.mxu0 0.0
    %2421 = vmatprep.subr.mxu0 0.0
    %2422 = vmatpush1.xpose.msra.mxu0 0.0
    %2423 = vmatprep.subr.mxu0 0.0
    %2424 = vmatpush1.xpose.msra.mxu0 0.0
    %2425 = vmatprep.subr.mxu0 0.0
    %2426 = vmatpush1.xpose.msra.mxu0 0.0
    %2427 = vmatprep.subr.mxu0 0.0
    %2428 = vmatpush1.xpose.msra.mxu0 0.0
    %2429 = vmatprep.mubr.f32.mxu0 0.0
    %2430 = vmatmul.mubr.f32.gmra.mrb[0].mxu0 %v2359
    %v2431 = vpop.f32.mrb[0].mxu0
    %v2432 = vadd.f32 0.0, %v2431
    %v2433 = vpop.f32.mrb[0].mxu0
    %2434 = vdwg.mxu0
    %v2435 = vmul.f32 %v2432, 0.35355338
    %v2436 = vadd.f32 %v2435, %v2258
    %v2437 = vsel %vm2261, %v2436, -inf
    %2438 = vmax.xlane.f32.xlu0 %v2437
    %v2439 = vpop.xlane.xlu0 %2438
    %v2440 = vsub.f32 %v2436, %v2439
    %v2441 = vmul.f32 %v2440, 1.442695
    %v2442 = vpow.pop %v2441
    %v2443 = vsel %vm2261, %v2442, 0.0
    %2444 = vadd.xlane.f32.xlu0 %v2443
    %v2445 = vpop.xlane.xlu0 %2444
    %v2446 = vrcp.pop %v2445
    %v2447 = vmul.f32 %v2442, %v2446
    %2448 = vrot.lane.b32.xlu0 %v2174, 88
    %v2449 = vpop.permute.xlu0 %2448
    %2450 = vrot.lane.b32.xlu0 %v2175, 88
    %v2451 = vpop.permute.xlu0 %2450
    %v2454 = vsel %vm2261, %v2447, 0
    %v2456 = vsel %vm1690, %v2451, 0
    %2458 = vmatprep.subr.mxu0 0.0
    %2459 = vmatpush1.msra.mxu0 %v2449
    %2460 = vmatprep.subr.mxu0 0.0
    %2461 = vmatpush1.msra.mxu0 %v2456
    %2462 = vmatprep.subr.mxu0 0.0
    %2463 = vmatpush1.msra.mxu0 0.0
    %2464 = vmatprep.subr.mxu0 0.0
    %2465 = vmatpush1.msra.mxu0 0.0
    %2466 = vmatprep.subr.mxu0 0.0
    %2467 = vmatpush1.msra.mxu0 0.0
    %2468 = vmatprep.subr.mxu0 0.0
    %2469 = vmatpush1.msra.mxu0 0.0
    %2470 = vmatprep.subr.mxu0 0.0
    %2471 = vmatpush1.msra.mxu0 0.0
    %2472 = vmatprep.subr.mxu0 0.0
    %2473 = vmatpush1.msra.mxu0 0.0
    %2474 = vmatprep.subr.mxu0 0.0
    %2475 = vmatpush1.msra.mxu0 0.0
    %2476 = vmatprep.subr.mxu0 0.0
    %2477 = vmatpush1.msra.mxu0 0.0
    %2478 = vmatprep.subr.mxu0 0.0
    %2479 = vmatpush1.msra.mxu0 0.0
    %2480 = vmatprep.subr.mxu0 0.0
    %2481 = vmatpush1.msra.mxu0 0.0
    %2482 = vmatprep.subr.mxu0 0.0
    %2483 = vmatpush1.msra.mxu0 0.0
    %2484 = vmatprep.subr.mxu0 0.0
    %2485 = vmatpush1.msra.mxu0 0.0
    %2486 = vmatprep.subr.mxu0 0.0
    %2487 = vmatpush1.msra.mxu0 0.0
    %2488 = vmatprep.subr.mxu0 0.0
    %2489 = vmatpush1.msra.mxu0 0.0
    %2490 = vmatprep.subr.mxu0 0.0
    %2491 = vmatpush1.msra.mxu0 0.0
    %2492 = vmatprep.subr.mxu0 0.0
    %2493 = vmatpush1.msra.mxu0 0.0
    %2494 = vmatprep.subr.mxu0 0.0
    %2495 = vmatpush1.msra.mxu0 0.0
    %2496 = vmatprep.subr.mxu0 0.0
    %2497 = vmatpush1.msra.mxu0 0.0
    %2498 = vmatprep.subr.mxu0 0.0
    %2499 = vmatpush1.msra.mxu0 0.0
    %2500 = vmatprep.subr.mxu0 0.0
    %2501 = vmatpush1.msra.mxu0 0.0
    %2502 = vmatprep.subr.mxu0 0.0
    %2503 = vmatpush1.msra.mxu0 0.0
    %2504 = vmatprep.subr.mxu0 0.0
    %2505 = vmatpush1.msra.mxu0 0.0
    %2506 = vmatprep.subr.mxu0 0.0
    %2507 = vmatpush1.msra.mxu0 0.0
    %2508 = vmatprep.subr.mxu0 0.0
    %2509 = vmatpush1.msra.mxu0 0.0
    %2510 = vmatprep.subr.mxu0 0.0
    %2511 = vmatpush1.msra.mxu0 0.0
    %2512 = vmatprep.subr.mxu0 0.0
    %2513 = vmatpush1.msra.mxu0 0.0
    %2514 = vmatprep.subr.mxu0 0.0
    %2515 = vmatpush1.msra.mxu0 0.0
    %2516 = vmatprep.subr.mxu0 0.0
    %2517 = vmatpush1.msra.mxu0 0.0
    %2518 = vmatprep.subr.mxu0 0.0
    %2519 = vmatpush1.msra.mxu0 0.0
    %2520 = vmatprep.subr.mxu0 0.0
    %2521 = vmatpush1.msra.mxu0 0.0
    %2522 = vmatprep.mubr.f32.mxu0 0.0
    %2523 = vmatmul.mubr.f32.gmra.mrb[0].mxu0 %v2454
    %v2524 = vpop.f32.mrb[0].mxu0
    %v2525 = vadd.f32 0.0, %v2524
    %v2526 = vpop.f32.mrb[0].mxu0
    %2527 = vdwg.mxu0
    %v2529 = vsel %vm2176, %v2525, 0
    %2531 = vmatprep.subr.mxu0 0.0
    %2532 = vmatpush1.msra.mxu0 %v2076
    %2533 = vmatprep.subr.mxu0 0.0
    %2534 = vmatpush1.msra.mxu0 0.0
    %2535 = vmatprep.subr.mxu0 0.0
    %2536 = vmatpush1.msra.mxu0 0.0
    %2537 = vmatprep.subr.mxu0 0.0
    %2538 = vmatpush1.msra.mxu0 0.0
    %2539 = vmatprep.subr.mxu0 0.0
    %2540 = vmatpush1.msra.mxu0 0.0
    %2541 = vmatprep.subr.mxu0 0.0
    %2542 = vmatpush1.msra.mxu0 0.0
    %2543 = vmatprep.subr.mxu0 0.0
    %2544 = vmatpush1.msra.mxu0 0.0
    %2545 = vmatprep.subr.mxu0 0.0
    %2546 = vmatpush1.msra.mxu0 0.0
    %2547 = vmatprep.subr.mxu0 0.0
    %2548 = vmatpush1.msra.mxu0 0.0
    %2549 = vmatprep.subr.mxu0 0.0
    %2550 = vmatpush1.msra.mxu0 0.0
    %2551 = vmatprep.subr.mxu0 0.0
    %2552 = vmatpush1.msra.mxu0 0.0
    %2553 = vmatprep.subr.mxu0 0.0
    %2554 = vmatpush1.msra.mxu0 0.0
    %2555 = vmatprep.subr.mxu0 0.0
    %2556 = vmatpush1.msra.mxu0 0.0
    %2557 = vmatprep.subr.mxu0 0.0
    %2558 = vmatpush1.msra.mxu0 0.0
    %2559 = vmatprep.subr.mxu0 0.0
    %2560 = vmatpush1.msra.mxu0 0.0
    %2561 = vmatprep.subr.mxu0 0.0
    %2562 = vmatpush1.msra.mxu0 0.0
    %2563 = vmatprep.subr.mxu0 0.0
    %2564 = vmatpush1.msra.mxu0 0.0
    %2565 = vmatprep.subr.mxu0 0.0
    %2566 = vmatpush1.msra.mxu0 0.0
    %2567 = vmatprep.subr.mxu0 0.0
    %2568 = vmatpush1.msra.mxu0 0.0
    %2569 = vmatprep.subr.mxu0 0.0
    %2570 = vmatpush1.msra.mxu0 0.0
    %2571 = vmatprep.subr.mxu0 0.0
    %2572 = vmatpush1.msra.mxu0 0.0
    %2573 = vmatprep.subr.mxu0 0.0
    %2574 = vmatpush1.msra.mxu0 0.0
    %2575 = vmatprep.subr.mxu0 0.0
    %2576 = vmatpush1.msra.mxu0 0.0
    %2577 = vmatprep.subr.mxu0 0.0
    %2578 = vmatpush1.msra.mxu0 0.0
    %2579 = vmatprep.subr.mxu0 0.0
    %2580 = vmatpush1.msra.mxu0 0.0
    %2581 = vmatprep.subr.mxu0 0.0
    %2582 = vmatpush1.msra.mxu0 0.0
    %2583 = vmatprep.subr.mxu0 0.0
    %2584 = vmatpush1.msra.mxu0 0.0
    %2585 = vmatprep.subr.mxu0 0.0
    %2586 = vmatpush1.msra.mxu0 0.0
    %2587 = vmatprep.subr.mxu0 0.0
    %2588 = vmatpush1.msra.mxu0 0.0
    %2589 = vmatprep.subr.mxu0 0.0
    %2590 = vmatpush1.msra.mxu0 0.0
    %2591 = vmatprep.subr.mxu0 0.0
    %2592 = vmatpush1.msra.mxu0 0.0
    %2593 = vmatprep.subr.mxu0 0.0
    %2594 = vmatpush1.msra.mxu0 0.0
    %2595 = vmatprep.mubr.f32.mxu0 0.0
    %2596 = vmatmul.mubr.f32.gmra.mrb[0].mxu0 %v2529
    %v2597 = vpop.f32.mrb[0].mxu0
    %v2598 = vadd.f32 0.0, %v2597
    %v2599 = vpop.f32.mrb[0].mxu0
    %2600 = vdwg.mxu0
    %v2602 = vsel %vm2176, %v2350, 0
    %2604 = vmatprep.subr.mxu0 0.0
    %2605 = vmatpush1.msra.mxu0 %v2075
    %2606 = vmatprep.subr.mxu0 0.0
    %2607 = vmatpush1.msra.mxu0 0.0
    %2608 = vmatprep.subr.mxu0 0.0
    %2609 = vmatpush1.msra.mxu0 0.0
    %2610 = vmatprep.subr.mxu0 0.0
    %2611 = vmatpush1.msra.mxu0 0.0
    %2612 = vmatprep.subr.mxu0 0.0
    %2613 = vmatpush1.msra.mxu0 0.0
    %2614 = vmatprep.subr.mxu0 0.0
    %2615 = vmatpush1.msra.mxu0 0.0
    %2616 = vmatprep.subr.mxu0 0.0
    %2617 = vmatpush1.msra.mxu0 0.0
    %2618 = vmatprep.subr.mxu0 0.0
    %2619 = vmatpush1.msra.mxu0 0.0
    %2620 = vmatprep.subr.mxu0 0.0
    %2621 = vmatpush1.msra.mxu0 0.0
    %2622 = vmatprep.subr.mxu0 0.0
    %2623 = vmatpush1.msra.mxu0 0.0
    %2624 = vmatprep.subr.mxu0 0.0
    %2625 = vmatpush1.msra.mxu0 0.0
    %2626 = vmatprep.subr.mxu0 0.0
    %2627 = vmatpush1.msra.mxu0 0.0
    %2628 = vmatprep.subr.mxu0 0.0
    %2629 = vmatpush1.msra.mxu0 0.0
    %2630 = vmatprep.subr.mxu0 0.0
    %2631 = vmatpush1.msra.mxu0 0.0
    %2632 = vmatprep.subr.mxu0 0.0
    %2633 = vmatpush1.msra.mxu0 0.0
    %2634 = vmatprep.subr.mxu0 0.0
    %2635 = vmatpush1.msra.mxu0 0.0
    %2636 = vmatprep.subr.mxu0 0.0
    %2637 = vmatpush1.msra.mxu0 0.0
    %2638 = vmatprep.subr.mxu0 0.0
    %2639 = vmatpush1.msra.mxu0 0.0
    %2640 = vmatprep.subr.mxu0 0.0
    %2641 = vmatpush1.msra.mxu0 0.0
    %2642 = vmatprep.subr.mxu0 0.0
    %2643 = vmatpush1.msra.mxu0 0.0
    %2644 = vmatprep.subr.mxu0 0.0
    %2645 = vmatpush1.msra.mxu0 0.0
    %2646 = vmatprep.subr.mxu0 0.0
    %2647 = vmatpush1.msra.mxu0 0.0
    %2648 = vmatprep.subr.mxu0 0.0
    %2649 = vmatpush1.msra.mxu0 0.0
    %2650 = vmatprep.subr.mxu0 0.0
    %2651 = vmatpush1.msra.mxu0 0.0
    %2652 = vmatprep.subr.mxu0 0.0
    %2653 = vmatpush1.msra.mxu0 0.0
    %2654 = vmatprep.subr.mxu0 0.0
    %2655 = vmatpush1.msra.mxu0 0.0
    %2656 = vmatprep.subr.mxu0 0.0
    %2657 = vmatpush1.msra.mxu0 0.0
    %2658 = vmatprep.subr.mxu0 0.0
    %2659 = vmatpush1.msra.mxu0 0.0
    %2660 = vmatprep.subr.mxu0 0.0
    %2661 = vmatpush1.msra.mxu0 0.0
    %2662 = vmatprep.subr.mxu0 0.0
    %2663 = vmatpush1.msra.mxu0 0.0
    %2664 = vmatprep.subr.mxu0 0.0
    %2665 = vmatpush1.msra.mxu0 0.0
    %2666 = vmatprep.subr.mxu0 0.0
    %2667 = vmatpush1.msra.mxu0 0.0
    %2668 = vmatprep.mubr.f32.mxu0 0.0
    %2669 = vmatmul.mubr.f32.gmra.mrb[0].mxu0 %v2602
    %v2670 = vpop.f32.mrb[0].mxu0
    %v2671 = vadd.f32 %v2598, %v2670
    %v2672 = vpop.f32.mrb[0].mxu0
    %2673 = vdwg.mxu0
    %2674 = vrot.lane.b32.xlu0 %v2127, 112
    %v2675 = vpop.permute.xlu0 %2674
    %2676 = vrot.lane.b32.xlu0 %v2174, 112
    %v2677 = vpop.permute.xlu0 %2676
    %2678 = vrot.lane.b32.xlu0 %v2175, 112
    %v2679 = vpop.permute.xlu0 %2678
    %v2680 = vsel %vm2176, %v2675, 0
    %v2682 = vsel %vm2176, %v2677, 0
    %v2684 = vsel %vm2176, %v2679, 0
    %2686 = vmatprep.subr.mxu0 0.0
    %2687 = vmatpush1.xpose.msra.mxu0 %v2682
    %2688 = vmatprep.subr.mxu0 0.0
    %2689 = vmatpush1.xpose.msra.mxu0 %v2684
    %2690 = vmatprep.subr.mxu0 0.0
    %2691 = vmatpush1.xpose.msra.mxu0 0.0
    %2692 = vmatprep.subr.mxu0 0.0
    %2693 = vmatpush1.xpose.msra.mxu0 0.0
    %2694 = vmatprep.subr.mxu0 0.0
    %2695 = vmatpush1.xpose.msra.mxu0 0.0
    %2696 = vmatprep.subr.mxu0 0.0
    %2697 = vmatpush1.xpose.msra.mxu0 0.0
    %2698 = vmatprep.subr.mxu0 0.0
    %2699 = vmatpush1.xpose.msra.mxu0 0.0
    %2700 = vmatprep.subr.mxu0 0.0
    %2701 = vmatpush1.xpose.msra.mxu0 0.0
    %2702 = vmatprep.subr.mxu0 0.0
    %2703 = vmatpush1.xpose.msra.mxu0 0.0
    %2704 = vmatprep.subr.mxu0 0.0
    %2705 = vmatpush1.xpose.msra.mxu0 0.0
    %2706 = vmatprep.subr.mxu0 0.0
    %2707 = vmatpush1.xpose.msra.mxu0 0.0
    %2708 = vmatprep.subr.mxu0 0.0
    %2709 = vmatpush1.xpose.msra.mxu0 0.0
    %2710 = vmatprep.subr.mxu0 0.0
    %2711 = vmatpush1.xpose.msra.mxu0 0.0
    %2712 = vmatprep.subr.mxu0 0.0
    %2713 = vmatpush1.xpose.msra.mxu0 0.0
    %2714 = vmatprep.subr.mxu0 0.0
    %2715 = vmatpush1.xpose.msra.mxu0 0.0
    %2716 = vmatprep.subr.mxu0 0.0
    %2717 = vmatpush1.xpose.msra.mxu0 0.0
    %2718 = vmatprep.subr.mxu0 0.0
    %2719 = vmatpush1.xpose.msra.mxu0 0.0
    %2720 = vmatprep.subr.mxu0 0.0
    %2721 = vmatpush1.xpose.msra.mxu0 0.0
    %2722 = vmatprep.subr.mxu0 0.0
    %2723 = vmatpush1.xpose.msra.mxu0 0.0
    %2724 = vmatprep.subr.mxu0 0.0
    %2725 = vmatpush1.xpose.msra.mxu0 0.0
    %2726 = vmatprep.subr.mxu0 0.0
    %2727 = vmatpush1.xpose.msra.mxu0 0.0
    %2728 = vmatprep.subr.mxu0 0.0
    %2729 = vmatpush1.xpose.msra.mxu0 0.0
    %2730 = vmatprep.subr.mxu0 0.0
    %2731 = vmatpush1.xpose.msra.mxu0 0.0
    %2732 = vmatprep.subr.mxu0 0.0
    %2733 = vmatpush1.xpose.msra.mxu0 0.0
    %2734 = vmatprep.subr.mxu0 0.0
    %2735 = vmatpush1.xpose.msra.mxu0 0.0
    %2736 = vmatprep.subr.mxu0 0.0
    %2737 = vmatpush1.xpose.msra.mxu0 0.0
    %2738 = vmatprep.subr.mxu0 0.0
    %2739 = vmatpush1.xpose.msra.mxu0 0.0
    %2740 = vmatprep.subr.mxu0 0.0
    %2741 = vmatpush1.xpose.msra.mxu0 0.0
    %2742 = vmatprep.subr.mxu0 0.0
    %2743 = vmatpush1.xpose.msra.mxu0 0.0
    %2744 = vmatprep.subr.mxu0 0.0
    %2745 = vmatpush1.xpose.msra.mxu0 0.0
    %2746 = vmatprep.subr.mxu0 0.0
    %2747 = vmatpush1.xpose.msra.mxu0 0.0
    %2748 = vmatprep.subr.mxu0 0.0
    %2749 = vmatpush1.xpose.msra.mxu0 0.0
    %2750 = vmatprep.mubr.f32.mxu0 0.0
    %2751 = vmatmul.mubr.f32.gmra.mrb[0].mxu0 %v2680
    %v2752 = vpop.f32.mrb[0].mxu0
    %v2753 = vadd.f32 0.0, %v2752
    %v2754 = vpop.f32.mrb[0].mxu0
    %2755 = vdwg.mxu0
    %v2756 = vmul.f32 %v2753, 0.35355338
    %v2757 = vadd.f32 %v2756, %v2258
    %v2758 = vsel %vm2261, %v2757, -inf
    %2759 = vmax.xlane.f32.xlu0 %v2758
    %v2760 = vpop.xlane.xlu0 %2759
    %v2761 = vsub.f32 %v2757, %v2760
    %v2762 = vmul.f32 %v2761, 1.442695
    %v2763 = vpow.pop %v2762
    %v2764 = vsel %vm2261, %v2763, 0.0
    %2765 = vadd.xlane.f32.xlu0 %v2764
    %v2766 = vpop.xlane.xlu0 %2765
    %v2767 = vrcp.pop %v2766
    %v2768 = vmul.f32 %v2763, %v2767
    %2769 = vrot.lane.b32.xlu0 %v2174, 80
    %v2770 = vpop.permute.xlu0 %2769
    %2771 = vrot.lane.b32.xlu0 %v2175, 80
    %v2772 = vpop.permute.xlu0 %2771
    %v2775 = vsel %vm2261, %v2768, 0
    %v2777 = vsel %vm1690, %v2772, 0
    %2779 = vmatprep.subr.mxu0 0.0
    %2780 = vmatpush1.msra.mxu0 %v2770
    %2781 = vmatprep.subr.mxu0 0.0
    %2782 = vmatpush1.msra.mxu0 %v2777
    %2783 = vmatprep.subr.mxu0 0.0
    %2784 = vmatpush1.msra.mxu0 0.0
    %2785 = vmatprep.subr.mxu0 0.0
    %2786 = vmatpush1.msra.mxu0 0.0
    %2787 = vmatprep.subr.mxu0 0.0
    %2788 = vmatpush1.msra.mxu0 0.0
    %2789 = vmatprep.subr.mxu0 0.0
    %2790 = vmatpush1.msra.mxu0 0.0
    %2791 = vmatprep.subr.mxu0 0.0
    %2792 = vmatpush1.msra.mxu0 0.0
    %2793 = vmatprep.subr.mxu0 0.0
    %2794 = vmatpush1.msra.mxu0 0.0
    %2795 = vmatprep.subr.mxu0 0.0
    %2796 = vmatpush1.msra.mxu0 0.0
    %2797 = vmatprep.subr.mxu0 0.0
    %2798 = vmatpush1.msra.mxu0 0.0
    %2799 = vmatprep.subr.mxu0 0.0
    %2800 = vmatpush1.msra.mxu0 0.0
    %2801 = vmatprep.subr.mxu0 0.0
    %2802 = vmatpush1.msra.mxu0 0.0
    %2803 = vmatprep.subr.mxu0 0.0
    %2804 = vmatpush1.msra.mxu0 0.0
    %2805 = vmatprep.subr.mxu0 0.0
    %2806 = vmatpush1.msra.mxu0 0.0
    %2807 = vmatprep.subr.mxu0 0.0
    %2808 = vmatpush1.msra.mxu0 0.0
    %2809 = vmatprep.subr.mxu0 0.0
    %2810 = vmatpush1.msra.mxu0 0.0
    %2811 = vmatprep.subr.mxu0 0.0
    %2812 = vmatpush1.msra.mxu0 0.0
    %2813 = vmatprep.subr.mxu0 0.0
    %2814 = vmatpush1.msra.mxu0 0.0
    %2815 = vmatprep.subr.mxu0 0.0
    %2816 = vmatpush1.msra.mxu0 0.0
    %2817 = vmatprep.subr.mxu0 0.0
    %2818 = vmatpush1.msra.mxu0 0.0
    %2819 = vmatprep.subr.mxu0 0.0
    %2820 = vmatpush1.msra.mxu0 0.0
    %2821 = vmatprep.subr.mxu0 0.0
    %2822 = vmatpush1.msra.mxu0 0.0
    %2823 = vmatprep.subr.mxu0 0.0
    %2824 = vmatpush1.msra.mxu0 0.0
    %2825 = vmatprep.subr.mxu0 0.0
    %2826 = vmatpush1.msra.mxu0 0.0
    %2827 = vmatprep.subr.mxu0 0.0
    %2828 = vmatpush1.msra.mxu0 0.0
    %2829 = vmatprep.subr.mxu0 0.0
    %2830 = vmatpush1.msra.mxu0 0.0
    %2831 = vmatprep.subr.mxu0 0.0
    %2832 = vmatpush1.msra.mxu0 0.0
    %2833 = vmatprep.subr.mxu0 0.0
    %2834 = vmatpush1.msra.mxu0 0.0
    %2835 = vmatprep.subr.mxu0 0.0
    %2836 = vmatpush1.msra.mxu0 0.0
    %2837 = vmatprep.subr.mxu0 0.0
    %2838 = vmatpush1.msra.mxu0 0.0
    %2839 = vmatprep.subr.mxu0 0.0
    %2840 = vmatpush1.msra.mxu0 0.0
    %2841 = vmatprep.subr.mxu0 0.0
    %2842 = vmatpush1.msra.mxu0 0.0
    %2843 = vmatprep.mubr.f32.mxu0 0.0
    %2844 = vmatmul.mubr.f32.gmra.mrb[0].mxu0 %v2775
    %v2845 = vpop.f32.mrb[0].mxu0
    %v2846 = vadd.f32 0.0, %v2845
    %v2847 = vpop.f32.mrb[0].mxu0
    %2848 = vdwg.mxu0
    %v2850 = vsel %vm2176, %v2846, 0
    %2852 = vmatprep.subr.mxu0 0.0
    %2853 = vmatpush1.msra.mxu0 %v2077
    %2854 = vmatprep.subr.mxu0 0.0
    %2855 = vmatpush1.msra.mxu0 0.0
    %2856 = vmatprep.subr.mxu0 0.0
    %2857 = vmatpush1.msra.mxu0 0.0
    %2858 = vmatprep.subr.mxu0 0.0
    %2859 = vmatpush1.msra.mxu0 0.0
    %2860 = vmatprep.subr.mxu0 0.0
    %2861 = vmatpush1.msra.mxu0 0.0
    %2862 = vmatprep.subr.mxu0 0.0
    %2863 = vmatpush1.msra.mxu0 0.0
    %2864 = vmatprep.subr.mxu0 0.0
    %2865 = vmatpush1.msra.mxu0 0.0
    %2866 = vmatprep.subr.mxu0 0.0
    %2867 = vmatpush1.msra.mxu0 0.0
    %2868 = vmatprep.subr.mxu0 0.0
    %2869 = vmatpush1.msra.mxu0 0.0
    %2870 = vmatprep.subr.mxu0 0.0
    %2871 = vmatpush1.msra.mxu0 0.0
    %2872 = vmatprep.subr.mxu0 0.0
    %2873 = vmatpush1.msra.mxu0 0.0
    %2874 = vmatprep.subr.mxu0 0.0
    %2875 = vmatpush1.msra.mxu0 0.0
    %2876 = vmatprep.subr.mxu0 0.0
    %2877 = vmatpush1.msra.mxu0 0.0
    %2878 = vmatprep.subr.mxu0 0.0
    %2879 = vmatpush1.msra.mxu0 0.0
    %2880 = vmatprep.subr.mxu0 0.0
    %2881 = vmatpush1.msra.mxu0 0.0
    %2882 = vmatprep.subr.mxu0 0.0
    %2883 = vmatpush1.msra.mxu0 0.0
    %2884 = vmatprep.subr.mxu0 0.0
    %2885 = vmatpush1.msra.mxu0 0.0
    %2886 = vmatprep.subr.mxu0 0.0
    %2887 = vmatpush1.msra.mxu0 0.0
    %2888 = vmatprep.subr.mxu0 0.0
    %2889 = vmatpush1.msra.mxu0 0.0
    %2890 = vmatprep.subr.mxu0 0.0
    %2891 = vmatpush1.msra.mxu0 0.0
    %2892 = vmatprep.subr.mxu0 0.0
    %2893 = vmatpush1.msra.mxu0 0.0
    %2894 = vmatprep.subr.mxu0 0.0
    %2895 = vmatpush1.msra.mxu0 0.0
    %2896 = vmatprep.subr.mxu0 0.0
    %2897 = vmatpush1.msra.mxu0 0.0
    %2898 = vmatprep.subr.mxu0 0.0
    %2899 = vmatpush1.msra.mxu0 0.0
    %2900 = vmatprep.subr.mxu0 0.0
    %2901 = vmatpush1.msra.mxu0 0.0
    %2902 = vmatprep.subr.mxu0 0.0
    %2903 = vmatpush1.msra.mxu0 0.0
    %2904 = vmatprep.subr.mxu0 0.0
    %2905 = vmatpush1.msra.mxu0 0.0
    %2906 = vmatprep.subr.mxu0 0.0
    %2907 = vmatpush1.msra.mxu0 0.0
    %2908 = vmatprep.subr.mxu0 0.0
    %2909 = vmatpush1.msra.mxu0 0.0
    %2910 = vmatprep.subr.mxu0 0.0
    %2911 = vmatpush1.msra.mxu0 0.0
    %2912 = vmatprep.subr.mxu0 0.0
    %2913 = vmatpush1.msra.mxu0 0.0
    %2914 = vmatprep.subr.mxu0 0.0
    %2915 = vmatpush1.msra.mxu0 0.0
    %2916 = vmatprep.mubr.f32.mxu0 0.0
    %2917 = vmatmul.mubr.f32.gmra.mrb[0].mxu0 %v2850
    %v2918 = vpop.f32.mrb[0].mxu0
    %v2919 = vadd.f32 0.0, %v2918
    %v2920 = vpop.f32.mrb[0].mxu0
    %2921 = vdwg.mxu0
    %v2922 = vadd.f32 %v2671, %v2919
    %2923 = vrot.lane.b32.xlu0 %v2127, 104
    %v2924 = vpop.permute.xlu0 %2923
    %2925 = vrot.lane.b32.xlu0 %v2174, 104
    %v2926 = vpop.permute.xlu0 %2925
    %2927 = vrot.lane.b32.xlu0 %v2175, 104
    %v2928 = vpop.permute.xlu0 %2927
    %v2929 = vsel %vm2176, %v2924, 0
    %v2931 = vsel %vm2176, %v2926, 0
    %v2933 = vsel %vm2176, %v2928, 0
    %2935 = vmatprep.subr.mxu0 0.0
    %2936 = vmatpush1.xpose.msra.mxu0 %v2931
    %2937 = vmatprep.subr.mxu0 0.0
    %2938 = vmatpush1.xpose.msra.mxu0 %v2933
    %2939 = vmatprep.subr.mxu0 0.0
    %2940 = vmatpush1.xpose.msra.mxu0 0.0
    %2941 = vmatprep.subr.mxu0 0.0
    %2942 = vmatpush1.xpose.msra.mxu0 0.0
    %2943 = vmatprep.subr.mxu0 0.0
    %2944 = vmatpush1.xpose.msra.mxu0 0.0
    %2945 = vmatprep.subr.mxu0 0.0
    %2946 = vmatpush1.xpose.msra.mxu0 0.0
    %2947 = vmatprep.subr.mxu0 0.0
    %2948 = vmatpush1.xpose.msra.mxu0 0.0
    %2949 = vmatprep.subr.mxu0 0.0
    %2950 = vmatpush1.xpose.msra.mxu0 0.0
    %2951 = vmatprep.subr.mxu0 0.0
    %2952 = vmatpush1.xpose.msra.mxu0 0.0
    %2953 = vmatprep.subr.mxu0 0.0
    %2954 = vmatpush1.xpose.msra.mxu0 0.0
    %2955 = vmatprep.subr.mxu0 0.0
    %2956 = vmatpush1.xpose.msra.mxu0 0.0
    %2957 = vmatprep.subr.mxu0 0.0
    %2958 = vmatpush1.xpose.msra.mxu0 0.0
    %2959 = vmatprep.subr.mxu0 0.0
    %2960 = vmatpush1.xpose.msra.mxu0 0.0
    %2961 = vmatprep.subr.mxu0 0.0
    %2962 = vmatpush1.xpose.msra.mxu0 0.0
    %2963 = vmatprep.subr.mxu0 0.0
    %2964 = vmatpush1.xpose.msra.mxu0 0.0
    %2965 = vmatprep.subr.mxu0 0.0
    %2966 = vmatpush1.xpose.msra.mxu0 0.0
    %2967 = vmatprep.subr.mxu0 0.0
    %2968 = vmatpush1.xpose.msra.mxu0 0.0
    %2969 = vmatprep.subr.mxu0 0.0
    %2970 = vmatpush1.xpose.msra.mxu0 0.0
    %2971 = vmatprep.subr.mxu0 0.0
    %2972 = vmatpush1.xpose.msra.mxu0 0.0
    %2973 = vmatprep.subr.mxu0 0.0
    %2974 = vmatpush1.xpose.msra.mxu0 0.0
    %2975 = vmatprep.subr.mxu0 0.0
    %2976 = vmatpush1.xpose.msra.mxu0 0.0
    %2977 = vmatprep.subr.mxu0 0.0
    %2978 = vmatpush1.xpose.msra.mxu0 0.0
    %2979 = vmatprep.subr.mxu0 0.0
    %2980 = vmatpush1.xpose.msra.mxu0 0.0
    %2981 = vmatprep.subr.mxu0 0.0
    %2982 = vmatpush1.xpose.msra.mxu0 0.0
    %2983 = vmatprep.subr.mxu0 0.0
    %2984 = vmatpush1.xpose.msra.mxu0 0.0
    %2985 = vmatprep.subr.mxu0 0.0
    %2986 = vmatpush1.xpose.msra.mxu0 0.0
    %2987 = vmatprep.subr.mxu0 0.0
    %2988 = vmatpush1.xpose.msra.mxu0 0.0
    %2989 = vmatprep.subr.mxu0 0.0
    %2990 = vmatpush1.xpose.msra.mxu0 0.0
    %2991 = vmatprep.subr.mxu0 0.0
    %2992 = vmatpush1.xpose.msra.mxu0 0.0
    %2993 = vmatprep.subr.mxu0 0.0
    %2994 = vmatpush1.xpose.msra.mxu0 0.0
    %2995 = vmatprep.subr.mxu0 0.0
    %2996 = vmatpush1.xpose.msra.mxu0 0.0
    %2997 = vmatprep.subr.mxu0 0.0
    %2998 = vmatpush1.xpose.msra.mxu0 0.0
    %2999 = vmatprep.mubr.f32.mxu0 0.0
    %3000 = vmatmul.mubr.f32.gmra.mrb[0].mxu0 %v2929
    %v3001 = vpop.f32.mrb[0].mxu0
    %v3002 = vadd.f32 0.0, %v3001
    %v3003 = vpop.f32.mrb[0].mxu0
    %3004 = vdwg.mxu0
    %v3005 = vmul.f32 %v3002, 0.35355338
    %v3006 = vadd.f32 %v3005, %v2258
    %v3007 = vsel %vm2261, %v3006, -inf
    %3008 = vmax.xlane.f32.xlu0 %v3007
    %v3009 = vpop.xlane.xlu0 %3008
    %v3010 = vsub.f32 %v3006, %v3009
    %v3011 = vmul.f32 %v3010, 1.442695
    %v3012 = vpow.pop %v3011
    %v3013 = vsel %vm2261, %v3012, 0.0
    %3014 = vadd.xlane.f32.xlu0 %v3013
    %v3015 = vpop.xlane.xlu0 %3014
    %v3016 = vrcp.pop %v3015
    %v3017 = vmul.f32 %v3012, %v3016
    %3018 = vrot.lane.b32.xlu0 %v2174, 72
    %v3019 = vpop.permute.xlu0 %3018
    %3020 = vrot.lane.b32.xlu0 %v2175, 72
    %v3021 = vpop.permute.xlu0 %3020
    %v3024 = vsel %vm2261, %v3017, 0
    %v3026 = vsel %vm1690, %v3021, 0
    %3028 = vmatprep.subr.mxu0 0.0
    %3029 = vmatpush1.msra.mxu0 %v3019
    %3030 = vmatprep.subr.mxu0 0.0
    %3031 = vmatpush1.msra.mxu0 %v3026
    %3032 = vmatprep.subr.mxu0 0.0
    %3033 = vmatpush1.msra.mxu0 0.0
    %3034 = vmatprep.subr.mxu0 0.0
    %3035 = vmatpush1.msra.mxu0 0.0
    %3036 = vmatprep.subr.mxu0 0.0
    %3037 = vmatpush1.msra.mxu0 0.0
    %3038 = vmatprep.subr.mxu0 0.0
    %3039 = vmatpush1.msra.mxu0 0.0
    %3040 = vmatprep.subr.mxu0 0.0
    %3041 = vmatpush1.msra.mxu0 0.0
    %3042 = vmatprep.subr.mxu0 0.0
    %3043 = vmatpush1.msra.mxu0 0.0
    %3044 = vmatprep.subr.mxu0 0.0
    %3045 = vmatpush1.msra.mxu0 0.0
    %3046 = vmatprep.subr.mxu0 0.0
    %3047 = vmatpush1.msra.mxu0 0.0
    %3048 = vmatprep.subr.mxu0 0.0
    %3049 = vmatpush1.msra.mxu0 0.0
    %3050 = vmatprep.subr.mxu0 0.0
    %3051 = vmatpush1.msra.mxu0 0.0
    %3052 = vmatprep.subr.mxu0 0.0
    %3053 = vmatpush1.msra.mxu0 0.0
    %3054 = vmatprep.subr.mxu0 0.0
    %3055 = vmatpush1.msra.mxu0 0.0
    %3056 = vmatprep.subr.mxu0 0.0
    %3057 = vmatpush1.msra.mxu0 0.0
    %3058 = vmatprep.subr.mxu0 0.0
    %3059 = vmatpush1.msra.mxu0 0.0
    %3060 = vmatprep.subr.mxu0 0.0
    %3061 = vmatpush1.msra.mxu0 0.0
    %3062 = vmatprep.subr.mxu0 0.0
    %3063 = vmatpush1.msra.mxu0 0.0
    %3064 = vmatprep.subr.mxu0 0.0
    %3065 = vmatpush1.msra.mxu0 0.0
    %3066 = vmatprep.subr.mxu0 0.0
    %3067 = vmatpush1.msra.mxu0 0.0
    %3068 = vmatprep.subr.mxu0 0.0
    %3069 = vmatpush1.msra.mxu0 0.0
    %3070 = vmatprep.subr.mxu0 0.0
    %3071 = vmatpush1.msra.mxu0 0.0
    %3072 = vmatprep.subr.mxu0 0.0
    %3073 = vmatpush1.msra.mxu0 0.0
    %3074 = vmatprep.subr.mxu0 0.0
    %3075 = vmatpush1.msra.mxu0 0.0
    %3076 = vmatprep.subr.mxu0 0.0
    %3077 = vmatpush1.msra.mxu0 0.0
    %3078 = vmatprep.subr.mxu0 0.0
    %3079 = vmatpush1.msra.mxu0 0.0
    %3080 = vmatprep.subr.mxu0 0.0
    %3081 = vmatpush1.msra.mxu0 0.0
    %3082 = vmatprep.subr.mxu0 0.0
    %3083 = vmatpush1.msra.mxu0 0.0
    %3084 = vmatprep.subr.mxu0 0.0
    %3085 = vmatpush1.msra.mxu0 0.0
    %3086 = vmatprep.subr.mxu0 0.0
    %3087 = vmatpush1.msra.mxu0 0.0
    %3088 = vmatprep.subr.mxu0 0.0
    %3089 = vmatpush1.msra.mxu0 0.0
    %3090 = vmatprep.subr.mxu0 0.0
    %3091 = vmatpush1.msra.mxu0 0.0
    %3092 = vmatprep.mubr.f32.mxu0 0.0
    %3093 = vmatmul.mubr.f32.gmra.mrb[0].mxu0 %v3024
    %v3094 = vpop.f32.mrb[0].mxu0
    %v3095 = vadd.f32 0.0, %v3094
    %v3096 = vpop.f32.mrb[0].mxu0
    %3097 = vdwg.mxu0
    %v3099 = vsel %vm2176, %v3095, 0
    %3101 = vmatprep.subr.mxu0 0.0
    %3102 = vmatpush1.msra.mxu0 %v2078
    %3103 = vmatprep.subr.mxu0 0.0
    %3104 = vmatpush1.msra.mxu0 0.0
    %3105 = vmatprep.subr.mxu0 0.0
    %3106 = vmatpush1.msra.mxu0 0.0
    %3107 = vmatprep.subr.mxu0 0.0
    %3108 = vmatpush1.msra.mxu0 0.0
    %3109 = vmatprep.subr.mxu0 0.0
    %3110 = vmatpush1.msra.mxu0 0.0
    %3111 = vmatprep.subr.mxu0 0.0
    %3112 = vmatpush1.msra.mxu0 0.0
    %3113 = vmatprep.subr.mxu0 0.0
    %3114 = vmatpush1.msra.mxu0 0.0
    %3115 = vmatprep.subr.mxu0 0.0
    %3116 = vmatpush1.msra.mxu0 0.0
    %3117 = vmatprep.subr.mxu0 0.0
    %3118 = vmatpush1.msra.mxu0 0.0
    %3119 = vmatprep.subr.mxu0 0.0
    %3120 = vmatpush1.msra.mxu0 0.0
    %3121 = vmatprep.subr.mxu0 0.0
    %3122 = vmatpush1.msra.mxu0 0.0
    %3123 = vmatprep.subr.mxu0 0.0
    %3124 = vmatpush1.msra.mxu0 0.0
    %3125 = vmatprep.subr.mxu0 0.0
    %3126 = vmatpush1.msra.mxu0 0.0
    %3127 = vmatprep.subr.mxu0 0.0
    %3128 = vmatpush1.msra.mxu0 0.0
    %3129 = vmatprep.subr.mxu0 0.0
    %3130 = vmatpush1.msra.mxu0 0.0
    %3131 = vmatprep.subr.mxu0 0.0
    %3132 = vmatpush1.msra.mxu0 0.0
    %3133 = vmatprep.subr.mxu0 0.0
    %3134 = vmatpush1.msra.mxu0 0.0
    %3135 = vmatprep.subr.mxu0 0.0
    %3136 = vmatpush1.msra.mxu0 0.0
    %3137 = vmatprep.subr.mxu0 0.0
    %3138 = vmatpush1.msra.mxu0 0.0
    %3139 = vmatprep.subr.mxu0 0.0
    %3140 = vmatpush1.msra.mxu0 0.0
    %3141 = vmatprep.subr.mxu0 0.0
    %3142 = vmatpush1.msra.mxu0 0.0
    %3143 = vmatprep.subr.mxu0 0.0
    %3144 = vmatpush1.msra.mxu0 0.0
    %3145 = vmatprep.subr.mxu0 0.0
    %3146 = vmatpush1.msra.mxu0 0.0
    %3147 = vmatprep.subr.mxu0 0.0
    %3148 = vmatpush1.msra.mxu0 0.0
    %3149 = vmatprep.subr.mxu0 0.0
    %3150 = vmatpush1.msra.mxu0 0.0
    %3151 = vmatprep.subr.mxu0 0.0
    %3152 = vmatpush1.msra.mxu0 0.0
    %3153 = vmatprep.subr.mxu0 0.0
    %3154 = vmatpush1.msra.mxu0 0.0
    %3155 = vmatprep.subr.mxu0 0.0
    %3156 = vmatpush1.msra.mxu0 0.0
    %3157 = vmatprep.subr.mxu0 0.0
    %3158 = vmatpush1.msra.mxu0 0.0
    %3159 = vmatprep.subr.mxu0 0.0
    %3160 = vmatpush1.msra.mxu0 0.0
    %3161 = vmatprep.subr.mxu0 0.0
    %3162 = vmatpush1.msra.mxu0 0.0
    %3163 = vmatprep.subr.mxu0 0.0
    %3164 = vmatpush1.msra.mxu0 0.0
    %3165 = vmatprep.mubr.f32.mxu0 0.0
    %3166 = vmatmul.mubr.f32.gmra.mrb[0].mxu0 %v3099
    %v3167 = vpop.f32.mrb[0].mxu0
    %v3168 = vadd.f32 0.0, %v3167
    %v3169 = vpop.f32.mrb[0].mxu0
    %3170 = vdwg.mxu0
    %v3171 = vadd.f32 %v2922, %v3168
    %3172 = vrot.lane.b32.xlu0 %v2447, 10
    %v3173 = vpop.permute.xlu0 %3172
    %3175 = vrot.lane.b32.xlu0 %v2768, 20
    %v3176 = vpop.permute.xlu0 %3175
    %3178 = vrot.lane.b32.xlu0 %v3017, 30
    %v3179 = vpop.permute.xlu0 %3178
    %v3181 = vsel %vm2261, %v2272, %v3173
    %vm3182 = vcmask 162816
    %v3183 = vsel %vm3182, %v3181, %v3176
    %vm3184 = vcmask 244736
    %v3185 = vsel %vm3184, %v3183, %v3179
    %vm3186 = vcmask 326656
    %3187 = vst.msk [vmem:[#allocation31] sm:$0xff] %vm3186, %v3185
    %v3189 = vcombine.high %v3171, %v3171
    %v3191 = vunpack.c.l.s4 1966171168
    %v3192 = vunpack.c.0.s8 %v3191
    %v3193 = vlaneseq
    %v3194 = vshrl.u32 %v3193, 7
    %v3195 = vsub.s32 %v3192, %v3194
    %v3196 = vrot.slane %v3171, %v3195
    %v3198 = vunpack.c.l.s4 1966171168
    %v3199 = vunpack.c.0.s8 %v3198
    %v3200 = vlaneseq
    %v3201 = vshrl.u32 %v3200, 7
    %v3202 = vsub.s32 %v3199, %v3201
    %v3203 = vrot.slane %v3189, %v3202
    %v3204 = vcombine.high %v3196, %v3196
    %v3205 = vcombine.high %v3203, %v3203
    %v3207 = vunpack.c.l.s4 1966171168
    %v3208 = vunpack.c.0.s8 %v3207
    %v3209 = vlaneseq
    %v3210 = vshrl.u32 %v3209, 7
    %v3211 = vsub.s32 %v3208, %v3210
    %v3212 = vrot.slane %v3196, %v3211
    %v3214 = vunpack.c.l.s4 1966171168
    %v3215 = vunpack.c.0.s8 %v3214
    %v3216 = vlaneseq
    %v3217 = vshrl.u32 %v3216, 7
    %v3218 = vsub.s32 %v3215, %v3217
    %v3219 = vrot.slane %v3203, %v3218
    %v3221 = vunpack.c.l.s4 1966171168
    %v3222 = vunpack.c.0.s8 %v3221
    %v3223 = vlaneseq
    %v3224 = vshrl.u32 %v3223, 7
    %v3225 = vsub.s32 %v3222, %v3224
    %v3226 = vrot.slane %v3204, %v3225
    %v3228 = vunpack.c.l.s4 1966171168
    %v3229 = vunpack.c.0.s8 %v3228
    %v3230 = vlaneseq
    %v3231 = vshrl.u32 %v3230, 7
    %v3232 = vsub.s32 %v3229, %v3231
    %v3233 = vrot.slane %v3205, %v3232
    %v3234 = vcombine.high %v3212, %v3212
    %v3235 = vcombine.high %v3219, %v3219
    %v3236 = vcombine.high %v3226, %v3226
    %v3237 = vcombine.high %v3233, %v3233
    %vm3246 = vcmask 253952
    %3247 = vst.msk [vmem:[#allocation2] sm:$0x1] %vm3246, %v3212
    %3248 = vst.msk [vmem:[#allocation2 + $0x2] sm:$0x1] %vm3246, %v3226
    %3249 = vst.msk [vmem:[#allocation2 + $0x4] sm:$0x1] %vm3246, %v3234
    %3250 = vst.msk [vmem:[#allocation2 + $0x6] sm:$0x1] %vm3246, %v3236
    %3251 = vst.msk [vmem:[#allocation2 + $0x8] sm:$0x1] %vm3246, %v3219
    %3252 = vst.msk [vmem:[#allocation2 + $0xa] sm:$0x1] %vm3246, %v3233
    %3253 = vst.msk [vmem:[#allocation2 + $0xc] sm:$0x1] %vm3246, %v3235
    %3254 = vst.msk [vmem:[#allocation2 + $0xe] sm:$0x1] %vm3246, %v3237
    %s3255 = scalar_lea.vmem [#allocation8], 1
    %v3256 = vld [vmem:[%s3255] sm:$0x1]
    %vm3257 = vcmp.gt.s32.totalorder %v3256, 0
    %v3258 = vsel %vm3257, -1e+09, 0.0
    %v3259 = vlaneseq
    %v3260 = vshrl.u32 %v3259, 7
    %v3261 = vsub.s32 1, %v3260
    %v3262 = vrot.slane %v2003, %v3261
    %v3263 = vlaneseq
    %v3264 = vshrl.u32 %v3263, 7
    %v3265 = vsub.s32 1, %v3264
    %v3266 = vrot.slane %v2011, %v3265
    %v3267 = vlaneseq
    %v3268 = vshrl.u32 %v3267, 7
    %v3269 = vsub.s32 1, %v3268
    %v3270 = vrot.slane %v2010, %v3269
    %v3271 = vlaneseq
    %v3272 = vshrl.u32 %v3271, 7
    %v3273 = vsub.s32 1, %v3272
    %v3274 = vrot.slane %v2012, %v3273
    %v3275 = vlaneseq
    %v3276 = vshrl.u32 %v3275, 7
    %v3277 = vsub.s32 1, %v3276
    %v3278 = vrot.slane %v2020, %v3277
    %v3279 = vlaneseq
    %v3280 = vshrl.u32 %v3279, 7
    %v3281 = vsub.s32 1, %v3280
    %v3282 = vrot.slane %v2028, %v3281
    %v3283 = vlaneseq
    %v3284 = vshrl.u32 %v3283, 7
    %v3285 = vsub.s32 1, %v3284
    %v3286 = vrot.slane %v2027, %v3285
    %v3287 = vlaneseq
    %v3288 = vshrl.u32 %v3287, 7
    %v3289 = vsub.s32 1, %v3288
    %v3290 = vrot.slane %v2029, %v3289
    %v3291 = vsel %vm2114, %v3266, %v3262
    %v3292 = vsel %vm2116, %v3270, %v3291
    %v3293 = vsel %vm2118, %v3274, %v3292
    %v3294 = vsel %vm2120, %v3278, %v3293
    %v3295 = vsel %vm2122, %v3282, %v3294
    %v3296 = vsel %vm2124, %v3286, %v3295
    %v3297 = vsel %vm2126, %v3290, %v3296
    %v3298 = vlaneseq
    %v3299 = vshrl.u32 %v3298, 7
    %v3300 = vsub.s32 1, %v3299
    %v3301 = vrot.slane %v2040, %v3300
    %v3302 = vlaneseq
    %v3303 = vshrl.u32 %v3302, 7
    %v3304 = vsub.s32 1, %v3303
    %v3305 = vrot.slane %v2048, %v3304
    %v3306 = vlaneseq
    %v3307 = vshrl.u32 %v3306, 7
    %v3308 = vsub.s32 1, %v3307
    %v3309 = vrot.slane %v2047, %v3308
    %v3310 = vlaneseq
    %v3311 = vshrl.u32 %v3310, 7
    %v3312 = vsub.s32 1, %v3311
    %v3313 = vrot.slane %v2049, %v3312
    %v3314 = vlaneseq
    %v3315 = vshrl.u32 %v3314, 7
    %v3316 = vsub.s32 1, %v3315
    %v3317 = vrot.slane %v2057, %v3316
    %v3318 = vlaneseq
    %v3319 = vshrl.u32 %v3318, 7
    %v3320 = vsub.s32 1, %v3319
    %v3321 = vrot.slane %v2065, %v3320
    %v3322 = vlaneseq
    %v3323 = vshrl.u32 %v3322, 7
    %v3324 = vsub.s32 1, %v3323
    %v3325 = vrot.slane %v2064, %v3324
    %v3326 = vlaneseq
    %v3327 = vshrl.u32 %v3326, 7
    %v3328 = vsub.s32 1, %v3327
    %v3329 = vrot.slane %v2066, %v3328
    %v3330 = vlaneseq
    %v3331 = vshrl.u32 %v3330, 7
    %v3332 = vsub.s32 1, %v3331
    %v3333 = vrot.slane %v2073, %v3332
    %v3334 = vlaneseq
    %v3335 = vshrl.u32 %v3334, 7
    %v3336 = vsub.s32 1, %v3335
    %v3337 = vrot.slane %v2074, %v3336
    %v3338 = vsel %vm2114, %v3305, %v3301
    %v3339 = vsel %vm2116, %v3309, %v3338
    %v3340 = vsel %vm2118, %v3313, %v3339
    %v3341 = vsel %vm2120, %v3317, %v3340
    %v3342 = vsel %vm2122, %v3321, %v3341
    %v3343 = vsel %vm2124, %v3325, %v3342
    %v3344 = vsel %vm2126, %v3329, %v3343
    %v3345 = vsel %vm2114, %v3337, %v3333
    %v3346 = vsel %vm2176, %v3297, 0
    %v3348 = vsel %vm2176, %v3344, 0
    %v3350 = vsel %vm2176, %v3345, 0
    %3352 = vmatprep.subr.mxu0 0.0
    %3353 = vmatpush1.xpose.msra.mxu0 %v3348
    %3354 = vmatprep.subr.mxu0 0.0
    %3355 = vmatpush1.xpose.msra.mxu0 %v3350
    %3356 = vmatprep.subr.mxu0 0.0
    %3357 = vmatpush1.xpose.msra.mxu0 0.0
    %3358 = vmatprep.subr.mxu0 0.0
    %3359 = vmatpush1.xpose.msra.mxu0 0.0
    %3360 = vmatprep.subr.mxu0 0.0
    %3361 = vmatpush1.xpose.msra.mxu0 0.0
    %3362 = vmatprep.subr.mxu0 0.0
    %3363 = vmatpush1.xpose.msra.mxu0 0.0
    %3364 = vmatprep.subr.mxu0 0.0
    %3365 = vmatpush1.xpose.msra.mxu0 0.0
    %3366 = vmatprep.subr.mxu0 0.0
    %3367 = vmatpush1.xpose.msra.mxu0 0.0
    %3368 = vmatprep.subr.mxu0 0.0
    %3369 = vmatpush1.xpose.msra.mxu0 0.0
    %3370 = vmatprep.subr.mxu0 0.0
    %3371 = vmatpush1.xpose.msra.mxu0 0.0
    %3372 = vmatprep.subr.mxu0 0.0
    %3373 = vmatpush1.xpose.msra.mxu0 0.0
    %3374 = vmatprep.subr.mxu0 0.0
    %3375 = vmatpush1.xpose.msra.mxu0 0.0
    %3376 = vmatprep.subr.mxu0 0.0
    %3377 = vmatpush1.xpose.msra.mxu0 0.0
    %3378 = vmatprep.subr.mxu0 0.0
    %3379 = vmatpush1.xpose.msra.mxu0 0.0
    %3380 = vmatprep.subr.mxu0 0.0
    %3381 = vmatpush1.xpose.msra.mxu0 0.0
    %3382 = vmatprep.subr.mxu0 0.0
    %3383 = vmatpush1.xpose.msra.mxu0 0.0
    %3384 = vmatprep.subr.mxu0 0.0
    %3385 = vmatpush1.xpose.msra.mxu0 0.0
    %3386 = vmatprep.subr.mxu0 0.0
    %3387 = vmatpush1.xpose.msra.mxu0 0.0
    %3388 = vmatprep.subr.mxu0 0.0
    %3389 = vmatpush1.xpose.msra.mxu0 0.0
    %3390 = vmatprep.subr.mxu0 0.0
    %3391 = vmatpush1.xpose.msra.mxu0 0.0
    %3392 = vmatprep.subr.mxu0 0.0
    %3393 = vmatpush1.xpose.msra.mxu0 0.0
    %3394 = vmatprep.subr.mxu0 0.0
    %3395 = vmatpush1.xpose.msra.mxu0 0.0
    %3396 = vmatprep.subr.mxu0 0.0
    %3397 = vmatpush1.xpose.msra.mxu0 0.0
    %3398 = vmatprep.subr.mxu0 0.0
    %3399 = vmatpush1.xpose.msra.mxu0 0.0
    %3400 = vmatprep.subr.mxu0 0.0
    %3401 = vmatpush1.xpose.msra.mxu0 0.0
    %3402 = vmatprep.subr.mxu0 0.0
    %3403 = vmatpush1.xpose.msra.mxu0 0.0
    %3404 = vmatprep.subr.mxu0 0.0
    %3405 = vmatpush1.xpose.msra.mxu0 0.0
    %3406 = vmatprep.subr.mxu0 0.0
    %3407 = vmatpush1.xpose.msra.mxu0 0.0
    %3408 = vmatprep.subr.mxu0 0.0
    %3409 = vmatpush1.xpose.msra.mxu0 0.0
    %3410 = vmatprep.subr.mxu0 0.0
    %3411 = vmatpush1.xpose.msra.mxu0 0.0
    %3412 = vmatprep.subr.mxu0 0.0
    %3413 = vmatpush1.xpose.msra.mxu0 0.0
    %3414 = vmatprep.subr.mxu0 0.0
    %3415 = vmatpush1.xpose.msra.mxu0 0.0
    %3416 = vmatprep.mubr.f32.mxu0 0.0
    %3417 = vmatmul.mubr.f32.gmra.mrb[0].mxu0 %v3346
    %v3418 = vpop.f32.mrb[0].mxu0
    %v3419 = vadd.f32 0.0, %v3418
    %v3420 = vpop.f32.mrb[0].mxu0
    %3421 = vdwg.mxu0
    %v3422 = vmul.f32 %v3419, 0.35355338
    %v3424 = vlaneseq
    %v3425 = vshrl.u32 %v3424, 7
    %v3426 = vsub.s32 0, %v3425
    %v3427 = vrot.slane %v3258, %v3426
    %v3429 = vadd.f32 %v3422, %v3427
    %v3430 = vsel %vm2261, %v3429, -inf
    %3431 = vmax.xlane.f32.xlu0 %v3430
    %v3432 = vpop.xlane.xlu0 %3431
    %v3433 = vsub.f32 %v3429, %v3432
    %v3434 = vmul.f32 %v3433, 1.442695
    %v3435 = vpow.pop %v3434
    %v3436 = vsel %vm2261, %v3435, 0.0
    %3437 = vadd.xlane.f32.xlu0 %v3436
    %v3438 = vpop.xlane.xlu0 %3437
    %v3439 = vrcp.pop %v3438
    %v3440 = vmul.f32 %v3435, %v3439
    %3441 = vrot.lane.b32.xlu0 %v3344, 96
    %v3442 = vpop.permute.xlu0 %3441
    %3443 = vrot.lane.b32.xlu0 %v3345, 96
    %v3444 = vpop.permute.xlu0 %3443
    %v3447 = vsel %vm2261, %v3440, 0
    %v3449 = vsel %vm1690, %v3444, 0
    %3451 = vmatprep.subr.mxu0 0.0
    %3452 = vmatpush1.msra.mxu0 %v3442
    %3453 = vmatprep.subr.mxu0 0.0
    %3454 = vmatpush1.msra.mxu0 %v3449
    %3455 = vmatprep.subr.mxu0 0.0
    %3456 = vmatpush1.msra.mxu0 0.0
    %3457 = vmatprep.subr.mxu0 0.0
    %3458 = vmatpush1.msra.mxu0 0.0
    %3459 = vmatprep.subr.mxu0 0.0
    %3460 = vmatpush1.msra.mxu0 0.0
    %3461 = vmatprep.subr.mxu0 0.0
    %3462 = vmatpush1.msra.mxu0 0.0
    %3463 = vmatprep.subr.mxu0 0.0
    %3464 = vmatpush1.msra.mxu0 0.0
    %3465 = vmatprep.subr.mxu0 0.0
    %3466 = vmatpush1.msra.mxu0 0.0
    %3467 = vmatprep.subr.mxu0 0.0
    %3468 = vmatpush1.msra.mxu0 0.0
    %3469 = vmatprep.subr.mxu0 0.0
    %3470 = vmatpush1.msra.mxu0 0.0
    %3471 = vmatprep.subr.mxu0 0.0
    %3472 = vmatpush1.msra.mxu0 0.0
    %3473 = vmatprep.subr.mxu0 0.0
    %3474 = vmatpush1.msra.mxu0 0.0
    %3475 = vmatprep.subr.mxu0 0.0
    %3476 = vmatpush1.msra.mxu0 0.0
    %3477 = vmatprep.subr.mxu0 0.0
    %3478 = vmatpush1.msra.mxu0 0.0
    %3479 = vmatprep.subr.mxu0 0.0
    %3480 = vmatpush1.msra.mxu0 0.0
    %3481 = vmatprep.subr.mxu0 0.0
    %3482 = vmatpush1.msra.mxu0 0.0
    %3483 = vmatprep.subr.mxu0 0.0
    %3484 = vmatpush1.msra.mxu0 0.0
    %3485 = vmatprep.subr.mxu0 0.0
    %3486 = vmatpush1.msra.mxu0 0.0
    %3487 = vmatprep.subr.mxu0 0.0
    %3488 = vmatpush1.msra.mxu0 0.0
    %3489 = vmatprep.subr.mxu0 0.0
    %3490 = vmatpush1.msra.mxu0 0.0
    %3491 = vmatprep.subr.mxu0 0.0
    %3492 = vmatpush1.msra.mxu0 0.0
    %3493 = vmatprep.subr.mxu0 0.0
    %3494 = vmatpush1.msra.mxu0 0.0
    %3495 = vmatprep.subr.mxu0 0.0
    %3496 = vmatpush1.msra.mxu0 0.0
    %3497 = vmatprep.subr.mxu0 0.0
    %3498 = vmatpush1.msra.mxu0 0.0
    %3499 = vmatprep.subr.mxu0 0.0
    %3500 = vmatpush1.msra.mxu0 0.0
    %3501 = vmatprep.subr.mxu0 0.0
    %3502 = vmatpush1.msra.mxu0 0.0
    %3503 = vmatprep.subr.mxu0 0.0
    %3504 = vmatpush1.msra.mxu0 0.0
    %3505 = vmatprep.subr.mxu0 0.0
    %3506 = vmatpush1.msra.mxu0 0.0
    %3507 = vmatprep.subr.mxu0 0.0
    %3508 = vmatpush1.msra.mxu0 0.0
    %3509 = vmatprep.subr.mxu0 0.0
    %3510 = vmatpush1.msra.mxu0 0.0
    %3511 = vmatprep.subr.mxu0 0.0
    %3512 = vmatpush1.msra.mxu0 0.0
    %3513 = vmatprep.subr.mxu0 0.0
    %3514 = vmatpush1.msra.mxu0 0.0
    %3515 = vmatprep.mubr.f32.mxu0 0.0
    %3516 = vmatmul.mubr.f32.gmra.mrb[0].mxu0 %v3447
    %v3517 = vpop.f32.mrb[0].mxu0
    %v3518 = vadd.f32 0.0, %v3517
    %v3519 = vpop.f32.mrb[0].mxu0
    %3520 = vdwg.mxu0
    %3521 = vrot.lane.b32.xlu0 %v3297, 120
    %v3522 = vpop.permute.xlu0 %3521
    %3523 = vrot.lane.b32.xlu0 %v3344, 120
    %v3524 = vpop.permute.xlu0 %3523
    %3525 = vrot.lane.b32.xlu0 %v3345, 120
    %v3526 = vpop.permute.xlu0 %3525
    %v3527 = vsel %vm2176, %v3522, 0
    %v3529 = vsel %vm2176, %v3524, 0
    %v3531 = vsel %vm2176, %v3526, 0
    %3533 = vmatprep.subr.mxu0 0.0
    %3534 = vmatpush1.xpose.msra.mxu0 %v3529
    %3535 = vmatprep.subr.mxu0 0.0
    %3536 = vmatpush1.xpose.msra.mxu0 %v3531
    %3537 = vmatprep.subr.mxu0 0.0
    %3538 = vmatpush1.xpose.msra.mxu0 0.0
    %3539 = vmatprep.subr.mxu0 0.0
    %3540 = vmatpush1.xpose.msra.mxu0 0.0
    %3541 = vmatprep.subr.mxu0 0.0
    %3542 = vmatpush1.xpose.msra.mxu0 0.0
    %3543 = vmatprep.subr.mxu0 0.0
    %3544 = vmatpush1.xpose.msra.mxu0 0.0
    %3545 = vmatprep.subr.mxu0 0.0
    %3546 = vmatpush1.xpose.msra.mxu0 0.0
    %3547 = vmatprep.subr.mxu0 0.0
    %3548 = vmatpush1.xpose.msra.mxu0 0.0
    %3549 = vmatprep.subr.mxu0 0.0
    %3550 = vmatpush1.xpose.msra.mxu0 0.0
    %3551 = vmatprep.subr.mxu0 0.0
    %3552 = vmatpush1.xpose.msra.mxu0 0.0
    %3553 = vmatprep.subr.mxu0 0.0
    %3554 = vmatpush1.xpose.msra.mxu0 0.0
    %3555 = vmatprep.subr.mxu0 0.0
    %3556 = vmatpush1.xpose.msra.mxu0 0.0
    %3557 = vmatprep.subr.mxu0 0.0
    %3558 = vmatpush1.xpose.msra.mxu0 0.0
    %3559 = vmatprep.subr.mxu0 0.0
    %3560 = vmatpush1.xpose.msra.mxu0 0.0
    %3561 = vmatprep.subr.mxu0 0.0
    %3562 = vmatpush1.xpose.msra.mxu0 0.0
    %3563 = vmatprep.subr.mxu0 0.0
    %3564 = vmatpush1.xpose.msra.mxu0 0.0
    %3565 = vmatprep.subr.mxu0 0.0
    %3566 = vmatpush1.xpose.msra.mxu0 0.0
    %3567 = vmatprep.subr.mxu0 0.0
    %3568 = vmatpush1.xpose.msra.mxu0 0.0
    %3569 = vmatprep.subr.mxu0 0.0
    %3570 = vmatpush1.xpose.msra.mxu0 0.0
    %3571 = vmatprep.subr.mxu0 0.0
    %3572 = vmatpush1.xpose.msra.mxu0 0.0
    %3573 = vmatprep.subr.mxu0 0.0
    %3574 = vmatpush1.xpose.msra.mxu0 0.0
    %3575 = vmatprep.subr.mxu0 0.0
    %3576 = vmatpush1.xpose.msra.mxu0 0.0
    %3577 = vmatprep.subr.mxu0 0.0
    %3578 = vmatpush1.xpose.msra.mxu0 0.0
    %3579 = vmatprep.subr.mxu0 0.0
    %3580 = vmatpush1.xpose.msra.mxu0 0.0
    %3581 = vmatprep.subr.mxu0 0.0
    %3582 = vmatpush1.xpose.msra.mxu0 0.0
    %3583 = vmatprep.subr.mxu0 0.0
    %3584 = vmatpush1.xpose.msra.mxu0 0.0
    %3585 = vmatprep.subr.mxu0 0.0
    %3586 = vmatpush1.xpose.msra.mxu0 0.0
    %3587 = vmatprep.subr.mxu0 0.0
    %3588 = vmatpush1.xpose.msra.mxu0 0.0
    %3589 = vmatprep.subr.mxu0 0.0
    %3590 = vmatpush1.xpose.msra.mxu0 0.0
    %3591 = vmatprep.subr.mxu0 0.0
    %3592 = vmatpush1.xpose.msra.mxu0 0.0
    %3593 = vmatprep.subr.mxu0 0.0
    %3594 = vmatpush1.xpose.msra.mxu0 0.0
    %3595 = vmatprep.subr.mxu0 0.0
    %3596 = vmatpush1.xpose.msra.mxu0 0.0
    %3597 = vmatprep.mubr.f32.mxu0 0.0
    %3598 = vmatmul.mubr.f32.gmra.mrb[0].mxu0 %v3527
    %v3599 = vpop.f32.mrb[0].mxu0
    %v3600 = vadd.f32 0.0, %v3599
    %v3601 = vpop.f32.mrb[0].mxu0
    %3602 = vdwg.mxu0
    %v3603 = vmul.f32 %v3600, 0.35355338
    %v3604 = vadd.f32 %v3603, %v3427
    %v3605 = vsel %vm2261, %v3604, -inf
    %3606 = vmax.xlane.f32.xlu0 %v3605
    %v3607 = vpop.xlane.xlu0 %3606
    %v3608 = vsub.f32 %v3604, %v3607
    %v3609 = vmul.f32 %v3608, 1.442695
    %v3610 = vpow.pop %v3609
    %v3611 = vsel %vm2261, %v3610, 0.0
    %3612 = vadd.xlane.f32.xlu0 %v3611
    %v3613 = vpop.xlane.xlu0 %3612
    %v3614 = vrcp.pop %v3613
    %v3615 = vmul.f32 %v3610, %v3614
    %3616 = vrot.lane.b32.xlu0 %v3344, 88
    %v3617 = vpop.permute.xlu0 %3616
    %3618 = vrot.lane.b32.xlu0 %v3345, 88
    %v3619 = vpop.permute.xlu0 %3618
    %v3622 = vsel %vm2261, %v3615, 0
    %v3624 = vsel %vm1690, %v3619, 0
    %3626 = vmatprep.subr.mxu0 0.0
    %3627 = vmatpush1.msra.mxu0 %v3617
    %3628 = vmatprep.subr.mxu0 0.0
    %3629 = vmatpush1.msra.mxu0 %v3624
    %3630 = vmatprep.subr.mxu0 0.0
    %3631 = vmatpush1.msra.mxu0 0.0
    %3632 = vmatprep.subr.mxu0 0.0
    %3633 = vmatpush1.msra.mxu0 0.0
    %3634 = vmatprep.subr.mxu0 0.0
    %3635 = vmatpush1.msra.mxu0 0.0
    %3636 = vmatprep.subr.mxu0 0.0
    %3637 = vmatpush1.msra.mxu0 0.0
    %3638 = vmatprep.subr.mxu0 0.0
    %3639 = vmatpush1.msra.mxu0 0.0
    %3640 = vmatprep.subr.mxu0 0.0
    %3641 = vmatpush1.msra.mxu0 0.0
    %3642 = vmatprep.subr.mxu0 0.0
    %3643 = vmatpush1.msra.mxu0 0.0
    %3644 = vmatprep.subr.mxu0 0.0
    %3645 = vmatpush1.msra.mxu0 0.0
    %3646 = vmatprep.subr.mxu0 0.0
    %3647 = vmatpush1.msra.mxu0 0.0
    %3648 = vmatprep.subr.mxu0 0.0
    %3649 = vmatpush1.msra.mxu0 0.0
    %3650 = vmatprep.subr.mxu0 0.0
    %3651 = vmatpush1.msra.mxu0 0.0
    %3652 = vmatprep.subr.mxu0 0.0
    %3653 = vmatpush1.msra.mxu0 0.0
    %3654 = vmatprep.subr.mxu0 0.0
    %3655 = vmatpush1.msra.mxu0 0.0
    %3656 = vmatprep.subr.mxu0 0.0
    %3657 = vmatpush1.msra.mxu0 0.0
    %3658 = vmatprep.subr.mxu0 0.0
    %3659 = vmatpush1.msra.mxu0 0.0
    %3660 = vmatprep.subr.mxu0 0.0
    %3661 = vmatpush1.msra.mxu0 0.0
    %3662 = vmatprep.subr.mxu0 0.0
    %3663 = vmatpush1.msra.mxu0 0.0
    %3664 = vmatprep.subr.mxu0 0.0
    %3665 = vmatpush1.msra.mxu0 0.0
    %3666 = vmatprep.subr.mxu0 0.0
    %3667 = vmatpush1.msra.mxu0 0.0
    %3668 = vmatprep.subr.mxu0 0.0
    %3669 = vmatpush1.msra.mxu0 0.0
    %3670 = vmatprep.subr.mxu0 0.0
    %3671 = vmatpush1.msra.mxu0 0.0
    %3672 = vmatprep.subr.mxu0 0.0
    %3673 = vmatpush1.msra.mxu0 0.0
    %3674 = vmatprep.subr.mxu0 0.0
    %3675 = vmatpush1.msra.mxu0 0.0
    %3676 = vmatprep.subr.mxu0 0.0
    %3677 = vmatpush1.msra.mxu0 0.0
    %3678 = vmatprep.subr.mxu0 0.0
    %3679 = vmatpush1.msra.mxu0 0.0
    %3680 = vmatprep.subr.mxu0 0.0
    %3681 = vmatpush1.msra.mxu0 0.0
    %3682 = vmatprep.subr.mxu0 0.0
    %3683 = vmatpush1.msra.mxu0 0.0
    %3684 = vmatprep.subr.mxu0 0.0
    %3685 = vmatpush1.msra.mxu0 0.0
    %3686 = vmatprep.subr.mxu0 0.0
    %3687 = vmatpush1.msra.mxu0 0.0
    %3688 = vmatprep.subr.mxu0 0.0
    %3689 = vmatpush1.msra.mxu0 0.0
    %3690 = vmatprep.mubr.f32.mxu0 0.0
    %3691 = vmatmul.mubr.f32.gmra.mrb[0].mxu0 %v3622
    %v3692 = vpop.f32.mrb[0].mxu0
    %v3693 = vadd.f32 0.0, %v3692
    %v3694 = vpop.f32.mrb[0].mxu0
    %3695 = vdwg.mxu0
    %v3697 = vsel %vm2176, %v3693, 0
    %3699 = vmatprep.subr.mxu0 0.0
    %3700 = vmatpush1.msra.mxu0 %v2076
    %3701 = vmatprep.subr.mxu0 0.0
    %3702 = vmatpush1.msra.mxu0 0.0
    %3703 = vmatprep.subr.mxu0 0.0
    %3704 = vmatpush1.msra.mxu0 0.0
    %3705 = vmatprep.subr.mxu0 0.0
    %3706 = vmatpush1.msra.mxu0 0.0
    %3707 = vmatprep.subr.mxu0 0.0
    %3708 = vmatpush1.msra.mxu0 0.0
    %3709 = vmatprep.subr.mxu0 0.0
    %3710 = vmatpush1.msra.mxu0 0.0
    %3711 = vmatprep.subr.mxu0 0.0
    %3712 = vmatpush1.msra.mxu0 0.0
    %3713 = vmatprep.subr.mxu0 0.0
    %3714 = vmatpush1.msra.mxu0 0.0
    %3715 = vmatprep.subr.mxu0 0.0
    %3716 = vmatpush1.msra.mxu0 0.0
    %3717 = vmatprep.subr.mxu0 0.0
    %3718 = vmatpush1.msra.mxu0 0.0
    %3719 = vmatprep.subr.mxu0 0.0
    %3720 = vmatpush1.msra.mxu0 0.0
    %3721 = vmatprep.subr.mxu0 0.0
    %3722 = vmatpush1.msra.mxu0 0.0
    %3723 = vmatprep.subr.mxu0 0.0
    %3724 = vmatpush1.msra.mxu0 0.0
    %3725 = vmatprep.subr.mxu0 0.0
    %3726 = vmatpush1.msra.mxu0 0.0
    %3727 = vmatprep.subr.mxu0 0.0
    %3728 = vmatpush1.msra.mxu0 0.0
    %3729 = vmatprep.subr.mxu0 0.0
    %3730 = vmatpush1.msra.mxu0 0.0
    %3731 = vmatprep.subr.mxu0 0.0
    %3732 = vmatpush1.msra.mxu0 0.0
    %3733 = vmatprep.subr.mxu0 0.0
    %3734 = vmatpush1.msra.mxu0 0.0
    %3735 = vmatprep.subr.mxu0 0.0
    %3736 = vmatpush1.msra.mxu0 0.0
    %3737 = vmatprep.subr.mxu0 0.0
    %3738 = vmatpush1.msra.mxu0 0.0
    %3739 = vmatprep.subr.mxu0 0.0
    %3740 = vmatpush1.msra.mxu0 0.0
    %3741 = vmatprep.subr.mxu0 0.0
    %3742 = vmatpush1.msra.mxu0 0.0
    %3743 = vmatprep.subr.mxu0 0.0
    %3744 = vmatpush1.msra.mxu0 0.0
    %3745 = vmatprep.subr.mxu0 0.0
    %3746 = vmatpush1.msra.mxu0 0.0
    %3747 = vmatprep.subr.mxu0 0.0
    %3748 = vmatpush1.msra.mxu0 0.0
    %3749 = vmatprep.subr.mxu0 0.0
    %3750 = vmatpush1.msra.mxu0 0.0
    %3751 = vmatprep.subr.mxu0 0.0
    %3752 = vmatpush1.msra.mxu0 0.0
    %3753 = vmatprep.subr.mxu0 0.0
    %3754 = vmatpush1.msra.mxu0 0.0
    %3755 = vmatprep.subr.mxu0 0.0
    %3756 = vmatpush1.msra.mxu0 0.0
    %3757 = vmatprep.subr.mxu0 0.0
    %3758 = vmatpush1.msra.mxu0 0.0
    %3759 = vmatprep.subr.mxu0 0.0
    %3760 = vmatpush1.msra.mxu0 0.0
    %3761 = vmatprep.subr.mxu0 0.0
    %3762 = vmatpush1.msra.mxu0 0.0
    %3763 = vmatprep.mubr.f32.mxu0 0.0
    %3764 = vmatmul.mubr.f32.gmra.mrb[0].mxu0 %v3697
    %v3765 = vpop.f32.mrb[0].mxu0
    %v3766 = vadd.f32 0.0, %v3765
    %v3767 = vpop.f32.mrb[0].mxu0
    %3768 = vdwg.mxu0
    %v3770 = vsel %vm2176, %v3518, 0
    %3772 = vmatprep.subr.mxu0 0.0
    %3773 = vmatpush1.msra.mxu0 %v2075
    %3774 = vmatprep.subr.mxu0 0.0
    %3775 = vmatpush1.msra.mxu0 0.0
    %3776 = vmatprep.subr.mxu0 0.0
    %3777 = vmatpush1.msra.mxu0 0.0
    %3778 = vmatprep.subr.mxu0 0.0
    %3779 = vmatpush1.msra.mxu0 0.0
    %3780 = vmatprep.subr.mxu0 0.0
    %3781 = vmatpush1.msra.mxu0 0.0
    %3782 = vmatprep.subr.mxu0 0.0
    %3783 = vmatpush1.msra.mxu0 0.0
    %3784 = vmatprep.subr.mxu0 0.0
    %3785 = vmatpush1.msra.mxu0 0.0
    %3786 = vmatprep.subr.mxu0 0.0
    %3787 = vmatpush1.msra.mxu0 0.0
    %3788 = vmatprep.subr.mxu0 0.0
    %3789 = vmatpush1.msra.mxu0 0.0
    %3790 = vmatprep.subr.mxu0 0.0
    %3791 = vmatpush1.msra.mxu0 0.0
    %3792 = vmatprep.subr.mxu0 0.0
    %3793 = vmatpush1.msra.mxu0 0.0
    %3794 = vmatprep.subr.mxu0 0.0
    %3795 = vmatpush1.msra.mxu0 0.0
    %3796 = vmatprep.subr.mxu0 0.0
    %3797 = vmatpush1.msra.mxu0 0.0
    %3798 = vmatprep.subr.mxu0 0.0
    %3799 = vmatpush1.msra.mxu0 0.0
    %3800 = vmatprep.subr.mxu0 0.0
    %3801 = vmatpush1.msra.mxu0 0.0
    %3802 = vmatprep.subr.mxu0 0.0
    %3803 = vmatpush1.msra.mxu0 0.0
    %3804 = vmatprep.subr.mxu0 0.0
    %3805 = vmatpush1.msra.mxu0 0.0
    %3806 = vmatprep.subr.mxu0 0.0
    %3807 = vmatpush1.msra.mxu0 0.0
    %3808 = vmatprep.subr.mxu0 0.0
    %3809 = vmatpush1.msra.mxu0 0.0
    %3810 = vmatprep.subr.mxu0 0.0
    %3811 = vmatpush1.msra.mxu0 0.0
    %3812 = vmatprep.subr.mxu0 0.0
    %3813 = vmatpush1.msra.mxu0 0.0
    %3814 = vmatprep.subr.mxu0 0.0
    %3815 = vmatpush1.msra.mxu0 0.0
    %3816 = vmatprep.subr.mxu0 0.0
    %3817 = vmatpush1.msra.mxu0 0.0
    %3818 = vmatprep.subr.mxu0 0.0
    %3819 = vmatpush1.msra.mxu0 0.0
    %3820 = vmatprep.subr.mxu0 0.0
    %3821 = vmatpush1.msra.mxu0 0.0
    %3822 = vmatprep.subr.mxu0 0.0
    %3823 = vmatpush1.msra.mxu0 0.0
    %3824 = vmatprep.subr.mxu0 0.0
    %3825 = vmatpush1.msra.mxu0 0.0
    %3826 = vmatprep.subr.mxu0 0.0
    %3827 = vmatpush1.msra.mxu0 0.0
    %3828 = vmatprep.subr.mxu0 0.0
    %3829 = vmatpush1.msra.mxu0 0.0
    %3830 = vmatprep.subr.mxu0 0.0
    %3831 = vmatpush1.msra.mxu0 0.0
    %3832 = vmatprep.subr.mxu0 0.0
    %3833 = vmatpush1.msra.mxu0 0.0
    %3834 = vmatprep.subr.mxu0 0.0
    %3835 = vmatpush1.msra.mxu0 0.0
    %3836 = vmatprep.mubr.f32.mxu0 0.0
    %3837 = vmatmul.mubr.f32.gmra.mrb[0].mxu0 %v3770
    %v3838 = vpop.f32.mrb[0].mxu0
    %v3839 = vadd.f32 %v3766, %v3838
    %v3840 = vpop.f32.mrb[0].mxu0
    %3841 = vdwg.mxu0
    %3842 = vrot.lane.b32.xlu0 %v3297, 112
    %v3843 = vpop.permute.xlu0 %3842
    %3844 = vrot.lane.b32.xlu0 %v3344, 112
    %v3845 = vpop.permute.xlu0 %3844
    %3846 = vrot.lane.b32.xlu0 %v3345, 112
    %v3847 = vpop.permute.xlu0 %3846
    %v3848 = vsel %vm2176, %v3843, 0
    %v3850 = vsel %vm2176, %v3845, 0
    %v3852 = vsel %vm2176, %v3847, 0
    %3854 = vmatprep.subr.mxu0 0.0
    %3855 = vmatpush1.xpose.msra.mxu0 %v3850
    %3856 = vmatprep.subr.mxu0 0.0
    %3857 = vmatpush1.xpose.msra.mxu0 %v3852
    %3858 = vmatprep.subr.mxu0 0.0
    %3859 = vmatpush1.xpose.msra.mxu0 0.0
    %3860 = vmatprep.subr.mxu0 0.0
    %3861 = vmatpush1.xpose.msra.mxu0 0.0
    %3862 = vmatprep.subr.mxu0 0.0
    %3863 = vmatpush1.xpose.msra.mxu0 0.0
    %3864 = vmatprep.subr.mxu0 0.0
    %3865 = vmatpush1.xpose.msra.mxu0 0.0
    %3866 = vmatprep.subr.mxu0 0.0
    %3867 = vmatpush1.xpose.msra.mxu0 0.0
    %3868 = vmatprep.subr.mxu0 0.0
    %3869 = vmatpush1.xpose.msra.mxu0 0.0
    %3870 = vmatprep.subr.mxu0 0.0
    %3871 = vmatpush1.xpose.msra.mxu0 0.0
    %3872 = vmatprep.subr.mxu0 0.0
    %3873 = vmatpush1.xpose.msra.mxu0 0.0
    %3874 = vmatprep.subr.mxu0 0.0
    %3875 = vmatpush1.xpose.msra.mxu0 0.0
    %3876 = vmatprep.subr.mxu0 0.0
    %3877 = vmatpush1.xpose.msra.mxu0 0.0
    %3878 = vmatprep.subr.mxu0 0.0
    %3879 = vmatpush1.xpose.msra.mxu0 0.0
    %3880 = vmatprep.subr.mxu0 0.0
    %3881 = vmatpush1.xpose.msra.mxu0 0.0
    %3882 = vmatprep.subr.mxu0 0.0
    %3883 = vmatpush1.xpose.msra.mxu0 0.0
    %3884 = vmatprep.subr.mxu0 0.0
    %3885 = vmatpush1.xpose.msra.mxu0 0.0
    %3886 = vmatprep.subr.mxu0 0.0
    %3887 = vmatpush1.xpose.msra.mxu0 0.0
    %3888 = vmatprep.subr.mxu0 0.0
    %3889 = vmatpush1.xpose.msra.mxu0 0.0
    %3890 = vmatprep.subr.mxu0 0.0
    %3891 = vmatpush1.xpose.msra.mxu0 0.0
    %3892 = vmatprep.subr.mxu0 0.0
    %3893 = vmatpush1.xpose.msra.mxu0 0.0
    %3894 = vmatprep.subr.mxu0 0.0
    %3895 = vmatpush1.xpose.msra.mxu0 0.0
    %3896 = vmatprep.subr.mxu0 0.0
    %3897 = vmatpush1.xpose.msra.mxu0 0.0
    %3898 = vmatprep.subr.mxu0 0.0
    %3899 = vmatpush1.xpose.msra.mxu0 0.0
    %3900 = vmatprep.subr.mxu0 0.0
    %3901 = vmatpush1.xpose.msra.mxu0 0.0
    %3902 = vmatprep.subr.mxu0 0.0
    %3903 = vmatpush1.xpose.msra.mxu0 0.0
    %3904 = vmatprep.subr.mxu0 0.0
    %3905 = vmatpush1.xpose.msra.mxu0 0.0
    %3906 = vmatprep.subr.mxu0 0.0
    %3907 = vmatpush1.xpose.msra.mxu0 0.0
    %3908 = vmatprep.subr.mxu0 0.0
    %3909 = vmatpush1.xpose.msra.mxu0 0.0
    %3910 = vmatprep.subr.mxu0 0.0
    %3911 = vmatpush1.xpose.msra.mxu0 0.0
    %3912 = vmatprep.subr.mxu0 0.0
    %3913 = vmatpush1.xpose.msra.mxu0 0.0
    %3914 = vmatprep.subr.mxu0 0.0
    %3915 = vmatpush1.xpose.msra.mxu0 0.0
    %3916 = vmatprep.subr.mxu0 0.0
    %3917 = vmatpush1.xpose.msra.mxu0 0.0
    %3918 = vmatprep.mubr.f32.mxu0 0.0
    %3919 = vmatmul.mubr.f32.gmra.mrb[0].mxu0 %v3848
    %v3920 = vpop.f32.mrb[0].mxu0
    %v3921 = vadd.f32 0.0, %v3920
    %v3922 = vpop.f32.mrb[0].mxu0
    %3923 = vdwg.mxu0
    %v3924 = vmul.f32 %v3921, 0.35355338
    %v3925 = vadd.f32 %v3924, %v3427
    %v3926 = vsel %vm2261, %v3925, -inf
    %3927 = vmax.xlane.f32.xlu0 %v3926
    %v3928 = vpop.xlane.xlu0 %3927
    %v3929 = vsub.f32 %v3925, %v3928
    %v3930 = vmul.f32 %v3929, 1.442695
    %v3931 = vpow.pop %v3930
    %v3932 = vsel %vm2261, %v3931, 0.0
    %3933 = vadd.xlane.f32.xlu0 %v3932
    %v3934 = vpop.xlane.xlu0 %3933
    %v3935 = vrcp.pop %v3934
    %v3936 = vmul.f32 %v3931, %v3935
    %3937 = vrot.lane.b32.xlu0 %v3344, 80
    %v3938 = vpop.permute.xlu0 %3937
    %3939 = vrot.lane.b32.xlu0 %v3345, 80
    %v3940 = vpop.permute.xlu0 %3939
    %v3943 = vsel %vm2261, %v3936, 0
    %v3945 = vsel %vm1690, %v3940, 0
    %3947 = vmatprep.subr.mxu0 0.0
    %3948 = vmatpush1.msra.mxu0 %v3938
    %3949 = vmatprep.subr.mxu0 0.0
    %3950 = vmatpush1.msra.mxu0 %v3945
    %3951 = vmatprep.subr.mxu0 0.0
    %3952 = vmatpush1.msra.mxu0 0.0
    %3953 = vmatprep.subr.mxu0 0.0
    %3954 = vmatpush1.msra.mxu0 0.0
    %3955 = vmatprep.subr.mxu0 0.0
    %3956 = vmatpush1.msra.mxu0 0.0
    %3957 = vmatprep.subr.mxu0 0.0
    %3958 = vmatpush1.msra.mxu0 0.0
    %3959 = vmatprep.subr.mxu0 0.0
    %3960 = vmatpush1.msra.mxu0 0.0
    %3961 = vmatprep.subr.mxu0 0.0
    %3962 = vmatpush1.msra.mxu0 0.0
    %3963 = vmatprep.subr.mxu0 0.0
    %3964 = vmatpush1.msra.mxu0 0.0
    %3965 = vmatprep.subr.mxu0 0.0
    %3966 = vmatpush1.msra.mxu0 0.0
    %3967 = vmatprep.subr.mxu0 0.0
    %3968 = vmatpush1.msra.mxu0 0.0
    %3969 = vmatprep.subr.mxu0 0.0
    %3970 = vmatpush1.msra.mxu0 0.0
    %3971 = vmatprep.subr.mxu0 0.0
    %3972 = vmatpush1.msra.mxu0 0.0
    %3973 = vmatprep.subr.mxu0 0.0
    %3974 = vmatpush1.msra.mxu0 0.0
    %3975 = vmatprep.subr.mxu0 0.0
    %3976 = vmatpush1.msra.mxu0 0.0
    %3977 = vmatprep.subr.mxu0 0.0
    %3978 = vmatpush1.msra.mxu0 0.0
    %3979 = vmatprep.subr.mxu0 0.0
    %3980 = vmatpush1.msra.mxu0 0.0
    %3981 = vmatprep.subr.mxu0 0.0
    %3982 = vmatpush1.msra.mxu0 0.0
    %3983 = vmatprep.subr.mxu0 0.0
    %3984 = vmatpush1.msra.mxu0 0.0
    %3985 = vmatprep.subr.mxu0 0.0
    %3986 = vmatpush1.msra.mxu0 0.0
    %3987 = vmatprep.subr.mxu0 0.0
    %3988 = vmatpush1.msra.mxu0 0.0
    %3989 = vmatprep.subr.mxu0 0.0
    %3990 = vmatpush1.msra.mxu0 0.0
    %3991 = vmatprep.subr.mxu0 0.0
    %3992 = vmatpush1.msra.mxu0 0.0
    %3993 = vmatprep.subr.mxu0 0.0
    %3994 = vmatpush1.msra.mxu0 0.0
    %3995 = vmatprep.subr.mxu0 0.0
    %3996 = vmatpush1.msra.mxu0 0.0
    %3997 = vmatprep.subr.mxu0 0.0
    %3998 = vmatpush1.msra.mxu0 0.0
    %3999 = vmatprep.subr.mxu0 0.0
    %4000 = vmatpush1.msra.mxu0 0.0
    %4001 = vmatprep.subr.mxu0 0.0
    %4002 = vmatpush1.msra.mxu0 0.0
    %4003 = vmatprep.subr.mxu0 0.0
    %4004 = vmatpush1.msra.mxu0 0.0
    %4005 = vmatprep.subr.mxu0 0.0
    %4006 = vmatpush1.msra.mxu0 0.0
    %4007 = vmatprep.subr.mxu0 0.0
    %4008 = vmatpush1.msra.mxu0 0.0
    %4009 = vmatprep.subr.mxu0 0.0
    %4010 = vmatpush1.msra.mxu0 0.0
    %4011 = vmatprep.mubr.f32.mxu0 0.0
    %4012 = vmatmul.mubr.f32.gmra.mrb[0].mxu0 %v3943
    %v4013 = vpop.f32.mrb[0].mxu0
    %v4014 = vadd.f32 0.0, %v4013
    %v4015 = vpop.f32.mrb[0].mxu0
    %4016 = vdwg.mxu0
    %v4018 = vsel %vm2176, %v4014, 0
    %4020 = vmatprep.subr.mxu0 0.0
    %4021 = vmatpush1.msra.mxu0 %v2077
    %4022 = vmatprep.subr.mxu0 0.0
    %4023 = vmatpush1.msra.mxu0 0.0
    %4024 = vmatprep.subr.mxu0 0.0
    %4025 = vmatpush1.msra.mxu0 0.0
    %4026 = vmatprep.subr.mxu0 0.0
    %4027 = vmatpush1.msra.mxu0 0.0
    %4028 = vmatprep.subr.mxu0 0.0
    %4029 = vmatpush1.msra.mxu0 0.0
    %4030 = vmatprep.subr.mxu0 0.0
    %4031 = vmatpush1.msra.mxu0 0.0
    %4032 = vmatprep.subr.mxu0 0.0
    %4033 = vmatpush1.msra.mxu0 0.0
    %4034 = vmatprep.subr.mxu0 0.0
    %4035 = vmatpush1.msra.mxu0 0.0
    %4036 = vmatprep.subr.mxu0 0.0
    %4037 = vmatpush1.msra.mxu0 0.0
    %4038 = vmatprep.subr.mxu0 0.0
    %4039 = vmatpush1.msra.mxu0 0.0
    %4040 = vmatprep.subr.mxu0 0.0
    %4041 = vmatpush1.msra.mxu0 0.0
    %4042 = vmatprep.subr.mxu0 0.0
    %4043 = vmatpush1.msra.mxu0 0.0
    %4044 = vmatprep.subr.mxu0 0.0
    %4045 = vmatpush1.msra.mxu0 0.0
    %4046 = vmatprep.subr.mxu0 0.0
    %4047 = vmatpush1.msra.mxu0 0.0
    %4048 = vmatprep.subr.mxu0 0.0
    %4049 = vmatpush1.msra.mxu0 0.0
    %4050 = vmatprep.subr.mxu0 0.0
    %4051 = vmatpush1.msra.mxu0 0.0
    %4052 = vmatprep.subr.mxu0 0.0
    %4053 = vmatpush1.msra.mxu0 0.0
    %4054 = vmatprep.subr.mxu0 0.0
    %4055 = vmatpush1.msra.mxu0 0.0
    %4056 = vmatprep.subr.mxu0 0.0
    %4057 = vmatpush1.msra.mxu0 0.0
    %4058 = vmatprep.subr.mxu0 0.0
    %4059 = vmatpush1.msra.mxu0 0.0
    %4060 = vmatprep.subr.mxu0 0.0
    %4061 = vmatpush1.msra.mxu0 0.0
    %4062 = vmatprep.subr.mxu0 0.0
    %4063 = vmatpush1.msra.mxu0 0.0
    %4064 = vmatprep.subr.mxu0 0.0
    %4065 = vmatpush1.msra.mxu0 0.0
    %4066 = vmatprep.subr.mxu0 0.0
    %4067 = vmatpush1.msra.mxu0 0.0
    %4068 = vmatprep.subr.mxu0 0.0
    %4069 = vmatpush1.msra.mxu0 0.0
    %4070 = vmatprep.subr.mxu0 0.0
    %4071 = vmatpush1.msra.mxu0 0.0
    %4072 = vmatprep.subr.mxu0 0.0
    %4073 = vmatpush1.msra.mxu0 0.0
    %4074 = vmatprep.subr.mxu0 0.0
    %4075 = vmatpush1.msra.mxu0 0.0
    %4076 = vmatprep.subr.mxu0 0.0
    %4077 = vmatpush1.msra.mxu0 0.0
    %4078 = vmatprep.subr.mxu0 0.0
    %4079 = vmatpush1.msra.mxu0 0.0
    %4080 = vmatprep.subr.mxu0 0.0
    %4081 = vmatpush1.msra.mxu0 0.0
    %4082 = vmatprep.subr.mxu0 0.0
    %4083 = vmatpush1.msra.mxu0 0.0
    %4084 = vmatprep.mubr.f32.mxu0 0.0
    %4085 = vmatmul.mubr.f32.gmra.mrb[0].mxu0 %v4018
    %v4086 = vpop.f32.mrb[0].mxu0
    %v4087 = vadd.f32 0.0, %v4086
    %v4088 = vpop.f32.mrb[0].mxu0
    %4089 = vdwg.mxu0
    %v4090 = vadd.f32 %v3839, %v4087
    %4091 = vrot.lane.b32.xlu0 %v3297, 104
    %v4092 = vpop.permute.xlu0 %4091
    %4093 = vrot.lane.b32.xlu0 %v3344, 104
    %v4094 = vpop.permute.xlu0 %4093
    %4095 = vrot.lane.b32.xlu0 %v3345, 104
    %v4096 = vpop.permute.xlu0 %4095
    %v4097 = vsel %vm2176, %v4092, 0
    %v4099 = vsel %vm2176, %v4094, 0
    %v4101 = vsel %vm2176, %v4096, 0
    %4103 = vmatprep.subr.mxu0 0.0
    %4104 = vmatpush1.xpose.msra.mxu0 %v4099
    %4105 = vmatprep.subr.mxu0 0.0
    %4106 = vmatpush1.xpose.msra.mxu0 %v4101
    %4107 = vmatprep.subr.mxu0 0.0
    %4108 = vmatpush1.xpose.msra.mxu0 0.0
    %4109 = vmatprep.subr.mxu0 0.0
    %4110 = vmatpush1.xpose.msra.mxu0 0.0
    %4111 = vmatprep.subr.mxu0 0.0
    %4112 = vmatpush1.xpose.msra.mxu0 0.0
    %4113 = vmatprep.subr.mxu0 0.0
    %4114 = vmatpush1.xpose.msra.mxu0 0.0
    %4115 = vmatprep.subr.mxu0 0.0
    %4116 = vmatpush1.xpose.msra.mxu0 0.0
    %4117 = vmatprep.subr.mxu0 0.0
    %4118 = vmatpush1.xpose.msra.mxu0 0.0
    %4119 = vmatprep.subr.mxu0 0.0
    %4120 = vmatpush1.xpose.msra.mxu0 0.0
    %4121 = vmatprep.subr.mxu0 0.0
    %4122 = vmatpush1.xpose.msra.mxu0 0.0
    %4123 = vmatprep.subr.mxu0 0.0
    %4124 = vmatpush1.xpose.msra.mxu0 0.0
    %4125 = vmatprep.subr.mxu0 0.0
    %4126 = vmatpush1.xpose.msra.mxu0 0.0
    %4127 = vmatprep.subr.mxu0 0.0
    %4128 = vmatpush1.xpose.msra.mxu0 0.0
    %4129 = vmatprep.subr.mxu0 0.0
    %4130 = vmatpush1.xpose.msra.mxu0 0.0
    %4131 = vmatprep.subr.mxu0 0.0
    %4132 = vmatpush1.xpose.msra.mxu0 0.0
    %4133 = vmatprep.subr.mxu0 0.0
    %4134 = vmatpush1.xpose.msra.mxu0 0.0
    %4135 = vmatprep.subr.mxu0 0.0
    %4136 = vmatpush1.xpose.msra.mxu0 0.0
    %4137 = vmatprep.subr.mxu0 0.0
    %4138 = vmatpush1.xpose.msra.mxu0 0.0
    %4139 = vmatprep.subr.mxu0 0.0
    %4140 = vmatpush1.xpose.msra.mxu0 0.0
    %4141 = vmatprep.subr.mxu0 0.0
    %4142 = vmatpush1.xpose.msra.mxu0 0.0
    %4143 = vmatprep.subr.mxu0 0.0
    %4144 = vmatpush1.xpose.msra.mxu0 0.0
    %4145 = vmatprep.subr.mxu0 0.0
    %4146 = vmatpush1.xpose.msra.mxu0 0.0
    %4147 = vmatprep.subr.mxu0 0.0
    %4148 = vmatpush1.xpose.msra.mxu0 0.0
    %4149 = vmatprep.subr.mxu0 0.0
    %4150 = vmatpush1.xpose.msra.mxu0 0.0
    %4151 = vmatprep.subr.mxu0 0.0
    %4152 = vmatpush1.xpose.msra.mxu0 0.0
    %4153 = vmatprep.subr.mxu0 0.0
    %4154 = vmatpush1.xpose.msra.mxu0 0.0
    %4155 = vmatprep.subr.mxu0 0.0
    %4156 = vmatpush1.xpose.msra.mxu0 0.0
    %4157 = vmatprep.subr.mxu0 0.0
    %4158 = vmatpush1.xpose.msra.mxu0 0.0
    %4159 = vmatprep.subr.mxu0 0.0
    %4160 = vmatpush1.xpose.msra.mxu0 0.0
    %4161 = vmatprep.subr.mxu0 0.0
    %4162 = vmatpush1.xpose.msra.mxu0 0.0
    %4163 = vmatprep.subr.mxu0 0.0
    %4164 = vmatpush1.xpose.msra.mxu0 0.0
    %4165 = vmatprep.subr.mxu0 0.0
    %4166 = vmatpush1.xpose.msra.mxu0 0.0
    %4167 = vmatprep.mubr.f32.mxu0 0.0
    %4168 = vmatmul.mubr.f32.gmra.mrb[0].mxu0 %v4097
    %v4169 = vpop.f32.mrb[0].mxu0
    %v4170 = vadd.f32 0.0, %v4169
    %v4171 = vpop.f32.mrb[0].mxu0
    %4172 = vdwg.mxu0
    %v4173 = vmul.f32 %v4170, 0.35355338
    %v4174 = vadd.f32 %v4173, %v3427
    %v4175 = vsel %vm2261, %v4174, -inf
    %4176 = vmax.xlane.f32.xlu0 %v4175
    %v4177 = vpop.xlane.xlu0 %4176
    %v4178 = vsub.f32 %v4174, %v4177
    %v4179 = vmul.f32 %v4178, 1.442695
    %v4180 = vpow.pop %v4179
    %v4181 = vsel %vm2261, %v4180, 0.0
    %4182 = vadd.xlane.f32.xlu0 %v4181
    %v4183 = vpop.xlane.xlu0 %4182
    %v4184 = vrcp.pop %v4183
    %v4185 = vmul.f32 %v4180, %v4184
    %4186 = vrot.lane.b32.xlu0 %v3344, 72
    %v4187 = vpop.permute.xlu0 %4186
    %4188 = vrot.lane.b32.xlu0 %v3345, 72
    %v4189 = vpop.permute.xlu0 %4188
    %v4192 = vsel %vm2261, %v4185, 0
    %v4194 = vsel %vm1690, %v4189, 0
    %4196 = vmatprep.subr.mxu0 0.0
    %4197 = vmatpush1.msra.mxu0 %v4187
    %4198 = vmatprep.subr.mxu0 0.0
    %4199 = vmatpush1.msra.mxu0 %v4194
    %4200 = vmatprep.subr.mxu0 0.0
    %4201 = vmatpush1.msra.mxu0 0.0
    %4202 = vmatprep.subr.mxu0 0.0
    %4203 = vmatpush1.msra.mxu0 0.0
    %4204 = vmatprep.subr.mxu0 0.0
    %4205 = vmatpush1.msra.mxu0 0.0
    %4206 = vmatprep.subr.mxu0 0.0
    %4207 = vmatpush1.msra.mxu0 0.0
    %4208 = vmatprep.subr.mxu0 0.0
    %4209 = vmatpush1.msra.mxu0 0.0
    %4210 = vmatprep.subr.mxu0 0.0
    %4211 = vmatpush1.msra.mxu0 0.0
    %4212 = vmatprep.subr.mxu0 0.0
    %4213 = vmatpush1.msra.mxu0 0.0
    %4214 = vmatprep.subr.mxu0 0.0
    %4215 = vmatpush1.msra.mxu0 0.0
    %4216 = vmatprep.subr.mxu0 0.0
    %4217 = vmatpush1.msra.mxu0 0.0
    %4218 = vmatprep.subr.mxu0 0.0
    %4219 = vmatpush1.msra.mxu0 0.0
    %4220 = vmatprep.subr.mxu0 0.0
    %4221 = vmatpush1.msra.mxu0 0.0
    %4222 = vmatprep.subr.mxu0 0.0
    %4223 = vmatpush1.msra.mxu0 0.0
    %4224 = vmatprep.subr.mxu0 0.0
    %4225 = vmatpush1.msra.mxu0 0.0
    %4226 = vmatprep.subr.mxu0 0.0
    %4227 = vmatpush1.msra.mxu0 0.0
    %4228 = vmatprep.subr.mxu0 0.0
    %4229 = vmatpush1.msra.mxu0 0.0
    %4230 = vmatprep.subr.mxu0 0.0
    %4231 = vmatpush1.msra.mxu0 0.0
    %4232 = vmatprep.subr.mxu0 0.0
    %4233 = vmatpush1.msra.mxu0 0.0
    %4234 = vmatprep.subr.mxu0 0.0
    %4235 = vmatpush1.msra.mxu0 0.0
    %4236 = vmatprep.subr.mxu0 0.0
    %4237 = vmatpush1.msra.mxu0 0.0
    %4238 = vmatprep.subr.mxu0 0.0
    %4239 = vmatpush1.msra.mxu0 0.0
    %4240 = vmatprep.subr.mxu0 0.0
    %4241 = vmatpush1.msra.mxu0 0.0
    %4242 = vmatprep.subr.mxu0 0.0
    %4243 = vmatpush1.msra.mxu0 0.0
    %4244 = vmatprep.subr.mxu0 0.0
    %4245 = vmatpush1.msra.mxu0 0.0
    %4246 = vmatprep.subr.mxu0 0.0
    %4247 = vmatpush1.msra.mxu0 0.0
    %4248 = vmatprep.subr.mxu0 0.0
    %4249 = vmatpush1.msra.mxu0 0.0
    %4250 = vmatprep.subr.mxu0 0.0
    %4251 = vmatpush1.msra.mxu0 0.0
    %4252 = vmatprep.subr.mxu0 0.0
    %4253 = vmatpush1.msra.mxu0 0.0
    %4254 = vmatprep.subr.mxu0 0.0
    %4255 = vmatpush1.msra.mxu0 0.0
    %4256 = vmatprep.subr.mxu0 0.0
    %4257 = vmatpush1.msra.mxu0 0.0
    %4258 = vmatprep.subr.mxu0 0.0
    %4259 = vmatpush1.msra.mxu0 0.0
    %4260 = vmatprep.mubr.f32.mxu0 0.0
    %4261 = vmatmul.mubr.f32.gmra.mrb[0].mxu0 %v4192
    %v4262 = vpop.f32.mrb[0].mxu0
    %v4263 = vadd.f32 0.0, %v4262
    %v4264 = vpop.f32.mrb[0].mxu0
    %4265 = vdwg.mxu0
    %v4267 = vsel %vm2176, %v4263, 0
    %4269 = vmatprep.subr.mxu0 0.0
    %4270 = vmatpush1.msra.mxu0 %v2078
    %4271 = vmatprep.subr.mxu0 0.0
    %4272 = vmatpush1.msra.mxu0 0.0
    %4273 = vmatprep.subr.mxu0 0.0
    %4274 = vmatpush1.msra.mxu0 0.0
    %4275 = vmatprep.subr.mxu0 0.0
    %4276 = vmatpush1.msra.mxu0 0.0
    %4277 = vmatprep.subr.mxu0 0.0
    %4278 = vmatpush1.msra.mxu0 0.0
    %4279 = vmatprep.subr.mxu0 0.0
    %4280 = vmatpush1.msra.mxu0 0.0
    %4281 = vmatprep.subr.mxu0 0.0
    %4282 = vmatpush1.msra.mxu0 0.0
    %4283 = vmatprep.subr.mxu0 0.0
    %4284 = vmatpush1.msra.mxu0 0.0
    %4285 = vmatprep.subr.mxu0 0.0
    %4286 = vmatpush1.msra.mxu0 0.0
    %4287 = vmatprep.subr.mxu0 0.0
    %4288 = vmatpush1.msra.mxu0 0.0
    %4289 = vmatprep.subr.mxu0 0.0
    %4290 = vmatpush1.msra.mxu0 0.0
    %4291 = vmatprep.subr.mxu0 0.0
    %4292 = vmatpush1.msra.mxu0 0.0
    %4293 = vmatprep.subr.mxu0 0.0
    %4294 = vmatpush1.msra.mxu0 0.0
    %4295 = vmatprep.subr.mxu0 0.0
    %4296 = vmatpush1.msra.mxu0 0.0
    %4297 = vmatprep.subr.mxu0 0.0
    %4298 = vmatpush1.msra.mxu0 0.0
    %4299 = vmatprep.subr.mxu0 0.0
    %4300 = vmatpush1.msra.mxu0 0.0
    %4301 = vmatprep.subr.mxu0 0.0
    %4302 = vmatpush1.msra.mxu0 0.0
    %4303 = vmatprep.subr.mxu0 0.0
    %4304 = vmatpush1.msra.mxu0 0.0
    %4305 = vmatprep.subr.mxu0 0.0
    %4306 = vmatpush1.msra.mxu0 0.0
    %4307 = vmatprep.subr.mxu0 0.0
    %4308 = vmatpush1.msra.mxu0 0.0
    %4309 = vmatprep.subr.mxu0 0.0
    %4310 = vmatpush1.msra.mxu0 0.0
    %4311 = vmatprep.subr.mxu0 0.0
    %4312 = vmatpush1.msra.mxu0 0.0
    %4313 = vmatprep.subr.mxu0 0.0
    %4314 = vmatpush1.msra.mxu0 0.0
    %4315 = vmatprep.subr.mxu0 0.0
    %4316 = vmatpush1.msra.mxu0 0.0
    %4317 = vmatprep.subr.mxu0 0.0
    %4318 = vmatpush1.msra.mxu0 0.0
    %4319 = vmatprep.subr.mxu0 0.0
    %4320 = vmatpush1.msra.mxu0 0.0
    %4321 = vmatprep.subr.mxu0 0.0
    %4322 = vmatpush1.msra.mxu0 0.0
    %4323 = vmatprep.subr.mxu0 0.0
    %4324 = vmatpush1.msra.mxu0 0.0
    %4325 = vmatprep.subr.mxu0 0.0
    %4326 = vmatpush1.msra.mxu0 0.0
    %4327 = vmatprep.subr.mxu0 0.0
    %4328 = vmatpush1.msra.mxu0 0.0
    %4329 = vmatprep.subr.mxu0 0.0
    %4330 = vmatpush1.msra.mxu0 0.0
    %4331 = vmatprep.subr.mxu0 0.0
    %4332 = vmatpush1.msra.mxu0 0.0
    %4333 = vmatprep.mubr.f32.mxu0 0.0
    %4334 = vmatmul.mubr.f32.gmra.mrb[0].mxu0 %v4267
    %v4335 = vpop.f32.mrb[0].mxu0
    %v4336 = vadd.f32 0.0, %v4335
    %v4337 = vpop.f32.mrb[0].mxu0
    %4338 = vdwg.mxu0
    %v4339 = vadd.f32 %v4090, %v4336
    %4340 = vrot.lane.b32.xlu0 %v3615, 10
    %v4341 = vpop.permute.xlu0 %4340
    %4343 = vrot.lane.b32.xlu0 %v3936, 20
    %v4344 = vpop.permute.xlu0 %4343
    %4346 = vrot.lane.b32.xlu0 %v4185, 30
    %v4347 = vpop.permute.xlu0 %4346
    %v4349 = vsel %vm2261, %v3440, %v4341
    %v4350 = vsel %vm3182, %v4349, %v4344
    %v4351 = vsel %vm3184, %v4350, %v4347
    %s4352 = scalar_lea.vmem [#allocation31], 8
    %4353 = vst.msk [vmem:[%s4352] sm:$0xff] %vm3186, %v4351
    %v4355 = vcombine.high %v4339, %v4339
    %v4357 = vunpack.c.l.s4 1966171168
    %v4358 = vunpack.c.0.s8 %v4357
    %v4359 = vlaneseq
    %v4360 = vshrl.u32 %v4359, 7
    %v4361 = vsub.s32 %v4358, %v4360
    %v4362 = vrot.slane %v4339, %v4361
    %v4364 = vunpack.c.l.s4 1966171168
    %v4365 = vunpack.c.0.s8 %v4364
    %v4366 = vlaneseq
    %v4367 = vshrl.u32 %v4366, 7
    %v4368 = vsub.s32 %v4365, %v4367
    %v4369 = vrot.slane %v4355, %v4368
    %v4370 = vcombine.high %v4362, %v4362
    %v4371 = vcombine.high %v4369, %v4369
    %v4373 = vunpack.c.l.s4 1966171168
    %v4374 = vunpack.c.0.s8 %v4373
    %v4375 = vlaneseq
    %v4376 = vshrl.u32 %v4375, 7
    %v4377 = vsub.s32 %v4374, %v4376
    %v4378 = vrot.slane %v4362, %v4377
    %v4380 = vunpack.c.l.s4 1966171168
    %v4381 = vunpack.c.0.s8 %v4380
    %v4382 = vlaneseq
    %v4383 = vshrl.u32 %v4382, 7
    %v4384 = vsub.s32 %v4381, %v4383
    %v4385 = vrot.slane %v4369, %v4384
    %v4387 = vunpack.c.l.s4 1966171168
    %v4388 = vunpack.c.0.s8 %v4387
    %v4389 = vlaneseq
    %v4390 = vshrl.u32 %v4389, 7
    %v4391 = vsub.s32 %v4388, %v4390
    %v4392 = vrot.slane %v4370, %v4391
    %v4394 = vunpack.c.l.s4 1966171168
    %v4395 = vunpack.c.0.s8 %v4394
    %v4396 = vlaneseq
    %v4397 = vshrl.u32 %v4396, 7
    %v4398 = vsub.s32 %v4395, %v4397
    %v4399 = vrot.slane %v4371, %v4398
    %v4400 = vcombine.high %v4378, %v4378
    %v4401 = vcombine.high %v4385, %v4385
    %v4402 = vcombine.high %v4392, %v4392
    %v4403 = vcombine.high %v4399, %v4399
    %4412 = vst.msk [vmem:[#allocation2 + $0x1] sm:$0x1] %vm3246, %v4378
    %4413 = vst.msk [vmem:[#allocation2 + $0x3] sm:$0x1] %vm3246, %v4392
    %4414 = vst.msk [vmem:[#allocation2 + $0x5] sm:$0x1] %vm3246, %v4400
    %4415 = vst.msk [vmem:[#allocation2 + $0x7] sm:$0x1] %vm3246, %v4402
    %4416 = vst.msk [vmem:[#allocation2 + $0x9] sm:$0x1] %vm3246, %v4385
    %4417 = vst.msk [vmem:[#allocation2 + $0xb] sm:$0x1] %vm3246, %v4399
    %4418 = vst.msk [vmem:[#allocation2 + $0xd] sm:$0x1] %vm3246, %v4401
    %4419 = vst.msk [vmem:[#allocation2 + $0xf] sm:$0x1] %vm3246, %v4403
    %v4420 = vld [vmem:[#allocation2] sm:$0x3]
    %v4421 = vld [vmem:[#allocation2 + $0x2] sm:$0x3]
    %v4422 = vld [vmem:[#allocation2 + $0x4] sm:$0x3]
    %v4423 = vld [vmem:[#allocation2 + $0x6] sm:$0x3]
    %v4424 = vld [vmem:[#allocation2 + $0x8] sm:$0x3]
    %v4425 = vld [vmem:[#allocation2 + $0xa] sm:$0x3]
    %v4426 = vld [vmem:[#allocation2 + $0xc] sm:$0x3]
    %v4427 = vld [vmem:[#allocation2 + $0xe] sm:$0x3]
    %v4428 = vld [vmem:[#allocation21] sm:$0x1]
    %v4430 = vlaneseq
    %v4431 = vshrl.u32 %v4430, 7
    %v4432 = vsub.s32 0, %v4431
    %v4433 = vrot.slane %v4428, %v4432
    %v4434 = vcombine.high %v4433, %v4433
    %v4436 = vunpack.c.l.s4 1983009808
    %v4437 = vunpack.c.0.s8 %v4436
    %v4438 = vlaneseq
    %v4439 = vshrl.u32 %v4438, 7
    %v4440 = vsub.s32 %v4437, %v4439
    %v4441 = vrot.slane %v4433, %v4440
    %v4443 = vunpack.c.l.s4 1983009808
    %v4444 = vunpack.c.0.s8 %v4443
    %v4445 = vlaneseq
    %v4446 = vshrl.u32 %v4445, 7
    %v4447 = vsub.s32 %v4444, %v4446
    %v4448 = vrot.slane %v4434, %v4447
    %v4449 = vcombine.high %v4441, %v4441
    %v4450 = vcombine.high %v4448, %v4448
    %v4455 = vadd.f32 %v4420, %v4441
    %v4456 = vadd.f32 %v4421, %v4449
    %v4457 = vadd.f32 %v4422, %v4448
    %v4458 = vadd.f32 %v4423, %v4450
    %v4459 = vadd.f32 %v4424, %v4441
    %v4460 = vadd.f32 %v4425, %v4449
    %v4461 = vadd.f32 %v4426, %v4448
    %v4462 = vadd.f32 %v4427, %v4450
    %v4465 = vcombine.high %v1695, %v1695
    %v4467 = vunpack.c.l.s4 1983009808
    %v4468 = vunpack.c.0.s8 %v4467
    %v4469 = vlaneseq
    %v4470 = vshrl.u32 %v4469, 7
    %v4471 = vsub.s32 %v4468, %v4470
    %v4472 = vrot.slane %v1695, %v4471
    %v4474 = vunpack.c.l.s4 1983009808
    %v4475 = vunpack.c.0.s8 %v4474
    %v4476 = vlaneseq
    %v4477 = vshrl.u32 %v4476, 7
    %v4478 = vsub.s32 %v4475, %v4477
    %v4479 = vrot.slane %v4465, %v4478
    %v4480 = vcombine.high %v4472, %v4472
    %v4481 = vcombine.high %v4479, %v4479
    %v4482 = vcombine.high %v1698, %v1698
    %v4484 = vunpack.c.l.s4 1983009808
    %v4485 = vunpack.c.0.s8 %v4484
    %v4486 = vlaneseq
    %v4487 = vshrl.u32 %v4486, 7
    %v4488 = vsub.s32 %v4485, %v4487
    %v4489 = vrot.slane %v1698, %v4488
    %v4491 = vunpack.c.l.s4 1983009808
    %v4492 = vunpack.c.0.s8 %v4491
    %v4493 = vlaneseq
    %v4494 = vshrl.u32 %v4493, 7
    %v4495 = vsub.s32 %v4492, %v4494
    %v4496 = vrot.slane %v4482, %v4495
    %v4497 = vcombine.high %v4489, %v4489
    %v4498 = vcombine.high %v4496, %v4496
    %v4507 = vadd.f32 %v4455, %v4472
    %v4508 = vadd.f32 %v4456, %v4480
    %v4509 = vadd.f32 %v4457, %v4479
    %v4510 = vadd.f32 %v4458, %v4481
    %v4511 = vadd.f32 %v4459, %v4489
    %v4512 = vadd.f32 %v4460, %v4497
    %v4513 = vadd.f32 %v4461, %v4496
    %v4514 = vadd.f32 %v4462, %v4498
    %v4515 = vld [vmem:[#allocation23] sm:$0x1]
    %v4516 = vld [vmem:[#allocation24] sm:$0x1]
    %v4525 = vcombine.low %v4507, %v4508
    %v4526 = vcombine.low %v4509, %v4510
    %v4528 = vunpack.c.l.s4 1983009808
    %v4529 = vunpack.c.0.s8 %v4528
    %v4530 = vlaneseq
    %v4531 = vshrl.u32 %v4530, 7
    %v4532 = vsub.s32 %v4529, %v4531
    %v4533 = vrot.slane %v4525, %v4532
    %v4535 = vunpack.c.l.s4 1983009808
    %v4536 = vunpack.c.0.s8 %v4535
    %v4537 = vlaneseq
    %v4538 = vshrl.u32 %v4537, 7
    %v4539 = vsub.s32 %v4536, %v4538
    %v4540 = vrot.slane %v4526, %v4539
    %v4541 = vcombine.low %v4533, %v4540
    %v4542 = vcombine.low %v4511, %v4512
    %v4543 = vcombine.low %v4513, %v4514
    %v4545 = vunpack.c.l.s4 1983009808
    %v4546 = vunpack.c.0.s8 %v4545
    %v4547 = vlaneseq
    %v4548 = vshrl.u32 %v4547, 7
    %v4549 = vsub.s32 %v4546, %v4548
    %v4550 = vrot.slane %v4542, %v4549
    %v4552 = vunpack.c.l.s4 1983009808
    %v4553 = vunpack.c.0.s8 %v4552
    %v4554 = vlaneseq
    %v4555 = vshrl.u32 %v4554, 7
    %v4556 = vsub.s32 %v4553, %v4555
    %v4557 = vrot.slane %v4543, %v4556
    %v4558 = vcombine.low %v4550, %v4557
    %v4561 = vsel %vm315, %v4541, 0.0
    %4562 = vadd.xlane.f32.xlu0 %v4561
    %v4563 = vpop.xlane.xlu0 %4562
    %v4564 = vsel %vm315, %v4558, 0.0
    %4565 = vadd.xlane.f32.xlu0 %v4564
    %v4566 = vpop.xlane.xlu0 %4565
    %v4567 = vmul.f32 %v4563, %v322
    %v4568 = vmul.f32 %v4566, %v322
    %v4572 = vunpack.c.l.s4 269488144
    %v4573 = vunpack.c.0.s8 %v4572
    %v4574 = vlaneseq
    %v4575 = vshrl.u32 %v4574, 7
    %v4576 = vsub.s32 %v4573, %v4575
    %v4577 = vrot.slane %v4567, %v4576
    %v4579 = vunpack.c.l.s4 842150450
    %v4580 = vunpack.c.0.s8 %v4579
    %v4581 = vlaneseq
    %v4582 = vshrl.u32 %v4581, 7
    %v4583 = vsub.s32 %v4580, %v4582
    %v4584 = vrot.slane %v4567, %v4583
    %v4586 = vunpack.c.l.s4 1414812756
    %v4587 = vunpack.c.0.s8 %v4586
    %v4588 = vlaneseq
    %v4589 = vshrl.u32 %v4588, 7
    %v4590 = vsub.s32 %v4587, %v4589
    %v4591 = vrot.slane %v4567, %v4590
    %v4593 = vunpack.c.l.s4 1987475062
    %v4594 = vunpack.c.0.s8 %v4593
    %v4595 = vlaneseq
    %v4596 = vshrl.u32 %v4595, 7
    %v4597 = vsub.s32 %v4594, %v4596
    %v4598 = vrot.slane %v4567, %v4597
    %v4600 = vunpack.c.l.s4 269488144
    %v4601 = vunpack.c.0.s8 %v4600
    %v4602 = vlaneseq
    %v4603 = vshrl.u32 %v4602, 7
    %v4604 = vsub.s32 %v4601, %v4603
    %v4605 = vrot.slane %v4568, %v4604
    %v4607 = vunpack.c.l.s4 842150450
    %v4608 = vunpack.c.0.s8 %v4607
    %v4609 = vlaneseq
    %v4610 = vshrl.u32 %v4609, 7
    %v4611 = vsub.s32 %v4608, %v4610
    %v4612 = vrot.slane %v4568, %v4611
    %v4614 = vunpack.c.l.s4 1414812756
    %v4615 = vunpack.c.0.s8 %v4614
    %v4616 = vlaneseq
    %v4617 = vshrl.u32 %v4616, 7
    %v4618 = vsub.s32 %v4615, %v4617
    %v4619 = vrot.slane %v4568, %v4618
    %v4621 = vunpack.c.l.s4 1987475062
    %v4622 = vunpack.c.0.s8 %v4621
    %v4623 = vlaneseq
    %v4624 = vshrl.u32 %v4623, 7
    %v4625 = vsub.s32 %v4622, %v4624
    %v4626 = vrot.slane %v4568, %v4625
    %v4635 = vsub.f32 %v4507, %v4577
    %v4636 = vsub.f32 %v4508, %v4584
    %v4637 = vsub.f32 %v4509, %v4591
    %v4638 = vsub.f32 %v4510, %v4598
    %v4639 = vsub.f32 %v4511, %v4605
    %v4640 = vsub.f32 %v4512, %v4612
    %v4641 = vsub.f32 %v4513, %v4619
    %v4642 = vsub.f32 %v4514, %v4626
    %v4643 = vmul.f32 %v4635, %v4635
    %v4644 = vmul.f32 %v4636, %v4636
    %v4645 = vmul.f32 %v4637, %v4637
    %v4646 = vmul.f32 %v4638, %v4638
    %v4647 = vmul.f32 %v4639, %v4639
    %v4648 = vmul.f32 %v4640, %v4640
    %v4649 = vmul.f32 %v4641, %v4641
    %v4650 = vmul.f32 %v4642, %v4642
    %v4659 = vcombine.low %v4643, %v4644
    %v4660 = vcombine.low %v4645, %v4646
    %v4662 = vunpack.c.l.s4 1983009808
    %v4663 = vunpack.c.0.s8 %v4662
    %v4664 = vlaneseq
    %v4665 = vshrl.u32 %v4664, 7
    %v4666 = vsub.s32 %v4663, %v4665
    %v4667 = vrot.slane %v4659, %v4666
    %v4669 = vunpack.c.l.s4 1983009808
    %v4670 = vunpack.c.0.s8 %v4669
    %v4671 = vlaneseq
    %v4672 = vshrl.u32 %v4671, 7
    %v4673 = vsub.s32 %v4670, %v4672
    %v4674 = vrot.slane %v4660, %v4673
    %v4675 = vcombine.low %v4667, %v4674
    %v4676 = vcombine.low %v4647, %v4648
    %v4677 = vcombine.low %v4649, %v4650
    %v4679 = vunpack.c.l.s4 1983009808
    %v4680 = vunpack.c.0.s8 %v4679
    %v4681 = vlaneseq
    %v4682 = vshrl.u32 %v4681, 7
    %v4683 = vsub.s32 %v4680, %v4682
    %v4684 = vrot.slane %v4676, %v4683
    %v4686 = vunpack.c.l.s4 1983009808
    %v4687 = vunpack.c.0.s8 %v4686
    %v4688 = vlaneseq
    %v4689 = vshrl.u32 %v4688, 7
    %v4690 = vsub.s32 %v4687, %v4689
    %v4691 = vrot.slane %v4677, %v4690
    %v4692 = vcombine.low %v4684, %v4691
    %v4695 = vsel %vm315, %v4675, 0.0
    %4696 = vadd.xlane.f32.xlu0 %v4695
    %v4697 = vpop.xlane.xlu0 %4696
    %v4698 = vsel %vm315, %v4692, 0.0
    %4699 = vadd.xlane.f32.xlu0 %v4698
    %v4700 = vpop.xlane.xlu0 %4699
    %v4701 = vmul.f32 %v4697, %v322
    %v4702 = vmul.f32 %v4700, %v322
    %v4703 = vadd.f32 %v4701, 1e-05
    %v4704 = vadd.f32 %v4702, 1e-05
    %v4705 = vrsqrt.pop %v4703
    %v4706 = vrsqrt.pop %v4704
    %v4710 = vunpack.c.l.s4 269488144
    %v4711 = vunpack.c.0.s8 %v4710
    %v4712 = vlaneseq
    %v4713 = vshrl.u32 %v4712, 7
    %v4714 = vsub.s32 %v4711, %v4713
    %v4715 = vrot.slane %v4705, %v4714
    %v4717 = vunpack.c.l.s4 842150450
    %v4718 = vunpack.c.0.s8 %v4717
    %v4719 = vlaneseq
    %v4720 = vshrl.u32 %v4719, 7
    %v4721 = vsub.s32 %v4718, %v4720
    %v4722 = vrot.slane %v4705, %v4721
    %v4724 = vunpack.c.l.s4 1414812756
    %v4725 = vunpack.c.0.s8 %v4724
    %v4726 = vlaneseq
    %v4727 = vshrl.u32 %v4726, 7
    %v4728 = vsub.s32 %v4725, %v4727
    %v4729 = vrot.slane %v4705, %v4728
    %v4731 = vunpack.c.l.s4 1987475062
    %v4732 = vunpack.c.0.s8 %v4731
    %v4733 = vlaneseq
    %v4734 = vshrl.u32 %v4733, 7
    %v4735 = vsub.s32 %v4732, %v4734
    %v4736 = vrot.slane %v4705, %v4735
    %v4738 = vunpack.c.l.s4 269488144
    %v4739 = vunpack.c.0.s8 %v4738
    %v4740 = vlaneseq
    %v4741 = vshrl.u32 %v4740, 7
    %v4742 = vsub.s32 %v4739, %v4741
    %v4743 = vrot.slane %v4706, %v4742
    %v4745 = vunpack.c.l.s4 842150450
    %v4746 = vunpack.c.0.s8 %v4745
    %v4747 = vlaneseq
    %v4748 = vshrl.u32 %v4747, 7
    %v4749 = vsub.s32 %v4746, %v4748
    %v4750 = vrot.slane %v4706, %v4749
    %v4752 = vunpack.c.l.s4 1414812756
    %v4753 = vunpack.c.0.s8 %v4752
    %v4754 = vlaneseq
    %v4755 = vshrl.u32 %v4754, 7
    %v4756 = vsub.s32 %v4753, %v4755
    %v4757 = vrot.slane %v4706, %v4756
    %v4759 = vunpack.c.l.s4 1987475062
    %v4760 = vunpack.c.0.s8 %v4759
    %v4761 = vlaneseq
    %v4762 = vshrl.u32 %v4761, 7
    %v4763 = vsub.s32 %v4760, %v4762
    %v4764 = vrot.slane %v4706, %v4763
    %v4773 = vmul.f32 %v4635, %v4715
    %v4774 = vmul.f32 %v4636, %v4722
    %v4775 = vmul.f32 %v4637, %v4729
    %v4776 = vmul.f32 %v4638, %v4736
    %v4777 = vmul.f32 %v4639, %v4743
    %v4778 = vmul.f32 %v4640, %v4750
    %v4779 = vmul.f32 %v4641, %v4757
    %v4780 = vmul.f32 %v4642, %v4764
    %v4782 = vlaneseq
    %v4783 = vshrl.u32 %v4782, 7
    %v4784 = vsub.s32 0, %v4783
    %v4785 = vrot.slane %v4515, %v4784
    %v4786 = vcombine.high %v4785, %v4785
    %v4788 = vunpack.c.l.s4 1983009808
    %v4789 = vunpack.c.0.s8 %v4788
    %v4790 = vlaneseq
    %v4791 = vshrl.u32 %v4790, 7
    %v4792 = vsub.s32 %v4789, %v4791
    %v4793 = vrot.slane %v4785, %v4792
    %v4795 = vunpack.c.l.s4 1983009808
    %v4796 = vunpack.c.0.s8 %v4795
    %v4797 = vlaneseq
    %v4798 = vshrl.u32 %v4797, 7
    %v4799 = vsub.s32 %v4796, %v4798
    %v4800 = vrot.slane %v4786, %v4799
    %v4801 = vcombine.high %v4793, %v4793
    %v4802 = vcombine.high %v4800, %v4800
    %v4807 = vmul.f32 %v4773, %v4793
    %v4808 = vmul.f32 %v4774, %v4801
    %v4809 = vmul.f32 %v4775, %v4800
    %v4810 = vmul.f32 %v4776, %v4802
    %v4811 = vmul.f32 %v4777, %v4793
    %v4812 = vmul.f32 %v4778, %v4801
    %v4813 = vmul.f32 %v4779, %v4800
    %v4814 = vmul.f32 %v4780, %v4802
    %v4816 = vlaneseq
    %v4817 = vshrl.u32 %v4816, 7
    %v4818 = vsub.s32 0, %v4817
    %v4819 = vrot.slane %v4516, %v4818
    %v4820 = vcombine.high %v4819, %v4819
    %v4822 = vunpack.c.l.s4 1983009808
    %v4823 = vunpack.c.0.s8 %v4822
    %v4824 = vlaneseq
    %v4825 = vshrl.u32 %v4824, 7
    %v4826 = vsub.s32 %v4823, %v4825
    %v4827 = vrot.slane %v4819, %v4826
    %v4829 = vunpack.c.l.s4 1983009808
    %v4830 = vunpack.c.0.s8 %v4829
    %v4831 = vlaneseq
    %v4832 = vshrl.u32 %v4831, 7
    %v4833 = vsub.s32 %v4830, %v4832
    %v4834 = vrot.slane %v4820, %v4833
    %v4835 = vcombine.high %v4827, %v4827
    %v4836 = vcombine.high %v4834, %v4834
    %v4841 = vadd.f32 %v4807, %v4827
    %v4842 = vadd.f32 %v4808, %v4835
    %v4843 = vadd.f32 %v4809, %v4834
    %v4844 = vadd.f32 %v4810, %v4836
    %v4845 = vadd.f32 %v4811, %v4827
    %v4846 = vadd.f32 %v4812, %v4835
    %v4847 = vadd.f32 %v4813, %v4834
    %v4848 = vadd.f32 %v4814, %v4836
    %v4849 = vld [vmem:[#allocation26] sm:$0xff]
    %v4850 = vld [vmem:[#allocation26 + $0x8] sm:$0xff]
    %v4851 = vld [vmem:[#allocation26 + $0x10] sm:$0xff]
    %v4852 = vld [vmem:[#allocation26 + $0x18] sm:$0xff]
    %v4853 = vld [vmem:[%s19] sm:$0x1]
    %v4855 = vlaneseq
    %v4856 = vshrl.u32 %v4855, 7
    %v4857 = vsub.s32 0, %v4856
    %v4858 = vrot.slane %v4853, %v4857
    %v4868 = vcombine.low %v4841, %v4842
    %v4869 = vcombine.low %v4843, %v4844
    %v4871 = vunpack.c.l.s4 1983009808
    %v4872 = vunpack.c.0.s8 %v4871
    %v4873 = vlaneseq
    %v4874 = vshrl.u32 %v4873, 7
    %v4875 = vsub.s32 %v4872, %v4874
    %v4876 = vrot.slane %v4868, %v4875
    %v4878 = vunpack.c.l.s4 1983009808
    %v4879 = vunpack.c.0.s8 %v4878
    %v4880 = vlaneseq
    %v4881 = vshrl.u32 %v4880, 7
    %v4882 = vsub.s32 %v4879, %v4881
    %v4883 = vrot.slane %v4869, %v4882
    %v4884 = vcombine.low %v4876, %v4883
    %v4885 = vcombine.low %v4845, %v4846
    %v4886 = vcombine.low %v4847, %v4848
    %v4888 = vunpack.c.l.s4 1983009808
    %v4889 = vunpack.c.0.s8 %v4888
    %v4890 = vlaneseq
    %v4891 = vshrl.u32 %v4890, 7
    %v4892 = vsub.s32 %v4889, %v4891
    %v4893 = vrot.slane %v4885, %v4892
    %v4895 = vunpack.c.l.s4 1983009808
    %v4896 = vunpack.c.0.s8 %v4895
    %v4897 = vlaneseq
    %v4898 = vshrl.u32 %v4897, 7
    %v4899 = vsub.s32 %v4896, %v4898
    %v4900 = vrot.slane %v4886, %v4899
    %v4901 = vcombine.low %v4893, %v4900
    %v4902 = vsel %vm315, %v4884, 0
    %v4904 = vsel %vm315, %v4901, 0
    %4906 = vmatprep.subr.mxu0 0.0
    %4907 = vmatpush1.msra.mxu0 %v4849
    %4908 = vmatprep.subr.mxu0 0.0
    %4909 = vmatpush1.msra.mxu0 %v4850
    %4910 = vmatprep.subr.mxu0 0.0
    %4911 = vmatpush1.msra.mxu0 %v4851
    %4912 = vmatprep.subr.mxu0 0.0
    %4913 = vmatpush1.msra.mxu0 %v4852
    %4914 = vmatprep.subr.mxu0 0.0
    %4915 = vmatpush1.msra.mxu0 0.0
    %4916 = vmatprep.subr.mxu0 0.0
    %4917 = vmatpush1.msra.mxu0 0.0
    %4918 = vmatprep.subr.mxu0 0.0
    %4919 = vmatpush1.msra.mxu0 0.0
    %4920 = vmatprep.subr.mxu0 0.0
    %4921 = vmatpush1.msra.mxu0 0.0
    %4922 = vmatprep.subr.mxu0 0.0
    %4923 = vmatpush1.msra.mxu0 0.0
    %4924 = vmatprep.subr.mxu0 0.0
    %4925 = vmatpush1.msra.mxu0 0.0
    %4926 = vmatprep.subr.mxu0 0.0
    %4927 = vmatpush1.msra.mxu0 0.0
    %4928 = vmatprep.subr.mxu0 0.0
    %4929 = vmatpush1.msra.mxu0 0.0
    %4930 = vmatprep.subr.mxu0 0.0
    %4931 = vmatpush1.msra.mxu0 0.0
    %4932 = vmatprep.subr.mxu0 0.0
    %4933 = vmatpush1.msra.mxu0 0.0
    %4934 = vmatprep.subr.mxu0 0.0
    %4935 = vmatpush1.msra.mxu0 0.0
    %4936 = vmatprep.subr.mxu0 0.0
    %4937 = vmatpush1.msra.mxu0 0.0
    %4938 = vmatprep.subr.mxu0 0.0
    %4939 = vmatpush1.msra.mxu0 0.0
    %4940 = vmatprep.subr.mxu0 0.0
    %4941 = vmatpush1.msra.mxu0 0.0
    %4942 = vmatprep.subr.mxu0 0.0
    %4943 = vmatpush1.msra.mxu0 0.0
    %4944 = vmatprep.subr.mxu0 0.0
    %4945 = vmatpush1.msra.mxu0 0.0
    %4946 = vmatprep.subr.mxu0 0.0
    %4947 = vmatpush1.msra.mxu0 0.0
    %4948 = vmatprep.subr.mxu0 0.0
    %4949 = vmatpush1.msra.mxu0 0.0
    %4950 = vmatprep.subr.mxu0 0.0
    %4951 = vmatpush1.msra.mxu0 0.0
    %4952 = vmatprep.subr.mxu0 0.0
    %4953 = vmatpush1.msra.mxu0 0.0
    %4954 = vmatprep.subr.mxu0 0.0
    %4955 = vmatpush1.msra.mxu0 0.0
    %4956 = vmatprep.subr.mxu0 0.0
    %4957 = vmatpush1.msra.mxu0 0.0
    %4958 = vmatprep.subr.mxu0 0.0
    %4959 = vmatpush1.msra.mxu0 0.0
    %4960 = vmatprep.subr.mxu0 0.0
    %4961 = vmatpush1.msra.mxu0 0.0
    %4962 = vmatprep.subr.mxu0 0.0
    %4963 = vmatpush1.msra.mxu0 0.0
    %4964 = vmatprep.subr.mxu0 0.0
    %4965 = vmatpush1.msra.mxu0 0.0
    %4966 = vmatprep.subr.mxu0 0.0
    %4967 = vmatpush1.msra.mxu0 0.0
    %4968 = vmatprep.subr.mxu0 0.0
    %4969 = vmatpush1.msra.mxu0 0.0
    %4970 = vmatprep.mubr.f32.mxu0 0.0
    %4971 = vmatmul.mubr.f32.gmra.mrb[0].mxu0 %v4902
    %v4972 = vpop.f32.mrb[0].mxu0
    %v4973 = vadd.f32 %v4858, %v4972
    %v4974 = vpop.f32.mrb[0].mxu0
    %4975 = vmatprep.mubr.f32.mxu0 0.0
    %4976 = vmatmul.mubr.f32.gmra.mrb[0].mxu0 %v4904
    %v4977 = vpop.f32.mrb[0].mxu0
    %v4978 = vadd.f32 %v4858, %v4977
    %v4979 = vpop.f32.mrb[0].mxu0
    %4980 = vdwg.mxu0
    %v4981 = vmax.f32 %v4973, 0.0
    %v4982 = vmax.f32 %v4978, 0.0
    %v4983 = vld [vmem:[%s20] sm:$0xff]
    %v4984 = vld [vmem:[%s20 + $0x8] sm:$0xff]
    %v4985 = vld [vmem:[%s20 + $0x10] sm:$0xff]
    %v4986 = vld [vmem:[%s20 + $0x18] sm:$0xff]
    %v4987 = vld [vmem:[%s20 + $0x20] sm:$0xff]
    %v4988 = vld [vmem:[%s20 + $0x28] sm:$0xff]
    %v4989 = vld [vmem:[%s20 + $0x30] sm:$0xff]
    %v4990 = vld [vmem:[%s20 + $0x38] sm:$0xff]
    %v4991 = vld [vmem:[%s21] sm:$0x1]
    %v4993 = vlaneseq
    %v4994 = vshrl.u32 %v4993, 7
    %v4995 = vsub.s32 0, %v4994
    %v4996 = vrot.slane %v4991, %v4995
    %vm4998 = vcmask 523264
    %v5000 = vsel %vm4998, %v4981, 0
    %v5003 = vsel %vm4998, %v4982, 0
    %5005 = vmatprep.subr.mxu0 0.0
    %5006 = vmatpush1.msra.mxu0 %v4983
    %5007 = vmatprep.subr.mxu0 0.0
    %5008 = vmatpush1.msra.mxu0 %v4984
    %5009 = vmatprep.subr.mxu0 0.0
    %5010 = vmatpush1.msra.mxu0 %v4985
    %5011 = vmatprep.subr.mxu0 0.0
    %5012 = vmatpush1.msra.mxu0 %v4986
    %5013 = vmatprep.subr.mxu0 0.0
    %5014 = vmatpush1.msra.mxu0 %v4987
    %5015 = vmatprep.subr.mxu0 0.0
    %5016 = vmatpush1.msra.mxu0 %v4988
    %5017 = vmatprep.subr.mxu0 0.0
    %5018 = vmatpush1.msra.mxu0 %v4989
    %5019 = vmatprep.subr.mxu0 0.0
    %5020 = vmatpush1.msra.mxu0 %v4990
    %5021 = vmatprep.subr.mxu0 0.0
    %5022 = vmatpush1.msra.mxu0 0.0
    %5023 = vmatprep.subr.mxu0 0.0
    %5024 = vmatpush1.msra.mxu0 0.0
    %5025 = vmatprep.subr.mxu0 0.0
    %5026 = vmatpush1.msra.mxu0 0.0
    %5027 = vmatprep.subr.mxu0 0.0
    %5028 = vmatpush1.msra.mxu0 0.0
    %5029 = vmatprep.subr.mxu0 0.0
    %5030 = vmatpush1.msra.mxu0 0.0
    %5031 = vmatprep.subr.mxu0 0.0
    %5032 = vmatpush1.msra.mxu0 0.0
    %5033 = vmatprep.subr.mxu0 0.0
    %5034 = vmatpush1.msra.mxu0 0.0
    %5035 = vmatprep.subr.mxu0 0.0
    %5036 = vmatpush1.msra.mxu0 0.0
    %5037 = vmatprep.subr.mxu0 0.0
    %5038 = vmatpush1.msra.mxu0 0.0
    %5039 = vmatprep.subr.mxu0 0.0
    %5040 = vmatpush1.msra.mxu0 0.0
    %5041 = vmatprep.subr.mxu0 0.0
    %5042 = vmatpush1.msra.mxu0 0.0
    %5043 = vmatprep.subr.mxu0 0.0
    %5044 = vmatpush1.msra.mxu0 0.0
    %5045 = vmatprep.subr.mxu0 0.0
    %5046 = vmatpush1.msra.mxu0 0.0
    %5047 = vmatprep.subr.mxu0 0.0
    %5048 = vmatpush1.msra.mxu0 0.0
    %5049 = vmatprep.subr.mxu0 0.0
    %5050 = vmatpush1.msra.mxu0 0.0
    %5051 = vmatprep.subr.mxu0 0.0
    %5052 = vmatpush1.msra.mxu0 0.0
    %5053 = vmatprep.subr.mxu0 0.0
    %5054 = vmatpush1.msra.mxu0 0.0
    %5055 = vmatprep.subr.mxu0 0.0
    %5056 = vmatpush1.msra.mxu0 0.0
    %5057 = vmatprep.subr.mxu0 0.0
    %5058 = vmatpush1.msra.mxu0 0.0
    %5059 = vmatprep.subr.mxu0 0.0
    %5060 = vmatpush1.msra.mxu0 0.0
    %5061 = vmatprep.subr.mxu0 0.0
    %5062 = vmatpush1.msra.mxu0 0.0
    %5063 = vmatprep.subr.mxu0 0.0
    %5064 = vmatpush1.msra.mxu0 0.0
    %5065 = vmatprep.subr.mxu0 0.0
    %5066 = vmatpush1.msra.mxu0 0.0
    %5067 = vmatprep.subr.mxu0 0.0
    %5068 = vmatpush1.msra.mxu0 0.0
    %5069 = vmatprep.mubr.f32.mxu0 0.0
    %5070 = vmatmul.mubr.f32.gmra.mrb[0].mxu0 %v5000
    %v5071 = vpop.f32.mrb[0].mxu0
    %v5072 = vadd.f32 %v4996, %v5071
    %v5073 = vpop.f32.mrb[0].mxu0
    %5074 = vmatprep.mubr.f32.mxu0 0.0
    %5075 = vmatmul.mubr.f32.gmra.mrb[0].mxu0 %v5003
    %v5076 = vpop.f32.mrb[0].mxu0
    %v5077 = vadd.f32 %v4996, %v5076
    %v5078 = vpop.f32.mrb[0].mxu0
    %5079 = vdwg.mxu0
    %v5080 = vadd.f32 %v5072, %v4541
    %v5081 = vadd.f32 %v5077, %v4558
    %v5084 = vcombine.high %v5080, %v5080
    %v5086 = vunpack.c.l.s4 1983009808
    %v5087 = vunpack.c.0.s8 %v5086
    %v5088 = vlaneseq
    %v5089 = vshrl.u32 %v5088, 7
    %v5090 = vsub.s32 %v5087, %v5089
    %v5091 = vrot.slane %v5080, %v5090
    %v5093 = vunpack.c.l.s4 1983009808
    %v5094 = vunpack.c.0.s8 %v5093
    %v5095 = vlaneseq
    %v5096 = vshrl.u32 %v5095, 7
    %v5097 = vsub.s32 %v5094, %v5096
    %v5098 = vrot.slane %v5084, %v5097
    %v5099 = vcombine.high %v5091, %v5091
    %v5100 = vcombine.high %v5098, %v5098
    %v5101 = vcombine.high %v5081, %v5081
    %v5103 = vunpack.c.l.s4 1983009808
    %v5104 = vunpack.c.0.s8 %v5103
    %v5105 = vlaneseq
    %v5106 = vshrl.u32 %v5105, 7
    %v5107 = vsub.s32 %v5104, %v5106
    %v5108 = vrot.slane %v5081, %v5107
    %v5110 = vunpack.c.l.s4 1983009808
    %v5111 = vunpack.c.0.s8 %v5110
    %v5112 = vlaneseq
    %v5113 = vshrl.u32 %v5112, 7
    %v5114 = vsub.s32 %v5111, %v5113
    %v5115 = vrot.slane %v5101, %v5114
    %v5116 = vcombine.high %v5108, %v5108
    %v5117 = vcombine.high %v5115, %v5115
    %5126 = vst.msk [vmem:[#allocation27] sm:$0x3] %vm1658, %v5091
    %5127 = vst.msk [vmem:[#allocation27 + $0x2] sm:$0x3] %vm1658, %v5099
    %5128 = vst.msk [vmem:[#allocation27 + $0x4] sm:$0x3] %vm1658, %v5098
    %5129 = vst.msk [vmem:[#allocation27 + $0x6] sm:$0x3] %vm1658, %v5100
    %5130 = vst.msk [vmem:[#allocation27 + $0x8] sm:$0x3] %vm1658, %v5108
    %5131 = vst.msk [vmem:[#allocation27 + $0xa] sm:$0x3] %vm1658, %v5116
    %5132 = vst.msk [vmem:[#allocation27 + $0xc] sm:$0x3] %vm1658, %v5115
    %5133 = vst.msk [vmem:[#allocation27 + $0xe] sm:$0x3] %vm1658, %v5117
    // Predicated region
    $region150: #{tpu_custom_call.1} parent=1 // pred_check
      _
    $region151: #{tpu_custom_call.1} parent=1 // pred_check_branch
      %5135 = sbr.rel (0) target = $region153
    $region152: #{tpu_custom_call.1} parent=1 // pred_region
      %s5137 = ssub.s32 256, 256
      %5138 = vsyncadd [#allocation5], %s5137
      %s5139 = sshll.u32 [#allocation27], 4
      %s5140 = int_to_ptr.vmem [resolvable:$true] %s5139
      %5145 = dma.vmem_to_hbm [thread:$0]  %s5140, 256, %s22, [#allocation5], 32, 32, 2
    $region153: #{tpu_custom_call.1} parent=1 // pred_fallthru
      _
    // Predicated region
    $region154: #{tpu_custom_call.1} parent=1 // pred_check
      _
    $region155: #{tpu_custom_call.1} parent=1 // pred_check_branch
      %5147 = sbr.rel (0) target = $region157
    $region156: #{tpu_custom_call.1} parent=1 // pred_region
      %s5149 = ssub.s32 32, 32
      %5150 = vsyncadd [#allocation29], %s5149
      %s5152 = sshll.u32 [#allocation28], 4
      %s5153 = int_to_ptr.vmem [resolvable:$true] %s5152
      %5155 = dma.vmem_to_hbm [thread:$0]  %s5153, 32, %s23, [#allocation29]
    $region157: #{tpu_custom_call.1} parent=1 // pred_fallthru
      _
    // Predicated region
    $region158: #{tpu_custom_call.1} parent=1 // pred_check
      _
    $region159: #{tpu_custom_call.1} parent=1 // pred_check_branch
      %5157 = sbr.rel (0) target = $region161
    $region160: #{tpu_custom_call.1} parent=1 // pred_region
      %s5159 = ssub.s32 32, 32
      %5160 = vsyncadd [#allocation29], %s5159
      %s5162 = sshll.u32 [#allocation30], 4
      %s5163 = int_to_ptr.vmem [resolvable:$true] %s5162
      %5165 = dma.vmem_to_hbm [thread:$0]  %s5163, 32, %s24, [#allocation29]
    $region161: #{tpu_custom_call.1} parent=1 // pred_fallthru
      _
    // Predicated region
    $region162: #{tpu_custom_call.1} parent=1 // pred_check
      _
    $region163: #{tpu_custom_call.1} parent=1 // pred_check_branch
      %5167 = sbr.rel (0) target = $region165
    $region164: #{tpu_custom_call.1} parent=1 // pred_region
      %s5169 = ssub.s32 256, 256
      %5170 = vsyncadd [#allocation32], %s5169
      %s5171 = sshll.u32 [#allocation31], 4
      %s5172 = int_to_ptr.vmem [resolvable:$true] %s5171
      %5177 = dma.vmem_to_hbm [thread:$0]  %s5172, 256, %s25, [#allocation32], 128, 128, 8
    $region165: #{tpu_custom_call.1} parent=1 // pred_fallthru
      _
    // Predicated region
    $region166: #{tpu_custom_call.1} parent=1 // pred_check
      _
    $region167: #{tpu_custom_call.1} parent=1 // pred_check_branch
      %5179 = sbr.rel (0) target = $region169
    $region168: #{tpu_custom_call.1} parent=1 // pred_region
      %5180 = dma.done [#allocation5], 256
    $region169: #{tpu_custom_call.1} parent=1 // pred_fallthru
      _
    // Predicated region
    $region170: #{tpu_custom_call.1} parent=1 // pred_check
      _
    $region171: #{tpu_custom_call.1} parent=1 // pred_check_branch
      %5182 = sbr.rel (0) target = $region173
    $region172: #{tpu_custom_call.1} parent=1 // pred_region
      %5183 = dma.done [#allocation29], 32
    $region173: #{tpu_custom_call.1} parent=1 // pred_fallthru
      _
    // Predicated region
    $region174: #{tpu_custom_call.1} parent=1 // pred_check
      _
    $region175: #{tpu_custom_call.1} parent=1 // pred_check_branch
      %5185 = sbr.rel (0) target = $region177
    $region176: #{tpu_custom_call.1} parent=1 // pred_region
      %5186 = dma.done [#allocation29], 32
    $region177: #{tpu_custom_call.1} parent=1 // pred_fallthru
      _
    // Predicated region
    $region178: #{tpu_custom_call.1} parent=1 // pred_check
      _
    $region179: #{tpu_custom_call.1} parent=1 // pred_check_branch
      %5188 = sbr.rel (0) target = $region181
    $region180: #{tpu_custom_call.1} parent=1 // pred_region
      %5189 = dma.done [#allocation32], 256
    $region181: #{tpu_custom_call.1} parent=1 // pred_fallthru
      _
    %5190 = vsyncpa [#allocation4], 1
    %5191 = vsyncpa [#allocation7], 1
    %5192 = vsyncpa [#allocation10], 1
    %5193 = vsyncpa [#allocation13], 1
    %5194 = vsyncpa [#allocation16], 1
    %5195 = vsyncpa [#allocation19], 1
    %5196 = vsyncpa [#allocation22], 1
    %5197 = vsyncpa [#allocation25], 1
    %5198 = vsyncpa [#allocation5], 1
    %5199 = vsyncpa [#allocation29], 1
    %5200 = vsyncpa [#allocation32], 1

</llo_original>
